<compile_context>
chip_gen: v7x
topology: tpu7x:2x2x1
jax: 0.10.0
libtpu: 0.0.40
codegen_flags: <defaults>
</compile_context>

<pallas_src>
import functools

import jax
import jax.numpy as jnp
from jax import lax
from jax.experimental import pallas as pl
from jax.experimental.pallas import tpu as pltpu


# ----------------------------------------------------------------------------
# Fused Pallas kernel: num_layers AttentionNetwork blocks for one batch block.
# ----------------------------------------------------------------------------
def _fused_attention_stack_kernel(nhead, num_layers, nb, L, eps,
                                  q_ref, k_ref, v_ref,
                                  wq_ref, wk_ref, wvo_ref, w1_ref, w2_ref,
                                  b1_ref, vecc_ref,
                                  o_ref):
    C = q_ref.shape[-1]
    hd = C // nhead
    M = nb * L

    # ---- packed small vectors (one tiny (16, C) slab, loaded once) ----
    vecc = vecc_ref[...]
    bq, bk, bo = vecc[0:1, :], vecc[1:2, :], vecc[2:3, :]
    b2 = vecc[3:4, :]
    g1, be1 = vecc[4:5, :], vecc[5:6, :]
    g2, be2 = vecc[6:7, :], vecc[7:8, :]
    b1 = b1_ref[...]                                   # (1, F)
    wvo = wvo_ref[...]                                 # (nhead*C, C)

    # ---- layer-invariant hoists ------------------------------------------
    # K projection once; per-head score operand is a channel-masked full-width
    # copy so the layer loop never lane-slices hd=8 chunks (no relayouts).
    K = jnp.dot(k_ref[...], wk_ref[...],
                preferred_element_type=jnp.float32) + bk           # (M, C)
    lane = lax.broadcasted_iota(jnp.int32, (1, C), 1)
    v_in = v_ref[...]
    Kh3, PVo3 = [], []
    for h in range(nhead):
        hmask = ((lane >= h * hd) & (lane < (h + 1) * hd)).astype(jnp.float32)
        Kh3.append((K * hmask).reshape(nb, L, C))
        # value projection with the out-projection pre-folded in (wrapper):
        #   head-h attention contribution = P_h @ (v @ wvo_h + bvo_h)
        PVo3.append((jnp.dot(v_in, wvo[h * C:(h + 1) * C, :],
                             preferred_element_type=jnp.float32)
                     + vecc[8 + h:9 + h, :]).reshape(nb, L, C))

    def instance_norm(x2d, gamma, beta):
        # InstanceNorm1d: normalize over L for every (batch, channel); biased
        # variance, eps inside rsqrt, per-channel affine.  The (M, C)->(nb, L, C)
        # reshape is layout-free (L multiple of 8); reduction is over axis 1.
        x3 = x2d.reshape(nb, L, C)
        mu = jnp.mean(x3, axis=1, keepdims=True)
        var = jnp.mean(jnp.square(x3 - mu), axis=1, keepdims=True)
        x3 = (x3 - mu) * lax.rsqrt(var + eps)
        return (x3 * gamma + beta).reshape(M, C)

    def layer_step(x):
        # ---- multihead attention (out-projection folded into PVo3) ----
        Q = jnp.dot(x, wq_ref[...],
                    preferred_element_type=jnp.float32) + bq       # pre-scaled
        Q3 = Q.reshape(nb, L, C)
        attn = None
        for h in range(nhead):
            s = jnp.einsum('bqc,bkc->bqk', Q3, Kh3[h],
                           preferred_element_type=jnp.float32)     # (nb, L, L)
            s = s - jnp.max(s, axis=-1, keepdims=True)
            p = jnp.exp(s)
            # exact reciprocal for the softmax normalization (accuracy note).
            p = p * pl.reciprocal(jnp.sum(p, axis=-1, keepdims=True),
                                  approx=False)
            contrib = jnp.einsum('bqk,bkc->bqc', p, PVo3[h],
                                 preferred_element_type=jnp.float32)
            attn = contrib if attn is None else attn + contrib
        attn = attn.reshape(M, C) + bo

        # ---- residual + InstanceNorm1d ----
        x1n = instance_norm(attn + x, g1, be1)

        # ---- FFN: linear1 -> LeakyReLU(0.2) -> linear2 (bf16 ops, f32 acc) ----
        h1 = jnp.dot(x1n.astype(jnp.bfloat16), w1_ref[...],
                     preferred_element_type=jnp.float32) + b1
        h1 = jnp.where(h1 > 0, h1, 0.2 * h1)
        ff = jnp.dot(h1.astype(jnp.bfloat16), w2_ref[...],
                     preferred_element_type=jnp.float32) + b2

        # ---- residual + InstanceNorm1d ----
        return instance_norm(ff + x1n, g2, be2)

    x = q_ref[...]                                     # (M, C) current activation
    if num_layers <= 2:
        for _ in range(num_layers):                    # small stacks: full unroll
            x = layer_step(x)
    else:                                              # deep stacks: bounded live ranges
        x = lax.fori_loop(0, num_layers, lambda _, xx: layer_step(xx), x)

    o_ref[...] = x


# ----------------------------------------------------------------------------
# Wrapper: param prep (pre-transpose / pre-scale / fold / pack) + pallas_call.
# ----------------------------------------------------------------------------
def prepare_params(params, nhead):
    """Pre-transpose, fold scale & out-projection, pack small vectors."""
    C = params['wo'].shape[0]
    hd = C // nhead
    # NOTE: PyTorch MultiheadAttention scales Q by 1/sqrt(head_dim) AFTER the
    # in-projection bias is added, so folding the scale into BOTH wq and bq is
    # exact.  Do not change one without the other.
    scale = 1.0 / float(hd) ** 0.5
    f32 = jnp.float32
    wqkv = params['wqkv'].astype(f32)
    bqkv = params['bqkv'].astype(f32)
    wq, wk, wv = wqkv[0:C], wqkv[C:2 * C], wqkv[2 * C:3 * C]
    bq, bk, bv = bqkv[:, 0:C], bqkv[:, C:2 * C], bqkv[:, 2 * C:3 * C]
    wo_t = params['wo'].astype(f32).T
    wv_t = wv.T

    # Fold the attention out-projection into the layer-invariant value path.
    wvo_blocks, bvo_rows = [], []
    for h in range(nhead):
        hs, he = h * hd, (h + 1) * hd
        wvo_blocks.append(wv_t[:, hs:he] @ wo_t[hs:he, :])   # (C, C)
        bvo_rows.append(bv[:, hs:he] @ wo_t[hs:he, :])       # (1, C)
    wvo = jnp.concatenate(wvo_blocks, axis=0)                # (nhead*C, C)

    # Pack every (1, C) vector into one slab -> one DMA instead of many.
    rows = [bq * scale, bk, params['bo'].astype(f32), params['b2'].astype(f32),
            params['g1'].astype(f32), params['be1'].astype(f32),
            params['g2'].astype(f32), params['be2'].astype(f32)] + bvo_rows
    n_rows = len(rows)
    pad_rows = -(-n_rows // 8) * 8
    vecc = jnp.concatenate(rows + [jnp.zeros((pad_rows - n_rows, C), f32)],
                           axis=0)

    return {
        'wq_t': (wq.T * scale).astype(f32),
        'wk_t': wk.T.astype(f32),
        'wvo':  wvo.astype(f32),
        'w1_t': params['w1'].T.astype(jnp.bfloat16),
        'w2_t': params['w2'].T.astype(jnp.bfloat16),
        'b1':   params['b1'].astype(f32),
        'vecc': vecc,
    }


def _multi_tensorcore_chip():
    """True only for chips with >1 TensorCore (v7x); batch-grid helps there."""
    try:
        kind = jax.devices()[0].device_kind.lower()
    except Exception:
        return False
    return ("v7" in kind) or ("7x" in kind)


def decompose_network(query, key, value, prepared, num_attns, nhead,
                      eps=1e-5, batch_grid=None):
    """Stack of num_attns AttentionNetwork blocks (cloned weights), one kernel.

    query/key/value: (B, C, L) float32; returns (B, C, L) float32.
    """
    B, C, L = query.shape
    q = jnp.transpose(query, (0, 2, 1)).reshape(B * L, C)
    k = jnp.transpose(key, (0, 2, 1)).reshape(B * L, C)
    v = jnp.transpose(value, (0, 2, 1)).reshape(B * L, C)

    if batch_grid is None:
        # v7x: 2 TensorCores per chip -> shard independent batches across them.
        # v5e/v6e: single TC -> a multi-step grid only adds per-step overhead.
        batch_grid = _multi_tensorcore_chip()
    if batch_grid and B > 1:
        nb, steps = 1, B
    else:
        nb, steps = B, 1

    act_spec = pl.BlockSpec((nb * L, C), lambda i: (i, 0))

    def resident(arr):  # full array, constant index_map -> stays in VMEM
        return pl.BlockSpec(arr.shape, lambda i, _nd=arr.ndim: (0,) * _nd)

    names = ('wq_t', 'wk_t', 'wvo', 'w1_t', 'w2_t', 'b1', 'vecc')
    weights = [prepared[n] for n in names]

    kernel = functools.partial(_fused_attention_stack_kernel,
                               nhead, num_attns, nb, L, eps)
    out = pl.pallas_call(
        kernel,
        out_shape=jax.ShapeDtypeStruct((B * L, C), jnp.float32),
        grid=(steps,),
        in_specs=[act_spec, act_spec, act_spec] + [resident(w) for w in weights],
        out_specs=act_spec,
        compiler_params=pltpu.CompilerParams(
            dimension_semantics=("parallel",) if steps > 1 else ("arbitrary",),
            vmem_limit_bytes=32 * 1024 * 1024),
    )(q, k, v, *weights)

    # Module returns the norm2 output in (B, C, L) layout.
    return jnp.transpose(out.reshape(B, L, C), (0, 2, 1))


def attention_network(query, key, value, prepared, nhead, eps=1e-5,
                      batch_grid=None):
    """Single AttentionNetwork forward — matches the PyTorch module exactly."""
    return decompose_network(query, key, value, prepared, 1, nhead, eps,
                             batch_grid)


# ----------------------------------------------------------------------------
# Pure-JAX fp32 reference (PyTorch semantics) for correctness check.
# ----------------------------------------------------------------------------
def _layer_ref(q, k, v, p, nhead, eps=1e-5):
    B, L, C = q.shape
    hd = C // nhead
    wq, wk, wv = jnp.split(p['wqkv'], 3, axis=0)
    bq, bk, bv = jnp.split(p['bqkv'][0], 3)
    Q = q @ wq.T + bq
    K = k @ wk.T + bk
    V = v @ wv.T + bv
    Qh = Q.reshape(B, L, nhead, hd).transpose(0, 2, 1, 3)
    Kh = K.reshape(B, L, nhead, hd).transpose(0, 2, 1, 3)
    Vh = V.reshape(B, L, nhead, hd).transpose(0, 2, 1, 3)
    s = jnp.einsum('bhqd,bhkd->bhqk', Qh, Kh) / jnp.sqrt(float(hd))
    a = jax.nn.softmax(s, axis=-1)
    o = jnp.einsum('bhqk,bhkd->bhqd', a, Vh).transpose(0, 2, 1, 3).reshape(B, L, C)
    attn = o @ p['wo'].T + p['bo'][0]
    x1 = attn + q
    mu = x1.mean(axis=1, keepdims=True)
    var = ((x1 - mu) ** 2).mean(axis=1, keepdims=True)
    x1n = (x1 - mu) / jnp.sqrt(var + eps) * p['g1'][0] + p['be1'][0]
    h1 = x1n @ p['w1'].T + p['b1'][0]
    h1 = jnp.where(h1 > 0, h1, 0.2 * h1)
    x2 = h1 @ p['w2'].T + p['b2'][0] + x1n
    mu2 = x2.mean(axis=1, keepdims=True)
    var2 = ((x2 - mu2) ** 2).mean(axis=1, keepdims=True)
    return (x2 - mu2) / jnp.sqrt(var2 + eps) * p['g2'][0] + p['be2'][0]


def _decompose_ref(query, key, value, p, num_attns, nhead):
    q = jnp.transpose(query, (0, 2, 1))
    k = jnp.transpose(key, (0, 2, 1))
    v = jnp.transpose(value, (0, 2, 1))
    out = q
    for _ in range(num_attns):
        out = _layer_ref(out, k, v, p, nhead)
    return jnp.transpose(out, (0, 2, 1))


# ----------------------------------------------------------------------------
def init_params(key, d_model, dim_feedforward):
    ks = jax.random.split(key, 6)
    u = lambda k, shape, scale: jax.random.uniform(
        k, shape, jnp.float32, -scale, scale)
    c, f = d_model, dim_feedforward
    return {
        'wqkv': u(ks[0], (3 * c, c), 1.0 / (c ** 0.5)),   # MHA in_proj_weight
        'bqkv': jnp.zeros((1, 3 * c), jnp.float32),       # MHA in_proj_bias
        'wo':   u(ks[1], (c, c), 1.0 / (c ** 0.5)),       # out_proj.weight
        'bo':   jnp.zeros((1, c), jnp.float32),           # out_proj.bias
        'w1':   u(ks[2], (f, c), 1.0 / (c ** 0.5)),       # linear1.weight
        'b1':   u(ks[3], (1, f), 1.0 / (c ** 0.5)),       # linear1.bias
        'w2':   u(ks[4], (c, f), 1.0 / (f ** 0.5)),       # linear2.weight
        'b2':   u(ks[5], (1, c), 1.0 / (f ** 0.5)),       # linear2.bias
        'g1':   jnp.ones((1, c), jnp.float32),            # norm1 weight
        'be1':  jnp.zeros((1, c), jnp.float32),           # norm1 bias
        'g2':   jnp.ones((1, c), jnp.float32),            # norm2 weight
        'be2':  jnp.zeros((1, c), jnp.float32),           # norm2 bias
    }


if __name__ == "__main__":
    # Small config: nhead = 4, num_attns = 2, d_model = 32, L = H*W = 16.
    B, d_model, L = 2, 32, 16
    nhead, num_attns = 4, 2
    dim_feedforward = 2048    # module default

    root = jax.random.PRNGKey(0)
    kq, kk, kv, kp = jax.random.split(root, 4)
    query = jax.random.normal(kq, (B, d_model, L), jnp.float32)
    key_in = jax.random.normal(kk, (B, d_model, L), jnp.float32)
    value = jax.random.normal(kv, (B, d_model, L), jnp.float32)
    params = init_params(kp, d_model, dim_feedforward)
    prepared = prepare_params(params, nhead)

    # Single AttentionNetwork block (the spec'd module).
    out1 = jax.block_until_ready(
        attention_network(query, key_in, value, prepared, nhead))
    ref1 = jax.block_until_ready(
        _decompose_ref(query, key_in, value, params, 1, nhead))
    assert out1.shape == (B, d_model, L)
    err1 = float(jnp.max(jnp.abs(out1 - ref1)))
    # bf16 FFN matmul operands (fp32 accumulate) => small drift vs fp32 reference.
    assert err1 < 2e-2, f"single-layer mismatch: {err1}"

    # Fused stack of cloned blocks (num_attns layers in one kernel call).
    out2 = jax.block_until_ready(
        decompose_network(query, key_in, value, prepared, num_attns, nhead))
    ref2 = jax.block_until_ready(
        _decompose_ref(query, key_in, value, params, num_attns, nhead))
    assert out2.shape == (B, d_model, L)
    err2 = float(jnp.max(jnp.abs(out2 - ref2)))
    assert err2 < 2e-2, f"stacked-layer mismatch: {err2}"

    print("KERNEL_OK")
</pallas_src>

<mosaic_0001>
module attributes {stable_mosaic.version = 11 : i64} {
  func.func @_fused_attention_stack_kernel(%arg0: i32, %arg1: memref<32x32xf32, #tpu.memory_space<vmem>>, %arg2: memref<32x32xf32, #tpu.memory_space<vmem>>, %arg3: memref<32x32xf32, #tpu.memory_space<vmem>>, %arg4: memref<32x32xf32, #tpu.memory_space<vmem>>, %arg5: memref<32x32xf32, #tpu.memory_space<vmem>>, %arg6: memref<128x32xf32, #tpu.memory_space<vmem>>, %arg7: memref<32x2048xbf16, #tpu.memory_space<vmem>>, %arg8: memref<2048x32xbf16, #tpu.memory_space<vmem>>, %arg9: memref<1x2048xf32, #tpu.memory_space<vmem>>, %arg10: memref<16x32xf32, #tpu.memory_space<vmem>>, %arg11: memref<32x32xf32, #tpu.memory_space<vmem>>) attributes {dimension_semantics = [#tpu.dimension_semantics<arbitrary>], iteration_bounds = array<i64: 1>, scalar_prefetch = 0 : i64, scratch_operands = 0 : i64, tpu.core_type = #tpu.core_type<tc>, window_params = [{transform_indices = @transform_0, window_bounds = array<i64: 32, 32>}, {transform_indices = @transform_1, window_bounds = array<i64: 32, 32>}, {transform_indices = @transform_2, window_bounds = array<i64: 32, 32>}, {pipeline_mode = #tpu.pipeline_mode<synchronous>, transform_indices = @transform_3, window_bounds = array<i64: 32, 32>}, {pipeline_mode = #tpu.pipeline_mode<synchronous>, transform_indices = @transform_4, window_bounds = array<i64: 32, 32>}, {pipeline_mode = #tpu.pipeline_mode<synchronous>, transform_indices = @transform_5, window_bounds = array<i64: 128, 32>}, {pipeline_mode = #tpu.pipeline_mode<synchronous>, transform_indices = @transform_6, window_bounds = array<i64: 32, 2048>}, {pipeline_mode = #tpu.pipeline_mode<synchronous>, transform_indices = @transform_7, window_bounds = array<i64: 2048, 32>}, {pipeline_mode = #tpu.pipeline_mode<synchronous>, transform_indices = @transform_8, window_bounds = array<i64: 1, 2048>}, {pipeline_mode = #tpu.pipeline_mode<synchronous>, transform_indices = @transform_9, window_bounds = array<i64: 16, 32>}, {transform_indices = @transform_10, window_bounds = array<i64: 32, 32>}]} {
    %c0 = arith.constant 0 : index
    %c0_0 = arith.constant 0 : index
    %0 = vector.load %arg10[%c0, %c0_0] : memref<16x32xf32, #tpu.memory_space<vmem>>, vector<16x32xf32>
    %1 = vector.extract_strided_slice %0 {offsets = [0, 0], sizes = [1, 32], strides = [1, 1]} : vector<16x32xf32> to vector<1x32xf32>
    %2 = vector.extract_strided_slice %0 {offsets = [1, 0], sizes = [1, 32], strides = [1, 1]} : vector<16x32xf32> to vector<1x32xf32>
    %3 = vector.extract_strided_slice %0 {offsets = [2, 0], sizes = [1, 32], strides = [1, 1]} : vector<16x32xf32> to vector<1x32xf32>
    %4 = vector.extract_strided_slice %0 {offsets = [3, 0], sizes = [1, 32], strides = [1, 1]} : vector<16x32xf32> to vector<1x32xf32>
    %5 = vector.extract_strided_slice %0 {offsets = [4, 0], sizes = [1, 32], strides = [1, 1]} : vector<16x32xf32> to vector<1x32xf32>
    %6 = vector.extract_strided_slice %0 {offsets = [5, 0], sizes = [1, 32], strides = [1, 1]} : vector<16x32xf32> to vector<1x32xf32>
    %7 = vector.extract_strided_slice %0 {offsets = [6, 0], sizes = [1, 32], strides = [1, 1]} : vector<16x32xf32> to vector<1x32xf32>
    %8 = vector.extract_strided_slice %0 {offsets = [7, 0], sizes = [1, 32], strides = [1, 1]} : vector<16x32xf32> to vector<1x32xf32>
    %c0_1 = arith.constant 0 : index
    %c0_2 = arith.constant 0 : index
    %9 = vector.load %arg9[%c0_1, %c0_2] : memref<1x2048xf32, #tpu.memory_space<vmem>>, vector<1x2048xf32>
    %c0_3 = arith.constant 0 : index
    %c0_4 = arith.constant 0 : index
    %10 = vector.load %arg6[%c0_3, %c0_4] : memref<128x32xf32, #tpu.memory_space<vmem>>, vector<128x32xf32>
    %c0_5 = arith.constant 0 : index
    %c0_6 = arith.constant 0 : index
    %11 = vector.load %arg2[%c0_5, %c0_6] : memref<32x32xf32, #tpu.memory_space<vmem>>, vector<32x32xf32>
    %c0_7 = arith.constant 0 : index
    %c0_8 = arith.constant 0 : index
    %12 = vector.load %arg5[%c0_7, %c0_8] : memref<32x32xf32, #tpu.memory_space<vmem>>, vector<32x32xf32>
    %cst = arith.constant dense<0.000000e+00> : vector<32x32xf32>
    %13 = tpu.matmul %11, %12, %cst {dimension_numbers = #tpu.dot_dimension_numbers<[1], [0], [0], [1], [0, 0, 1, 1], [], []>} : vector<32x32xf32>, vector<32x32xf32>, vector<32x32xf32> -> vector<32x32xf32>
    %14 = vector.broadcast %2 : vector<1x32xf32> to vector<32x32xf32>
    %15 = arith.addf %13, %14 : vector<32x32xf32>
    %16 = tpu.iota {dimensions = array<i32: 1>} : vector<1x32xi32>
    %c0_9 = arith.constant 0 : index
    %c0_10 = arith.constant 0 : index
    %17 = vector.load %arg3[%c0_9, %c0_10] : memref<32x32xf32, #tpu.memory_space<vmem>>, vector<32x32xf32>
    %c0_i32 = arith.constant 0 : i32
    %18 = vector.broadcast %c0_i32 : i32 to vector<1x32xi32>
    %19 = arith.cmpi sge, %16, %18 : vector<1x32xi32>
    %c8_i32 = arith.constant 8 : i32
    %20 = vector.broadcast %c8_i32 : i32 to vector<1x32xi32>
    %21 = arith.cmpi slt, %16, %20 : vector<1x32xi32>
    %22 = arith.andi %19, %21 : vector<1x32xi1>
    %23 = arith.extui %22 : vector<1x32xi1> to vector<1x32xi32>
    %24 = arith.sitofp %23 : vector<1x32xi32> to vector<1x32xf32>
    %25 = vector.broadcast %24 : vector<1x32xf32> to vector<32x32xf32>
    %26 = arith.mulf %15, %25 : vector<32x32xf32>
    %27 = vector.shape_cast %26 : vector<32x32xf32> to vector<2x16x32xf32>
    %28 = vector.extract_strided_slice %10 {offsets = [0, 0], sizes = [32, 32], strides = [1, 1]} : vector<128x32xf32> to vector<32x32xf32>
    %cst_11 = arith.constant dense<0.000000e+00> : vector<32x32xf32>
    %29 = tpu.matmul %17, %28, %cst_11 {dimension_numbers = #tpu.dot_dimension_numbers<[1], [0], [0], [1], [0, 0, 1, 1], [], []>} : vector<32x32xf32>, vector<32x32xf32>, vector<32x32xf32> -> vector<32x32xf32>
    %30 = vector.extract_strided_slice %0 {offsets = [8, 0], sizes = [1, 32], strides = [1, 1]} : vector<16x32xf32> to vector<1x32xf32>
    %31 = vector.broadcast %30 : vector<1x32xf32> to vector<32x32xf32>
    %32 = arith.addf %29, %31 : vector<32x32xf32>
    %33 = vector.shape_cast %32 : vector<32x32xf32> to vector<2x16x32xf32>
    %c8_i32_12 = arith.constant 8 : i32
    %34 = vector.broadcast %c8_i32_12 : i32 to vector<1x32xi32>
    %35 = arith.cmpi sge, %16, %34 : vector<1x32xi32>
    %c16_i32 = arith.constant 16 : i32
    %36 = vector.broadcast %c16_i32 : i32 to vector<1x32xi32>
    %37 = arith.cmpi slt, %16, %36 : vector<1x32xi32>
    %38 = arith.andi %35, %37 : vector<1x32xi1>
    %39 = arith.extui %38 : vector<1x32xi1> to vector<1x32xi32>
    %40 = arith.sitofp %39 : vector<1x32xi32> to vector<1x32xf32>
    %41 = vector.broadcast %40 : vector<1x32xf32> to vector<32x32xf32>
    %42 = arith.mulf %15, %41 : vector<32x32xf32>
    %43 = vector.shape_cast %42 : vector<32x32xf32> to vector<2x16x32xf32>
    %44 = vector.extract_strided_slice %10 {offsets = [32, 0], sizes = [32, 32], strides = [1, 1]} : vector<128x32xf32> to vector<32x32xf32>
    %cst_13 = arith.constant dense<0.000000e+00> : vector<32x32xf32>
    %45 = tpu.matmul %17, %44, %cst_13 {dimension_numbers = #tpu.dot_dimension_numbers<[1], [0], [0], [1], [0, 0, 1, 1], [], []>} : vector<32x32xf32>, vector<32x32xf32>, vector<32x32xf32> -> vector<32x32xf32>
    %46 = vector.extract_strided_slice %0 {offsets = [9, 0], sizes = [1, 32], strides = [1, 1]} : vector<16x32xf32> to vector<1x32xf32>
    %47 = vector.broadcast %46 : vector<1x32xf32> to vector<32x32xf32>
    %48 = arith.addf %45, %47 : vector<32x32xf32>
    %49 = vector.shape_cast %48 : vector<32x32xf32> to vector<2x16x32xf32>
    %c16_i32_14 = arith.constant 16 : i32
    %50 = vector.broadcast %c16_i32_14 : i32 to vector<1x32xi32>
    %51 = arith.cmpi sge, %16, %50 : vector<1x32xi32>
    %c24_i32 = arith.constant 24 : i32
    %52 = vector.broadcast %c24_i32 : i32 to vector<1x32xi32>
    %53 = arith.cmpi slt, %16, %52 : vector<1x32xi32>
    %54 = arith.andi %51, %53 : vector<1x32xi1>
    %55 = arith.extui %54 : vector<1x32xi1> to vector<1x32xi32>
    %56 = arith.sitofp %55 : vector<1x32xi32> to vector<1x32xf32>
    %57 = vector.broadcast %56 : vector<1x32xf32> to vector<32x32xf32>
    %58 = arith.mulf %15, %57 : vector<32x32xf32>
    %59 = vector.shape_cast %58 : vector<32x32xf32> to vector<2x16x32xf32>
    %60 = vector.extract_strided_slice %10 {offsets = [64, 0], sizes = [32, 32], strides = [1, 1]} : vector<128x32xf32> to vector<32x32xf32>
    %cst_15 = arith.constant dense<0.000000e+00> : vector<32x32xf32>
    %61 = tpu.matmul %17, %60, %cst_15 {dimension_numbers = #tpu.dot_dimension_numbers<[1], [0], [0], [1], [0, 0, 1, 1], [], []>} : vector<32x32xf32>, vector<32x32xf32>, vector<32x32xf32> -> vector<32x32xf32>
    %62 = vector.extract_strided_slice %0 {offsets = [10, 0], sizes = [1, 32], strides = [1, 1]} : vector<16x32xf32> to vector<1x32xf32>
    %63 = vector.broadcast %62 : vector<1x32xf32> to vector<32x32xf32>
    %64 = arith.addf %61, %63 : vector<32x32xf32>
    %65 = vector.shape_cast %64 : vector<32x32xf32> to vector<2x16x32xf32>
    %c24_i32_16 = arith.constant 24 : i32
    %66 = vector.broadcast %c24_i32_16 : i32 to vector<1x32xi32>
    %67 = arith.cmpi sge, %16, %66 : vector<1x32xi32>
    %c32_i32 = arith.constant 32 : i32
    %68 = vector.broadcast %c32_i32 : i32 to vector<1x32xi32>
    %69 = arith.cmpi slt, %16, %68 : vector<1x32xi32>
    %70 = arith.andi %67, %69 : vector<1x32xi1>
    %71 = arith.extui %70 : vector<1x32xi1> to vector<1x32xi32>
    %72 = arith.sitofp %71 : vector<1x32xi32> to vector<1x32xf32>
    %73 = vector.broadcast %72 : vector<1x32xf32> to vector<32x32xf32>
    %74 = arith.mulf %15, %73 : vector<32x32xf32>
    %75 = vector.shape_cast %74 : vector<32x32xf32> to vector<2x16x32xf32>
    %76 = vector.extract_strided_slice %10 {offsets = [96, 0], sizes = [32, 32], strides = [1, 1]} : vector<128x32xf32> to vector<32x32xf32>
    %cst_17 = arith.constant dense<0.000000e+00> : vector<32x32xf32>
    %77 = tpu.matmul %17, %76, %cst_17 {dimension_numbers = #tpu.dot_dimension_numbers<[1], [0], [0], [1], [0, 0, 1, 1], [], []>} : vector<32x32xf32>, vector<32x32xf32>, vector<32x32xf32> -> vector<32x32xf32>
    %78 = vector.extract_strided_slice %0 {offsets = [11, 0], sizes = [1, 32], strides = [1, 1]} : vector<16x32xf32> to vector<1x32xf32>
    %79 = vector.broadcast %78 : vector<1x32xf32> to vector<32x32xf32>
    %80 = arith.addf %77, %79 : vector<32x32xf32>
    %81 = vector.shape_cast %80 : vector<32x32xf32> to vector<2x16x32xf32>
    %c0_18 = arith.constant 0 : index
    %c0_19 = arith.constant 0 : index
    %82 = vector.load %arg1[%c0_18, %c0_19] : memref<32x32xf32, #tpu.memory_space<vmem>>, vector<32x32xf32>
    %c0_20 = arith.constant 0 : index
    %c0_21 = arith.constant 0 : index
    %83 = vector.load %arg4[%c0_20, %c0_21] : memref<32x32xf32, #tpu.memory_space<vmem>>, vector<32x32xf32>
    %cst_22 = arith.constant dense<0.000000e+00> : vector<32x32xf32>
    %84 = tpu.matmul %82, %83, %cst_22 {dimension_numbers = #tpu.dot_dimension_numbers<[1], [0], [0], [1], [0, 0, 1, 1], [], []>} : vector<32x32xf32>, vector<32x32xf32>, vector<32x32xf32> -> vector<32x32xf32>
    %85 = vector.broadcast %1 : vector<1x32xf32> to vector<32x32xf32>
    %86 = arith.addf %84, %85 : vector<32x32xf32>
    %87 = vector.shape_cast %86 : vector<32x32xf32> to vector<2x16x32xf32>
    "tpu.trace_start"() <{level = 10 : i32, message = "bqc,bkc->bqk"}> : () -> ()
    %cst_23 = arith.constant dense<0.000000e+00> : vector<2x16x16xf32>
    %88 = tpu.matmul %87, %27, %cst_23 {dimension_numbers = #tpu.dot_dimension_numbers<[2], [2], [1], [1], [0, 0, 0, 1, 1, 1], [0], [0]>} : vector<2x16x32xf32>, vector<2x16x32xf32>, vector<2x16x16xf32> -> vector<2x16x16xf32>
    "tpu.trace_stop"() : () -> ()
    %cst_24 = arith.constant dense<0xFF800000> : vector<2x16xf32>
    %89 = vector.multi_reduction <maximumf>, %88, %cst_24 [2] : vector<2x16x16xf32> to vector<2x16xf32>
    %90 = vector.shape_cast %89 : vector<2x16xf32> to vector<2x16x1xf32>
    %91 = vector.broadcast %90 : vector<2x16x1xf32> to vector<2x16x16xf32>
    %92 = arith.subf %88, %91 : vector<2x16x16xf32>
    %93 = math.exp %92 : vector<2x16x16xf32>
    %cst_25 = arith.constant dense<0.000000e+00> : vector<2x16xf32>
    %94 = vector.multi_reduction <add>, %93, %cst_25 [2] : vector<2x16x16xf32> to vector<2x16xf32>
    %95 = vector.shape_cast %94 : vector<2x16xf32> to vector<2x16x1xf32>
    %96 = tpu.reciprocal %95 : vector<2x16x1xf32> -> vector<2x16x1xf32>
    %97 = vector.broadcast %96 : vector<2x16x1xf32> to vector<2x16x16xf32>
    %98 = arith.mulf %93, %97 : vector<2x16x16xf32>
    "tpu.trace_start"() <{level = 10 : i32, message = "bqk,bkc->bqc"}> : () -> ()
    %cst_26 = arith.constant dense<0.000000e+00> : vector<2x16x32xf32>
    %99 = tpu.matmul %98, %33, %cst_26 {dimension_numbers = #tpu.dot_dimension_numbers<[2], [1], [1], [2], [0, 0, 0, 1, 1, 2], [0], [0]>} : vector<2x16x16xf32>, vector<2x16x32xf32>, vector<2x16x32xf32> -> vector<2x16x32xf32>
    "tpu.trace_stop"() : () -> ()
    "tpu.trace_start"() <{level = 10 : i32, message = "bqc,bkc->bqk"}> : () -> ()
    %cst_27 = arith.constant dense<0.000000e+00> : vector<2x16x16xf32>
    %100 = tpu.matmul %87, %43, %cst_27 {dimension_numbers = #tpu.dot_dimension_numbers<[2], [2], [1], [1], [0, 0, 0, 1, 1, 1], [0], [0]>} : vector<2x16x32xf32>, vector<2x16x32xf32>, vector<2x16x16xf32> -> vector<2x16x16xf32>
    "tpu.trace_stop"() : () -> ()
    %cst_28 = arith.constant dense<0xFF800000> : vector<2x16xf32>
    %101 = vector.multi_reduction <maximumf>, %100, %cst_28 [2] : vector<2x16x16xf32> to vector<2x16xf32>
    %102 = vector.shape_cast %101 : vector<2x16xf32> to vector<2x16x1xf32>
    %103 = vector.broadcast %102 : vector<2x16x1xf32> to vector<2x16x16xf32>
    %104 = arith.subf %100, %103 : vector<2x16x16xf32>
    %105 = math.exp %104 : vector<2x16x16xf32>
    %cst_29 = arith.constant dense<0.000000e+00> : vector<2x16xf32>
    %106 = vector.multi_reduction <add>, %105, %cst_29 [2] : vector<2x16x16xf32> to vector<2x16xf32>
    %107 = vector.shape_cast %106 : vector<2x16xf32> to vector<2x16x1xf32>
    %108 = tpu.reciprocal %107 : vector<2x16x1xf32> -> vector<2x16x1xf32>
    %109 = vector.broadcast %108 : vector<2x16x1xf32> to vector<2x16x16xf32>
    %110 = arith.mulf %105, %109 : vector<2x16x16xf32>
    "tpu.trace_start"() <{level = 10 : i32, message = "bqk,bkc->bqc"}> : () -> ()
    %cst_30 = arith.constant dense<0.000000e+00> : vector<2x16x32xf32>
    %111 = tpu.matmul %110, %49, %cst_30 {dimension_numbers = #tpu.dot_dimension_numbers<[2], [1], [1], [2], [0, 0, 0, 1, 1, 2], [0], [0]>} : vector<2x16x16xf32>, vector<2x16x32xf32>, vector<2x16x32xf32> -> vector<2x16x32xf32>
    "tpu.trace_stop"() : () -> ()
    %112 = arith.addf %99, %111 : vector<2x16x32xf32>
    "tpu.trace_start"() <{level = 10 : i32, message = "bqc,bkc->bqk"}> : () -> ()
    %cst_31 = arith.constant dense<0.000000e+00> : vector<2x16x16xf32>
    %113 = tpu.matmul %87, %59, %cst_31 {dimension_numbers = #tpu.dot_dimension_numbers<[2], [2], [1], [1], [0, 0, 0, 1, 1, 1], [0], [0]>} : vector<2x16x32xf32>, vector<2x16x32xf32>, vector<2x16x16xf32> -> vector<2x16x16xf32>
    "tpu.trace_stop"() : () -> ()
    %cst_32 = arith.constant dense<0xFF800000> : vector<2x16xf32>
    %114 = vector.multi_reduction <maximumf>, %113, %cst_32 [2] : vector<2x16x16xf32> to vector<2x16xf32>
    %115 = vector.shape_cast %114 : vector<2x16xf32> to vector<2x16x1xf32>
    %116 = vector.broadcast %115 : vector<2x16x1xf32> to vector<2x16x16xf32>
    %117 = arith.subf %113, %116 : vector<2x16x16xf32>
    %118 = math.exp %117 : vector<2x16x16xf32>
    %cst_33 = arith.constant dense<0.000000e+00> : vector<2x16xf32>
    %119 = vector.multi_reduction <add>, %118, %cst_33 [2] : vector<2x16x16xf32> to vector<2x16xf32>
    %120 = vector.shape_cast %119 : vector<2x16xf32> to vector<2x16x1xf32>
    %121 = tpu.reciprocal %120 : vector<2x16x1xf32> -> vector<2x16x1xf32>
    %122 = vector.broadcast %121 : vector<2x16x1xf32> to vector<2x16x16xf32>
    %123 = arith.mulf %118, %122 : vector<2x16x16xf32>
    "tpu.trace_start"() <{level = 10 : i32, message = "bqk,bkc->bqc"}> : () -> ()
    %cst_34 = arith.constant dense<0.000000e+00> : vector<2x16x32xf32>
    %124 = tpu.matmul %123, %65, %cst_34 {dimension_numbers = #tpu.dot_dimension_numbers<[2], [1], [1], [2], [0, 0, 0, 1, 1, 2], [0], [0]>} : vector<2x16x16xf32>, vector<2x16x32xf32>, vector<2x16x32xf32> -> vector<2x16x32xf32>
    "tpu.trace_stop"() : () -> ()
    %125 = arith.addf %112, %124 : vector<2x16x32xf32>
    "tpu.trace_start"() <{level = 10 : i32, message = "bqc,bkc->bqk"}> : () -> ()
    %cst_35 = arith.constant dense<0.000000e+00> : vector<2x16x16xf32>
    %126 = tpu.matmul %87, %75, %cst_35 {dimension_numbers = #tpu.dot_dimension_numbers<[2], [2], [1], [1], [0, 0, 0, 1, 1, 1], [0], [0]>} : vector<2x16x32xf32>, vector<2x16x32xf32>, vector<2x16x16xf32> -> vector<2x16x16xf32>
    "tpu.trace_stop"() : () -> ()
    %cst_36 = arith.constant dense<0xFF800000> : vector<2x16xf32>
    %127 = vector.multi_reduction <maximumf>, %126, %cst_36 [2] : vector<2x16x16xf32> to vector<2x16xf32>
    %128 = vector.shape_cast %127 : vector<2x16xf32> to vector<2x16x1xf32>
    %129 = vector.broadcast %128 : vector<2x16x1xf32> to vector<2x16x16xf32>
    %130 = arith.subf %126, %129 : vector<2x16x16xf32>
    %131 = math.exp %130 : vector<2x16x16xf32>
    %cst_37 = arith.constant dense<0.000000e+00> : vector<2x16xf32>
    %132 = vector.multi_reduction <add>, %131, %cst_37 [2] : vector<2x16x16xf32> to vector<2x16xf32>
    %133 = vector.shape_cast %132 : vector<2x16xf32> to vector<2x16x1xf32>
    %134 = tpu.reciprocal %133 : vector<2x16x1xf32> -> vector<2x16x1xf32>
    %135 = vector.broadcast %134 : vector<2x16x1xf32> to vector<2x16x16xf32>
    %136 = arith.mulf %131, %135 : vector<2x16x16xf32>
    "tpu.trace_start"() <{level = 10 : i32, message = "bqk,bkc->bqc"}> : () -> ()
    %cst_38 = arith.constant dense<0.000000e+00> : vector<2x16x32xf32>
    %137 = tpu.matmul %136, %81, %cst_38 {dimension_numbers = #tpu.dot_dimension_numbers<[2], [1], [1], [2], [0, 0, 0, 1, 1, 2], [0], [0]>} : vector<2x16x16xf32>, vector<2x16x32xf32>, vector<2x16x32xf32> -> vector<2x16x32xf32>
    "tpu.trace_stop"() : () -> ()
    %138 = arith.addf %125, %137 : vector<2x16x32xf32>
    %139 = vector.shape_cast %138 : vector<2x16x32xf32> to vector<32x32xf32>
    %140 = vector.broadcast %3 : vector<1x32xf32> to vector<32x32xf32>
    %141 = arith.addf %139, %140 : vector<32x32xf32>
    %142 = arith.addf %141, %82 : vector<32x32xf32>
    %143 = vector.shape_cast %142 : vector<32x32xf32> to vector<2x16x32xf32>
    %cst_39 = arith.constant dense<0.000000e+00> : vector<2x32xf32>
    %144 = vector.multi_reduction <add>, %143, %cst_39 [1] : vector<2x16x32xf32> to vector<2x32xf32>
    %145 = vector.shape_cast %144 : vector<2x32xf32> to vector<2x1x32xf32>
    %cst_40 = arith.constant 1.600000e+01 : f32
    %146 = vector.broadcast %cst_40 : f32 to vector<2x1x32xf32>
    %147 = arith.divf %145, %146 : vector<2x1x32xf32>
    %148 = vector.broadcast %147 : vector<2x1x32xf32> to vector<2x16x32xf32>
    %149 = arith.subf %143, %148 : vector<2x16x32xf32>
    %150 = arith.mulf %149, %149 : vector<2x16x32xf32>
    %cst_41 = arith.constant dense<0.000000e+00> : vector<2x32xf32>
    %151 = vector.multi_reduction <add>, %150, %cst_41 [1] : vector<2x16x32xf32> to vector<2x32xf32>
    %152 = vector.shape_cast %151 : vector<2x32xf32> to vector<2x1x32xf32>
    %cst_42 = arith.constant 1.600000e+01 : f32
    %153 = vector.broadcast %cst_42 : f32 to vector<2x1x32xf32>
    %154 = arith.divf %152, %153 : vector<2x1x32xf32>
    %155 = vector.broadcast %147 : vector<2x1x32xf32> to vector<2x16x32xf32>
    %156 = arith.subf %143, %155 : vector<2x16x32xf32>
    %cst_43 = arith.constant 9.99999974E-6 : f32
    %157 = vector.broadcast %cst_43 : f32 to vector<2x1x32xf32>
    %158 = arith.addf %154, %157 : vector<2x1x32xf32>
    %159 = math.rsqrt %158 : vector<2x1x32xf32>
    %160 = vector.broadcast %159 : vector<2x1x32xf32> to vector<2x16x32xf32>
    %161 = arith.mulf %156, %160 : vector<2x16x32xf32>
    %162 = vector.shape_cast %5 : vector<1x32xf32> to vector<1x1x32xf32>
    %163 = vector.broadcast %162 : vector<1x1x32xf32> to vector<2x16x32xf32>
    %164 = arith.mulf %161, %163 : vector<2x16x32xf32>
    %165 = vector.shape_cast %6 : vector<1x32xf32> to vector<1x1x32xf32>
    %166 = vector.broadcast %165 : vector<1x1x32xf32> to vector<2x16x32xf32>
    %167 = arith.addf %164, %166 : vector<2x16x32xf32>
    %168 = vector.shape_cast %167 : vector<2x16x32xf32> to vector<32x32xf32>
    %169 = arith.truncf %168 : vector<32x32xf32> to vector<32x32xbf16>
    %c0_44 = arith.constant 0 : index
    %c0_45 = arith.constant 0 : index
    %170 = vector.load %arg7[%c0_44, %c0_45] : memref<32x2048xbf16, #tpu.memory_space<vmem>>, vector<32x2048xbf16>
    %cst_46 = arith.constant dense<0.000000e+00> : vector<32x2048xf32>
    %171 = tpu.matmul %169, %170, %cst_46 {dimension_numbers = #tpu.dot_dimension_numbers<[1], [0], [0], [1], [0, 0, 1, 1], [], []>} : vector<32x32xbf16>, vector<32x2048xbf16>, vector<32x2048xf32> -> vector<32x2048xf32>
    %172 = vector.broadcast %9 : vector<1x2048xf32> to vector<32x2048xf32>
    %173 = arith.addf %171, %172 : vector<32x2048xf32>
    %cst_47 = arith.constant 0.000000e+00 : f32
    %174 = vector.broadcast %cst_47 : f32 to vector<32x2048xf32>
    %175 = arith.cmpf ogt, %173, %174 : vector<32x2048xf32>
    %cst_48 = arith.constant 2.000000e-01 : f32
    %176 = vector.broadcast %cst_48 : f32 to vector<32x2048xf32>
    %177 = arith.mulf %176, %173 : vector<32x2048xf32>
    %178 = arith.select %175, %173, %177 : vector<32x2048xi1>, vector<32x2048xf32>
    %179 = arith.truncf %178 : vector<32x2048xf32> to vector<32x2048xbf16>
    %c0_49 = arith.constant 0 : index
    %c0_50 = arith.constant 0 : index
    %180 = vector.load %arg8[%c0_49, %c0_50] : memref<2048x32xbf16, #tpu.memory_space<vmem>>, vector<2048x32xbf16>
    %cst_51 = arith.constant dense<0.000000e+00> : vector<32x32xf32>
    %181 = tpu.matmul %179, %180, %cst_51 {dimension_numbers = #tpu.dot_dimension_numbers<[1], [0], [0], [1], [0, 0, 1, 1], [], []>} : vector<32x2048xbf16>, vector<2048x32xbf16>, vector<32x32xf32> -> vector<32x32xf32>
    %182 = vector.broadcast %4 : vector<1x32xf32> to vector<32x32xf32>
    %183 = arith.addf %181, %182 : vector<32x32xf32>
    %184 = arith.addf %183, %168 : vector<32x32xf32>
    %185 = vector.shape_cast %184 : vector<32x32xf32> to vector<2x16x32xf32>
    %cst_52 = arith.constant dense<0.000000e+00> : vector<2x32xf32>
    %186 = vector.multi_reduction <add>, %185, %cst_52 [1] : vector<2x16x32xf32> to vector<2x32xf32>
    %187 = vector.shape_cast %186 : vector<2x32xf32> to vector<2x1x32xf32>
    %cst_53 = arith.constant 1.600000e+01 : f32
    %188 = vector.broadcast %cst_53 : f32 to vector<2x1x32xf32>
    %189 = arith.divf %187, %188 : vector<2x1x32xf32>
    %190 = vector.broadcast %189 : vector<2x1x32xf32> to vector<2x16x32xf32>
    %191 = arith.subf %185, %190 : vector<2x16x32xf32>
    %192 = arith.mulf %191, %191 : vector<2x16x32xf32>
    %cst_54 = arith.constant dense<0.000000e+00> : vector<2x32xf32>
    %193 = vector.multi_reduction <add>, %192, %cst_54 [1] : vector<2x16x32xf32> to vector<2x32xf32>
    %194 = vector.shape_cast %193 : vector<2x32xf32> to vector<2x1x32xf32>
    %cst_55 = arith.constant 1.600000e+01 : f32
    %195 = vector.broadcast %cst_55 : f32 to vector<2x1x32xf32>
    %196 = arith.divf %194, %195 : vector<2x1x32xf32>
    %197 = vector.broadcast %189 : vector<2x1x32xf32> to vector<2x16x32xf32>
    %198 = arith.subf %185, %197 : vector<2x16x32xf32>
    %cst_56 = arith.constant 9.99999974E-6 : f32
    %199 = vector.broadcast %cst_56 : f32 to vector<2x1x32xf32>
    %200 = arith.addf %196, %199 : vector<2x1x32xf32>
    %201 = math.rsqrt %200 : vector<2x1x32xf32>
    %202 = vector.broadcast %201 : vector<2x1x32xf32> to vector<2x16x32xf32>
    %203 = arith.mulf %198, %202 : vector<2x16x32xf32>
    %204 = vector.shape_cast %7 : vector<1x32xf32> to vector<1x1x32xf32>
    %205 = vector.broadcast %204 : vector<1x1x32xf32> to vector<2x16x32xf32>
    %206 = arith.mulf %203, %205 : vector<2x16x32xf32>
    %207 = vector.shape_cast %8 : vector<1x32xf32> to vector<1x1x32xf32>
    %208 = vector.broadcast %207 : vector<1x1x32xf32> to vector<2x16x32xf32>
    %209 = arith.addf %206, %208 : vector<2x16x32xf32>
    %210 = vector.shape_cast %209 : vector<2x16x32xf32> to vector<32x32xf32>
    %c0_57 = arith.constant 0 : index
    %c0_58 = arith.constant 0 : index
    %211 = vector.load %arg11[%c0_57, %c0_58] : memref<32x32xf32, #tpu.memory_space<vmem>>, vector<32x32xf32>
    tpu.vector_store %arg11[%c0_57, %c0_58], %210 {strides = array<i32>} : memref<32x32xf32, #tpu.memory_space<vmem>>, vector<32x32xf32>,
    return
  }
  func.func @transform_0(%arg0: i32) -> (i32, i32) {
    %c0_i32 = arith.constant 0 : i32
    %c0_i32_0 = arith.constant 0 : i32
    return %arg0, %c0_i32 : i32, i32
  }
  func.func @transform_1(%arg0: i32) -> (i32, i32) {
    %c0_i32 = arith.constant 0 : i32
    %c0_i32_0 = arith.constant 0 : i32
    return %arg0, %c0_i32 : i32, i32
  }
  func.func @transform_2(%arg0: i32) -> (i32, i32) {
    %c0_i32 = arith.constant 0 : i32
    %c0_i32_0 = arith.constant 0 : i32
    return %arg0, %c0_i32 : i32, i32
  }
  func.func @transform_3(%arg0: i32) -> (i32, i32) {
    %c0_i32 = arith.constant 0 : i32
    %c0_i32_0 = arith.constant 0 : i32
    %c0_i32_1 = arith.constant 0 : i32
    return %c0_i32, %c0_i32_0 : i32, i32
  }
  func.func @transform_4(%arg0: i32) -> (i32, i32) {
    %c0_i32 = arith.constant 0 : i32
    %c0_i32_0 = arith.constant 0 : i32
    %c0_i32_1 = arith.constant 0 : i32
    return %c0_i32, %c0_i32_0 : i32, i32
  }
  func.func @transform_5(%arg0: i32) -> (i32, i32) {
    %c0_i32 = arith.constant 0 : i32
    %c0_i32_0 = arith.constant 0 : i32
    %c0_i32_1 = arith.constant 0 : i32
    return %c0_i32, %c0_i32_0 : i32, i32
  }
  func.func @transform_6(%arg0: i32) -> (i32, i32) {
    %c0_i32 = arith.constant 0 : i32
    %c0_i32_0 = arith.constant 0 : i32
    %c0_i32_1 = arith.constant 0 : i32
    return %c0_i32, %c0_i32_0 : i32, i32
  }
  func.func @transform_7(%arg0: i32) -> (i32, i32) {
    %c0_i32 = arith.constant 0 : i32
    %c0_i32_0 = arith.constant 0 : i32
    %c0_i32_1 = arith.constant 0 : i32
    return %c0_i32, %c0_i32_0 : i32, i32
  }
  func.func @transform_8(%arg0: i32) -> (i32, i32) {
    %c0_i32 = arith.constant 0 : i32
    %c0_i32_0 = arith.constant 0 : i32
    %c0_i32_1 = arith.constant 0 : i32
    return %c0_i32, %c0_i32_0 : i32, i32
  }
  func.func @transform_9(%arg0: i32) -> (i32, i32) {
    %c0_i32 = arith.constant 0 : i32
    %c0_i32_0 = arith.constant 0 : i32
    %c0_i32_1 = arith.constant 0 : i32
    return %c0_i32, %c0_i32_0 : i32, i32
  }
  func.func @transform_10(%arg0: i32) -> (i32, i32) {
    %c0_i32 = arith.constant 0 : i32
    %c0_i32_0 = arith.constant 0 : i32
    return %arg0, %c0_i32 : i32, i32
  }
}

</mosaic_0001>

<llo_original>
// kernel: tpu_custom_call.1
$region0: #{tpu_custom_call.1}
  #allocation0 [shape = 'u32[]', space=smem, size = 0x4, offset = 0x4, fixed_abs, tag = 'smem constant byte address 0x4 - core index']
  #allocation1 [shape = 'u32[144,128]{1,0:T(1,128)}', space=vmem, size = 0x12000, scoped, tag = 'internal scratch']
  %s0 = inlined_call_operand.vmem [shape: f32[32,32], index: 0, kind: input, shape index: {}]
  %s1 = inlined_call_operand.vmem [shape: f32[32,32], index: 1, kind: input, shape index: {}]
  %s2 = inlined_call_operand.vmem [shape: f32[32,32], index: 2, kind: input, shape index: {}]
  %s3 = inlined_call_operand.vmem [shape: f32[32,32], index: 3, kind: input, shape index: {}]
  %s4 = inlined_call_operand.vmem [shape: f32[32,32], index: 4, kind: input, shape index: {}]
  %s5 = inlined_call_operand.vmem [shape: f32[128,32], index: 5, kind: input, shape index: {}]
  %s6 = inlined_call_operand.vmem [shape: bf16[32,2048], index: 6, kind: input, shape index: {}]
  %s7 = inlined_call_operand.vmem [shape: bf16[2048,32], index: 7, kind: input, shape index: {}]
  %s8 = inlined_call_operand.vmem [shape: f32[1,2048], index: 8, kind: input, shape index: {}]
  %s9 = inlined_call_operand.vmem [shape: f32[16,32], index: 9, kind: input, shape index: {}]
  %s10 = inlined_call_operand.hbm [shape: f32[32,32], index: 10, kind: output, shape index: {}]
  %s11 = sld [smem:[#allocation0]]
  $region50: #{tpu_custom_call.1} parent=0
    _
  %s13 = ssub.s32 1, %s11
  %s14 = scalar_select 0, %s13, %s11
  $region1: #{tpu_custom_call.1} parent=0
    #allocation2 [shape = 'u8[16384]{0}', space=vmem, size = 0x4000, scoped, tag = 'output window, operand 0, single buffered']
    #allocation3 [shape = 's32[1]{0}', space=sflag, size = 0x4, scoped, tag = 'scoped memory for tpu_custom_call.1']
    %15 = vsyncpa [#allocation3], 0
    // Predicated region
    $region2: #{tpu_custom_call.1} parent=1 // pred_check
      _
    $region3: #{tpu_custom_call.1} parent=1 // pred_check_branch
      %17 = sbr.rel (0) target = $region5
    $region4: #{tpu_custom_call.1} parent=1 // pred_region
      _
    $region5: #{tpu_custom_call.1} parent=1 // pred_fallthru
      _
    // Predicated region
    $region6: #{tpu_custom_call.1} parent=1 // pred_check
      _
    $region7: #{tpu_custom_call.1} parent=1 // pred_check_branch
      %19 = sbr.rel (0) target = $region9
    $region8: #{tpu_custom_call.1} parent=1 // pred_region
      _
    $region9: #{tpu_custom_call.1} parent=1 // pred_fallthru
      _
    // Predicated region
    $region10: #{tpu_custom_call.1} parent=1 // pred_check
      _
    $region11: #{tpu_custom_call.1} parent=1 // pred_check_branch
      %21 = sbr.rel (0) target = $region13
    $region12: #{tpu_custom_call.1} parent=1 // pred_region
      _
    $region13: #{tpu_custom_call.1} parent=1 // pred_fallthru
      _
    // Predicated region
    $region14: #{tpu_custom_call.1} parent=1 // pred_check
      _
    $region15: #{tpu_custom_call.1} parent=1 // pred_check_branch
      %23 = sbr.rel (0) target = $region17
    $region16: #{tpu_custom_call.1} parent=1 // pred_region
      _
    $region17: #{tpu_custom_call.1} parent=1 // pred_fallthru
      _
    // Predicated region
    $region18: #{tpu_custom_call.1} parent=1 // pred_check
      _
    $region19: #{tpu_custom_call.1} parent=1 // pred_check_branch
      %25 = sbr.rel (0) target = $region21
    $region20: #{tpu_custom_call.1} parent=1 // pred_region
      _
    $region21: #{tpu_custom_call.1} parent=1 // pred_fallthru
      _
    // Predicated region
    $region22: #{tpu_custom_call.1} parent=1 // pred_check
      _
    $region23: #{tpu_custom_call.1} parent=1 // pred_check_branch
      %27 = sbr.rel (0) target = $region25
    $region24: #{tpu_custom_call.1} parent=1 // pred_region
      _
    $region25: #{tpu_custom_call.1} parent=1 // pred_fallthru
      _
    // Predicated region
    $region26: #{tpu_custom_call.1} parent=1 // pred_check
      _
    $region27: #{tpu_custom_call.1} parent=1 // pred_check_branch
      %29 = sbr.rel (0) target = $region29
    $region28: #{tpu_custom_call.1} parent=1 // pred_region
      _
    $region29: #{tpu_custom_call.1} parent=1 // pred_fallthru
      _
    // Predicated region
    $region30: #{tpu_custom_call.1} parent=1 // pred_check
      _
    $region31: #{tpu_custom_call.1} parent=1 // pred_check_branch
      %31 = sbr.rel (0) target = $region33
    $region32: #{tpu_custom_call.1} parent=1 // pred_region
      _
    $region33: #{tpu_custom_call.1} parent=1 // pred_fallthru
      _
    // Predicated region
    $region34: #{tpu_custom_call.1} parent=1 // pred_check
      _
    $region35: #{tpu_custom_call.1} parent=1 // pred_check_branch
      %33 = sbr.rel (0) target = $region37
    $region36: #{tpu_custom_call.1} parent=1 // pred_region
      _
    $region37: #{tpu_custom_call.1} parent=1 // pred_fallthru
      _
    // Predicated region
    $region38: #{tpu_custom_call.1} parent=1 // pred_check
      _
    $region39: #{tpu_custom_call.1} parent=1 // pred_check_branch
      %35 = sbr.rel (0) target = $region41
    $region40: #{tpu_custom_call.1} parent=1 // pred_region
      _
    $region41: #{tpu_custom_call.1} parent=1 // pred_fallthru
      _
    %v37 = vld [vmem:[%s9] sm:$0xff]
    %v38 = vld [vmem:[%s9 + $0x8] sm:$0xff]
    %v39 = vld [vmem:[%s8] sm:$0xff]
    %v40 = vld [vmem:[%s8 + $0x8] sm:$0xff]
    %v41 = vld [vmem:[%s5] sm:$0xff]
    %v42 = vld [vmem:[%s5 + $0x8] sm:$0xff]
    %v43 = vld [vmem:[%s5 + $0x10] sm:$0xff]
    %v44 = vld [vmem:[%s5 + $0x18] sm:$0xff]
    %v45 = vld [vmem:[%s5 + $0x20] sm:$0xff]
    %v46 = vld [vmem:[%s5 + $0x28] sm:$0xff]
    %v47 = vld [vmem:[%s5 + $0x30] sm:$0xff]
    %v48 = vld [vmem:[%s5 + $0x38] sm:$0xff]
    %v49 = vld [vmem:[%s5 + $0x40] sm:$0xff]
    %v50 = vld [vmem:[%s5 + $0x48] sm:$0xff]
    %v51 = vld [vmem:[%s5 + $0x50] sm:$0xff]
    %v52 = vld [vmem:[%s5 + $0x58] sm:$0xff]
    %v53 = vld [vmem:[%s5 + $0x60] sm:$0xff]
    %v54 = vld [vmem:[%s5 + $0x68] sm:$0xff]
    %v55 = vld [vmem:[%s5 + $0x70] sm:$0xff]
    %v56 = vld [vmem:[%s5 + $0x78] sm:$0xff]
    %v57 = vld [vmem:[%s1] sm:$0xff]
    %v58 = vld [vmem:[%s1 + $0x8] sm:$0xff]
    %v59 = vld [vmem:[%s1 + $0x10] sm:$0xff]
    %v60 = vld [vmem:[%s1 + $0x18] sm:$0xff]
    %v61 = vld [vmem:[%s4] sm:$0xff]
    %v62 = vld [vmem:[%s4 + $0x8] sm:$0xff]
    %v63 = vld [vmem:[%s4 + $0x10] sm:$0xff]
    %v64 = vld [vmem:[%s4 + $0x18] sm:$0xff]
    %v65 = vlaneseq
    %v66 = vshrl.u32 %v65, 7
    %v67 = vsub.s32 1, %v66
    %v68 = vrot.slane %v37, %v67
    %vm69 = vcmask 261120
    %v71 = vsel %vm69, %v57, 0
    %v74 = vsel %vm69, %v58, 0
    %v77 = vsel %vm69, %v59, 0
    %v80 = vsel %vm69, %v60, 0
    %82 = vmatprep.subr.mxu0 0.0
    %83 = vmatpush1.msra.mxu0 %v61
    %84 = vmatprep.subr.mxu0 0.0
    %85 = vmatpush1.msra.mxu0 %v62
    %86 = vmatprep.subr.mxu0 0.0
    %87 = vmatpush1.msra.mxu0 %v63
    %88 = vmatprep.subr.mxu0 0.0
    %89 = vmatpush1.msra.mxu0 %v64
    %90 = vmatprep.subr.mxu0 0.0
    %91 = vmatpush1.msra.mxu0 0.0
    %92 = vmatprep.subr.mxu0 0.0
    %93 = vmatpush1.msra.mxu0 0.0
    %94 = vmatprep.subr.mxu0 0.0
    %95 = vmatpush1.msra.mxu0 0.0
    %96 = vmatprep.subr.mxu0 0.0
    %97 = vmatpush1.msra.mxu0 0.0
    %98 = vmatprep.subr.mxu0 0.0
    %99 = vmatpush1.msra.mxu0 0.0
    %100 = vmatprep.subr.mxu0 0.0
    %101 = vmatpush1.msra.mxu0 0.0
    %102 = vmatprep.subr.mxu0 0.0
    %103 = vmatpush1.msra.mxu0 0.0
    %104 = vmatprep.subr.mxu0 0.0
    %105 = vmatpush1.msra.mxu0 0.0
    %106 = vmatprep.subr.mxu0 0.0
    %107 = vmatpush1.msra.mxu0 0.0
    %108 = vmatprep.subr.mxu0 0.0
    %109 = vmatpush1.msra.mxu0 0.0
    %110 = vmatprep.subr.mxu0 0.0
    %111 = vmatpush1.msra.mxu0 0.0
    %112 = vmatprep.subr.mxu0 0.0
    %113 = vmatpush1.msra.mxu0 0.0
    %114 = vmatprep.subr.mxu0 0.0
    %115 = vmatpush1.msra.mxu0 0.0
    %116 = vmatprep.subr.mxu0 0.0
    %117 = vmatpush1.msra.mxu0 0.0
    %118 = vmatprep.subr.mxu0 0.0
    %119 = vmatpush1.msra.mxu0 0.0
    %120 = vmatprep.subr.mxu0 0.0
    %121 = vmatpush1.msra.mxu0 0.0
    %122 = vmatprep.subr.mxu0 0.0
    %123 = vmatpush1.msra.mxu0 0.0
    %124 = vmatprep.subr.mxu0 0.0
    %125 = vmatpush1.msra.mxu0 0.0
    %126 = vmatprep.subr.mxu0 0.0
    %127 = vmatpush1.msra.mxu0 0.0
    %128 = vmatprep.subr.mxu0 0.0
    %129 = vmatpush1.msra.mxu0 0.0
    %130 = vmatprep.subr.mxu0 0.0
    %131 = vmatpush1.msra.mxu0 0.0
    %132 = vmatprep.subr.mxu0 0.0
    %133 = vmatpush1.msra.mxu0 0.0
    %134 = vmatprep.subr.mxu0 0.0
    %135 = vmatpush1.msra.mxu0 0.0
    %136 = vmatprep.subr.mxu0 0.0
    %137 = vmatpush1.msra.mxu0 0.0
    %138 = vmatprep.subr.mxu0 0.0
    %139 = vmatpush1.msra.mxu0 0.0
    %140 = vmatprep.subr.mxu0 0.0
    %141 = vmatpush1.msra.mxu0 0.0
    %142 = vmatprep.subr.mxu0 0.0
    %143 = vmatpush1.msra.mxu0 0.0
    %144 = vmatprep.subr.mxu0 0.0
    %145 = vmatpush1.msra.mxu0 0.0
    %146 = vmatprep.mubr.f32.mxu0 0.0
    %147 = vmatmul.mubr.f32.gmra.mrb[0].mxu0 %v71
    %v148 = vpop.f32.mrb[0].mxu0
    %v149 = vadd.f32 %v68, %v148
    %v150 = vpop.f32.mrb[0].mxu0
    %151 = vmatprep.mubr.f32.mxu0 0.0
    %152 = vmatmul.mubr.f32.gmra.mrb[0].mxu0 %v74
    %v153 = vpop.f32.mrb[0].mxu0
    %v154 = vadd.f32 %v68, %v153
    %v155 = vpop.f32.mrb[0].mxu0
    %156 = vmatprep.mubr.f32.mxu0 0.0
    %157 = vmatmul.mubr.f32.gmra.mrb[0].mxu0 %v77
    %v158 = vpop.f32.mrb[0].mxu0
    %v159 = vadd.f32 %v68, %v158
    %v160 = vpop.f32.mrb[0].mxu0
    %161 = vmatprep.mubr.f32.mxu0 0.0
    %162 = vmatmul.mubr.f32.gmra.mrb[0].mxu0 %v80
    %v163 = vpop.f32.mrb[0].mxu0
    %v164 = vadd.f32 %v68, %v163
    %v165 = vpop.f32.mrb[0].mxu0
    %166 = vdwg.mxu0
    %v167 = vlaneseq
    %v168 = vand.u32 %v167, 127
    %v169 = vld [vmem:[%s2] sm:$0xff]
    %v170 = vld [vmem:[%s2 + $0x8] sm:$0xff]
    %v171 = vld [vmem:[%s2 + $0x10] sm:$0xff]
    %v172 = vld [vmem:[%s2 + $0x18] sm:$0xff]
    %vm173 = vcmp.ge.s32.totalorder %v168, 0
    %vm174 = vcmp.lt.s32.totalorder %v168, 8
    %vm175 = vmand %vm173, %vm174
    %v176 = vsel %vm175, 1, 0
    %v177 = vcvt.s32.f32 %v176
    %v178 = vmul.f32 %v149, %v177
    %v179 = vmul.f32 %v154, %v177
    %v180 = vmul.f32 %v159, %v177
    %v181 = vmul.f32 %v164, %v177
    %v182 = vlaneseq
    %v183 = vshrl.u32 %v182, 7
    %v184 = vsub.s32 0, %v183
    %v185 = vrot.slane %v38, %v184
    %v187 = vsel %vm69, %v169, 0
    %v190 = vsel %vm69, %v170, 0
    %v193 = vsel %vm69, %v171, 0
    %v196 = vsel %vm69, %v172, 0
    %198 = vmatprep.subr.mxu0 0.0
    %199 = vmatpush1.msra.mxu0 %v41
    %200 = vmatprep.subr.mxu0 0.0
    %201 = vmatpush1.msra.mxu0 %v42
    %202 = vmatprep.subr.mxu0 0.0
    %203 = vmatpush1.msra.mxu0 %v43
    %204 = vmatprep.subr.mxu0 0.0
    %205 = vmatpush1.msra.mxu0 %v44
    %206 = vmatprep.subr.mxu0 0.0
    %207 = vmatpush1.msra.mxu0 0.0
    %208 = vmatprep.subr.mxu0 0.0
    %209 = vmatpush1.msra.mxu0 0.0
    %210 = vmatprep.subr.mxu0 0.0
    %211 = vmatpush1.msra.mxu0 0.0
    %212 = vmatprep.subr.mxu0 0.0
    %213 = vmatpush1.msra.mxu0 0.0
    %214 = vmatprep.subr.mxu0 0.0
    %215 = vmatpush1.msra.mxu0 0.0
    %216 = vmatprep.subr.mxu0 0.0
    %217 = vmatpush1.msra.mxu0 0.0
    %218 = vmatprep.subr.mxu0 0.0
    %219 = vmatpush1.msra.mxu0 0.0
    %220 = vmatprep.subr.mxu0 0.0
    %221 = vmatpush1.msra.mxu0 0.0
    %222 = vmatprep.subr.mxu0 0.0
    %223 = vmatpush1.msra.mxu0 0.0
    %224 = vmatprep.subr.mxu0 0.0
    %225 = vmatpush1.msra.mxu0 0.0
    %226 = vmatprep.subr.mxu0 0.0
    %227 = vmatpush1.msra.mxu0 0.0
    %228 = vmatprep.subr.mxu0 0.0
    %229 = vmatpush1.msra.mxu0 0.0
    %230 = vmatprep.subr.mxu0 0.0
    %231 = vmatpush1.msra.mxu0 0.0
    %232 = vmatprep.subr.mxu0 0.0
    %233 = vmatpush1.msra.mxu0 0.0
    %234 = vmatprep.subr.mxu0 0.0
    %235 = vmatpush1.msra.mxu0 0.0
    %236 = vmatprep.subr.mxu0 0.0
    %237 = vmatpush1.msra.mxu0 0.0
    %238 = vmatprep.subr.mxu0 0.0
    %239 = vmatpush1.msra.mxu0 0.0
    %240 = vmatprep.subr.mxu0 0.0
    %241 = vmatpush1.msra.mxu0 0.0
    %242 = vmatprep.subr.mxu0 0.0
    %243 = vmatpush1.msra.mxu0 0.0
    %244 = vmatprep.subr.mxu0 0.0
    %245 = vmatpush1.msra.mxu0 0.0
    %246 = vmatprep.subr.mxu0 0.0
    %247 = vmatpush1.msra.mxu0 0.0
    %248 = vmatprep.subr.mxu0 0.0
    %249 = vmatpush1.msra.mxu0 0.0
    %250 = vmatprep.subr.mxu0 0.0
    %251 = vmatpush1.msra.mxu0 0.0
    %252 = vmatprep.subr.mxu0 0.0
    %253 = vmatpush1.msra.mxu0 0.0
    %254 = vmatprep.subr.mxu0 0.0
    %255 = vmatpush1.msra.mxu0 0.0
    %256 = vmatprep.subr.mxu0 0.0
    %257 = vmatpush1.msra.mxu0 0.0
    %258 = vmatprep.subr.mxu0 0.0
    %259 = vmatpush1.msra.mxu0 0.0
    %260 = vmatprep.subr.mxu0 0.0
    %261 = vmatpush1.msra.mxu0 0.0
    %262 = vmatprep.mubr.f32.mxu0 0.0
    %263 = vmatmul.mubr.f32.gmra.mrb[0].mxu0 %v187
    %v264 = vpop.f32.mrb[0].mxu0
    %v265 = vadd.f32 %v185, %v264
    %v266 = vpop.f32.mrb[0].mxu0
    %267 = vmatprep.mubr.f32.mxu0 0.0
    %268 = vmatmul.mubr.f32.gmra.mrb[0].mxu0 %v190
    %v269 = vpop.f32.mrb[0].mxu0
    %v270 = vadd.f32 %v185, %v269
    %v271 = vpop.f32.mrb[0].mxu0
    %272 = vmatprep.mubr.f32.mxu0 0.0
    %273 = vmatmul.mubr.f32.gmra.mrb[0].mxu0 %v193
    %v274 = vpop.f32.mrb[0].mxu0
    %v275 = vadd.f32 %v185, %v274
    %v276 = vpop.f32.mrb[0].mxu0
    %277 = vmatprep.mubr.f32.mxu0 0.0
    %278 = vmatmul.mubr.f32.gmra.mrb[0].mxu0 %v196
    %v279 = vpop.f32.mrb[0].mxu0
    %v280 = vadd.f32 %v185, %v279
    %v281 = vpop.f32.mrb[0].mxu0
    %282 = vdwg.mxu0
    %vm283 = vcmp.ge.s32.totalorder %v168, 8
    %vm284 = vcmp.lt.s32.totalorder %v168, 16
    %vm285 = vmand %vm283, %vm284
    %v286 = vsel %vm285, 1, 0
    %v287 = vcvt.s32.f32 %v286
    %v288 = vmul.f32 %v149, %v287
    %v289 = vmul.f32 %v154, %v287
    %v290 = vmul.f32 %v159, %v287
    %v291 = vmul.f32 %v164, %v287
    %v292 = vlaneseq
    %v293 = vshrl.u32 %v292, 7
    %v294 = vsub.s32 1, %v293
    %v295 = vrot.slane %v38, %v294
    %296 = vmatprep.subr.mxu0 0.0
    %297 = vmatpush1.msra.mxu0 %v45
    %298 = vmatprep.subr.mxu0 0.0
    %299 = vmatpush1.msra.mxu0 %v46
    %300 = vmatprep.subr.mxu0 0.0
    %301 = vmatpush1.msra.mxu0 %v47
    %302 = vmatprep.subr.mxu0 0.0
    %303 = vmatpush1.msra.mxu0 %v48
    %304 = vmatprep.subr.mxu0 0.0
    %305 = vmatpush1.msra.mxu0 0.0
    %306 = vmatprep.subr.mxu0 0.0
    %307 = vmatpush1.msra.mxu0 0.0
    %308 = vmatprep.subr.mxu0 0.0
    %309 = vmatpush1.msra.mxu0 0.0
    %310 = vmatprep.subr.mxu0 0.0
    %311 = vmatpush1.msra.mxu0 0.0
    %312 = vmatprep.subr.mxu0 0.0
    %313 = vmatpush1.msra.mxu0 0.0
    %314 = vmatprep.subr.mxu0 0.0
    %315 = vmatpush1.msra.mxu0 0.0
    %316 = vmatprep.subr.mxu0 0.0
    %317 = vmatpush1.msra.mxu0 0.0
    %318 = vmatprep.subr.mxu0 0.0
    %319 = vmatpush1.msra.mxu0 0.0
    %320 = vmatprep.subr.mxu0 0.0
    %321 = vmatpush1.msra.mxu0 0.0
    %322 = vmatprep.subr.mxu0 0.0
    %323 = vmatpush1.msra.mxu0 0.0
    %324 = vmatprep.subr.mxu0 0.0
    %325 = vmatpush1.msra.mxu0 0.0
    %326 = vmatprep.subr.mxu0 0.0
    %327 = vmatpush1.msra.mxu0 0.0
    %328 = vmatprep.subr.mxu0 0.0
    %329 = vmatpush1.msra.mxu0 0.0
    %330 = vmatprep.subr.mxu0 0.0
    %331 = vmatpush1.msra.mxu0 0.0
    %332 = vmatprep.subr.mxu0 0.0
    %333 = vmatpush1.msra.mxu0 0.0
    %334 = vmatprep.subr.mxu0 0.0
    %335 = vmatpush1.msra.mxu0 0.0
    %336 = vmatprep.subr.mxu0 0.0
    %337 = vmatpush1.msra.mxu0 0.0
    %338 = vmatprep.subr.mxu0 0.0
    %339 = vmatpush1.msra.mxu0 0.0
    %340 = vmatprep.subr.mxu0 0.0
    %341 = vmatpush1.msra.mxu0 0.0
    %342 = vmatprep.subr.mxu0 0.0
    %343 = vmatpush1.msra.mxu0 0.0
    %344 = vmatprep.subr.mxu0 0.0
    %345 = vmatpush1.msra.mxu0 0.0
    %346 = vmatprep.subr.mxu0 0.0
    %347 = vmatpush1.msra.mxu0 0.0
    %348 = vmatprep.subr.mxu0 0.0
    %349 = vmatpush1.msra.mxu0 0.0
    %350 = vmatprep.subr.mxu0 0.0
    %351 = vmatpush1.msra.mxu0 0.0
    %352 = vmatprep.subr.mxu0 0.0
    %353 = vmatpush1.msra.mxu0 0.0
    %354 = vmatprep.subr.mxu0 0.0
    %355 = vmatpush1.msra.mxu0 0.0
    %356 = vmatprep.subr.mxu0 0.0
    %357 = vmatpush1.msra.mxu0 0.0
    %358 = vmatprep.subr.mxu0 0.0
    %359 = vmatpush1.msra.mxu0 0.0
    %360 = vmatprep.mubr.f32.mxu0 0.0
    %361 = vmatmul.mubr.f32.gmra.mrb[0].mxu0 %v187
    %v362 = vpop.f32.mrb[0].mxu0
    %v363 = vadd.f32 %v295, %v362
    %v364 = vpop.f32.mrb[0].mxu0
    %365 = vmatprep.mubr.f32.mxu0 0.0
    %366 = vmatmul.mubr.f32.gmra.mrb[0].mxu0 %v190
    %v367 = vpop.f32.mrb[0].mxu0
    %v368 = vadd.f32 %v295, %v367
    %v369 = vpop.f32.mrb[0].mxu0
    %370 = vmatprep.mubr.f32.mxu0 0.0
    %371 = vmatmul.mubr.f32.gmra.mrb[0].mxu0 %v193
    %v372 = vpop.f32.mrb[0].mxu0
    %v373 = vadd.f32 %v295, %v372
    %v374 = vpop.f32.mrb[0].mxu0
    %375 = vmatprep.mubr.f32.mxu0 0.0
    %376 = vmatmul.mubr.f32.gmra.mrb[0].mxu0 %v196
    %v377 = vpop.f32.mrb[0].mxu0
    %v378 = vadd.f32 %v295, %v377
    %v379 = vpop.f32.mrb[0].mxu0
    %380 = vdwg.mxu0
    %vm381 = vcmp.ge.s32.totalorder %v168, 16
    %vm382 = vcmp.lt.s32.totalorder %v168, 24
    %vm383 = vmand %vm381, %vm382
    %v384 = vsel %vm383, 1, 0
    %v385 = vcvt.s32.f32 %v384
    %v386 = vmul.f32 %v149, %v385
    %v387 = vmul.f32 %v154, %v385
    %v388 = vmul.f32 %v159, %v385
    %v389 = vmul.f32 %v164, %v385
    %v390 = vlaneseq
    %v391 = vshrl.u32 %v390, 7
    %v392 = vsub.s32 2, %v391
    %v393 = vrot.slane %v38, %v392
    %394 = vmatprep.subr.mxu0 0.0
    %395 = vmatpush1.msra.mxu0 %v49
    %396 = vmatprep.subr.mxu0 0.0
    %397 = vmatpush1.msra.mxu0 %v50
    %398 = vmatprep.subr.mxu0 0.0
    %399 = vmatpush1.msra.mxu0 %v51
    %400 = vmatprep.subr.mxu0 0.0
    %401 = vmatpush1.msra.mxu0 %v52
    %402 = vmatprep.subr.mxu0 0.0
    %403 = vmatpush1.msra.mxu0 0.0
    %404 = vmatprep.subr.mxu0 0.0
    %405 = vmatpush1.msra.mxu0 0.0
    %406 = vmatprep.subr.mxu0 0.0
    %407 = vmatpush1.msra.mxu0 0.0
    %408 = vmatprep.subr.mxu0 0.0
    %409 = vmatpush1.msra.mxu0 0.0
    %410 = vmatprep.subr.mxu0 0.0
    %411 = vmatpush1.msra.mxu0 0.0
    %412 = vmatprep.subr.mxu0 0.0
    %413 = vmatpush1.msra.mxu0 0.0
    %414 = vmatprep.subr.mxu0 0.0
    %415 = vmatpush1.msra.mxu0 0.0
    %416 = vmatprep.subr.mxu0 0.0
    %417 = vmatpush1.msra.mxu0 0.0
    %418 = vmatprep.subr.mxu0 0.0
    %419 = vmatpush1.msra.mxu0 0.0
    %420 = vmatprep.subr.mxu0 0.0
    %421 = vmatpush1.msra.mxu0 0.0
    %422 = vmatprep.subr.mxu0 0.0
    %423 = vmatpush1.msra.mxu0 0.0
    %424 = vmatprep.subr.mxu0 0.0
    %425 = vmatpush1.msra.mxu0 0.0
    %426 = vmatprep.subr.mxu0 0.0
    %427 = vmatpush1.msra.mxu0 0.0
    %428 = vmatprep.subr.mxu0 0.0
    %429 = vmatpush1.msra.mxu0 0.0
    %430 = vmatprep.subr.mxu0 0.0
    %431 = vmatpush1.msra.mxu0 0.0
    %432 = vmatprep.subr.mxu0 0.0
    %433 = vmatpush1.msra.mxu0 0.0
    %434 = vmatprep.subr.mxu0 0.0
    %435 = vmatpush1.msra.mxu0 0.0
    %436 = vmatprep.subr.mxu0 0.0
    %437 = vmatpush1.msra.mxu0 0.0
    %438 = vmatprep.subr.mxu0 0.0
    %439 = vmatpush1.msra.mxu0 0.0
    %440 = vmatprep.subr.mxu0 0.0
    %441 = vmatpush1.msra.mxu0 0.0
    %442 = vmatprep.subr.mxu0 0.0
    %443 = vmatpush1.msra.mxu0 0.0
    %444 = vmatprep.subr.mxu0 0.0
    %445 = vmatpush1.msra.mxu0 0.0
    %446 = vmatprep.subr.mxu0 0.0
    %447 = vmatpush1.msra.mxu0 0.0
    %448 = vmatprep.subr.mxu0 0.0
    %449 = vmatpush1.msra.mxu0 0.0
    %450 = vmatprep.subr.mxu0 0.0
    %451 = vmatpush1.msra.mxu0 0.0
    %452 = vmatprep.subr.mxu0 0.0
    %453 = vmatpush1.msra.mxu0 0.0
    %454 = vmatprep.subr.mxu0 0.0
    %455 = vmatpush1.msra.mxu0 0.0
    %456 = vmatprep.subr.mxu0 0.0
    %457 = vmatpush1.msra.mxu0 0.0
    %458 = vmatprep.mubr.f32.mxu0 0.0
    %459 = vmatmul.mubr.f32.gmra.mrb[0].mxu0 %v187
    %v460 = vpop.f32.mrb[0].mxu0
    %v461 = vadd.f32 %v393, %v460
    %v462 = vpop.f32.mrb[0].mxu0
    %463 = vmatprep.mubr.f32.mxu0 0.0
    %464 = vmatmul.mubr.f32.gmra.mrb[0].mxu0 %v190
    %v465 = vpop.f32.mrb[0].mxu0
    %v466 = vadd.f32 %v393, %v465
    %v467 = vpop.f32.mrb[0].mxu0
    %468 = vmatprep.mubr.f32.mxu0 0.0
    %469 = vmatmul.mubr.f32.gmra.mrb[0].mxu0 %v193
    %v470 = vpop.f32.mrb[0].mxu0
    %v471 = vadd.f32 %v393, %v470
    %v472 = vpop.f32.mrb[0].mxu0
    %473 = vmatprep.mubr.f32.mxu0 0.0
    %474 = vmatmul.mubr.f32.gmra.mrb[0].mxu0 %v196
    %v475 = vpop.f32.mrb[0].mxu0
    %v476 = vadd.f32 %v393, %v475
    %v477 = vpop.f32.mrb[0].mxu0
    %478 = vdwg.mxu0
    %vm479 = vcmp.ge.s32.totalorder %v168, 24
    %vm480 = vcmp.lt.s32.totalorder %v168, 32
    %vm481 = vmand %vm479, %vm480
    %v482 = vsel %vm481, 1, 0
    %v483 = vcvt.s32.f32 %v482
    %v484 = vmul.f32 %v149, %v483
    %v485 = vmul.f32 %v154, %v483
    %v486 = vmul.f32 %v159, %v483
    %v487 = vmul.f32 %v164, %v483
    %v488 = vlaneseq
    %v489 = vshrl.u32 %v488, 7
    %v490 = vsub.s32 3, %v489
    %v491 = vrot.slane %v38, %v490
    %492 = vmatprep.subr.mxu0 0.0
    %493 = vmatpush1.msra.mxu0 %v53
    %494 = vmatprep.subr.mxu0 0.0
    %495 = vmatpush1.msra.mxu0 %v54
    %496 = vmatprep.subr.mxu0 0.0
    %497 = vmatpush1.msra.mxu0 %v55
    %498 = vmatprep.subr.mxu0 0.0
    %499 = vmatpush1.msra.mxu0 %v56
    %500 = vmatprep.subr.mxu0 0.0
    %501 = vmatpush1.msra.mxu0 0.0
    %502 = vmatprep.subr.mxu0 0.0
    %503 = vmatpush1.msra.mxu0 0.0
    %504 = vmatprep.subr.mxu0 0.0
    %505 = vmatpush1.msra.mxu0 0.0
    %506 = vmatprep.subr.mxu0 0.0
    %507 = vmatpush1.msra.mxu0 0.0
    %508 = vmatprep.subr.mxu0 0.0
    %509 = vmatpush1.msra.mxu0 0.0
    %510 = vmatprep.subr.mxu0 0.0
    %511 = vmatpush1.msra.mxu0 0.0
    %512 = vmatprep.subr.mxu0 0.0
    %513 = vmatpush1.msra.mxu0 0.0
    %514 = vmatprep.subr.mxu0 0.0
    %515 = vmatpush1.msra.mxu0 0.0
    %516 = vmatprep.subr.mxu0 0.0
    %517 = vmatpush1.msra.mxu0 0.0
    %518 = vmatprep.subr.mxu0 0.0
    %519 = vmatpush1.msra.mxu0 0.0
    %520 = vmatprep.subr.mxu0 0.0
    %521 = vmatpush1.msra.mxu0 0.0
    %522 = vmatprep.subr.mxu0 0.0
    %523 = vmatpush1.msra.mxu0 0.0
    %524 = vmatprep.subr.mxu0 0.0
    %525 = vmatpush1.msra.mxu0 0.0
    %526 = vmatprep.subr.mxu0 0.0
    %527 = vmatpush1.msra.mxu0 0.0
    %528 = vmatprep.subr.mxu0 0.0
    %529 = vmatpush1.msra.mxu0 0.0
    %530 = vmatprep.subr.mxu0 0.0
    %531 = vmatpush1.msra.mxu0 0.0
    %532 = vmatprep.subr.mxu0 0.0
    %533 = vmatpush1.msra.mxu0 0.0
    %534 = vmatprep.subr.mxu0 0.0
    %535 = vmatpush1.msra.mxu0 0.0
    %536 = vmatprep.subr.mxu0 0.0
    %537 = vmatpush1.msra.mxu0 0.0
    %538 = vmatprep.subr.mxu0 0.0
    %539 = vmatpush1.msra.mxu0 0.0
    %540 = vmatprep.subr.mxu0 0.0
    %541 = vmatpush1.msra.mxu0 0.0
    %542 = vmatprep.subr.mxu0 0.0
    %543 = vmatpush1.msra.mxu0 0.0
    %544 = vmatprep.subr.mxu0 0.0
    %545 = vmatpush1.msra.mxu0 0.0
    %546 = vmatprep.subr.mxu0 0.0
    %547 = vmatpush1.msra.mxu0 0.0
    %548 = vmatprep.subr.mxu0 0.0
    %549 = vmatpush1.msra.mxu0 0.0
    %550 = vmatprep.subr.mxu0 0.0
    %551 = vmatpush1.msra.mxu0 0.0
    %552 = vmatprep.subr.mxu0 0.0
    %553 = vmatpush1.msra.mxu0 0.0
    %554 = vmatprep.subr.mxu0 0.0
    %555 = vmatpush1.msra.mxu0 0.0
    %556 = vmatprep.mubr.f32.mxu0 0.0
    %557 = vmatmul.mubr.f32.gmra.mrb[0].mxu0 %v187
    %v558 = vpop.f32.mrb[0].mxu0
    %v559 = vadd.f32 %v491, %v558
    %v560 = vpop.f32.mrb[0].mxu0
    %561 = vmatprep.mubr.f32.mxu0 0.0
    %562 = vmatmul.mubr.f32.gmra.mrb[0].mxu0 %v190
    %v563 = vpop.f32.mrb[0].mxu0
    %v564 = vadd.f32 %v491, %v563
    %v565 = vpop.f32.mrb[0].mxu0
    %566 = vmatprep.mubr.f32.mxu0 0.0
    %567 = vmatmul.mubr.f32.gmra.mrb[0].mxu0 %v193
    %v568 = vpop.f32.mrb[0].mxu0
    %v569 = vadd.f32 %v491, %v568
    %v570 = vpop.f32.mrb[0].mxu0
    %571 = vmatprep.mubr.f32.mxu0 0.0
    %572 = vmatmul.mubr.f32.gmra.mrb[0].mxu0 %v196
    %v573 = vpop.f32.mrb[0].mxu0
    %v574 = vadd.f32 %v491, %v573
    %v575 = vpop.f32.mrb[0].mxu0
    %576 = vdwg.mxu0
    %v577 = vld [vmem:[%s0] sm:$0xff]
    %v578 = vld [vmem:[%s0 + $0x8] sm:$0xff]
    %v579 = vld [vmem:[%s0 + $0x10] sm:$0xff]
    %v580 = vld [vmem:[%s0 + $0x18] sm:$0xff]
    %v581 = vld [vmem:[%s3] sm:$0xff]
    %v582 = vld [vmem:[%s3 + $0x8] sm:$0xff]
    %v583 = vld [vmem:[%s3 + $0x10] sm:$0xff]
    %v584 = vld [vmem:[%s3 + $0x18] sm:$0xff]
    %v585 = vlaneseq
    %v586 = vshrl.u32 %v585, 7
    %v587 = vsub.s32 0, %v586
    %v588 = vrot.slane %v37, %v587
    %v590 = vsel %vm69, %v577, 0
    %v593 = vsel %vm69, %v578, 0
    %v596 = vsel %vm69, %v579, 0
    %v599 = vsel %vm69, %v580, 0
    %601 = vmatprep.subr.mxu0 0.0
    %602 = vmatpush1.msra.mxu0 %v581
    %603 = vmatprep.subr.mxu0 0.0
    %604 = vmatpush1.msra.mxu0 %v582
    %605 = vmatprep.subr.mxu0 0.0
    %606 = vmatpush1.msra.mxu0 %v583
    %607 = vmatprep.subr.mxu0 0.0
    %608 = vmatpush1.msra.mxu0 %v584
    %609 = vmatprep.subr.mxu0 0.0
    %610 = vmatpush1.msra.mxu0 0.0
    %611 = vmatprep.subr.mxu0 0.0
    %612 = vmatpush1.msra.mxu0 0.0
    %613 = vmatprep.subr.mxu0 0.0
    %614 = vmatpush1.msra.mxu0 0.0
    %615 = vmatprep.subr.mxu0 0.0
    %616 = vmatpush1.msra.mxu0 0.0
    %617 = vmatprep.subr.mxu0 0.0
    %618 = vmatpush1.msra.mxu0 0.0
    %619 = vmatprep.subr.mxu0 0.0
    %620 = vmatpush1.msra.mxu0 0.0
    %621 = vmatprep.subr.mxu0 0.0
    %622 = vmatpush1.msra.mxu0 0.0
    %623 = vmatprep.subr.mxu0 0.0
    %624 = vmatpush1.msra.mxu0 0.0
    %625 = vmatprep.subr.mxu0 0.0
    %626 = vmatpush1.msra.mxu0 0.0
    %627 = vmatprep.subr.mxu0 0.0
    %628 = vmatpush1.msra.mxu0 0.0
    %629 = vmatprep.subr.mxu0 0.0
    %630 = vmatpush1.msra.mxu0 0.0
    %631 = vmatprep.subr.mxu0 0.0
    %632 = vmatpush1.msra.mxu0 0.0
    %633 = vmatprep.subr.mxu0 0.0
    %634 = vmatpush1.msra.mxu0 0.0
    %635 = vmatprep.subr.mxu0 0.0
    %636 = vmatpush1.msra.mxu0 0.0
    %637 = vmatprep.subr.mxu0 0.0
    %638 = vmatpush1.msra.mxu0 0.0
    %639 = vmatprep.subr.mxu0 0.0
    %640 = vmatpush1.msra.mxu0 0.0
    %641 = vmatprep.subr.mxu0 0.0
    %642 = vmatpush1.msra.mxu0 0.0
    %643 = vmatprep.subr.mxu0 0.0
    %644 = vmatpush1.msra.mxu0 0.0
    %645 = vmatprep.subr.mxu0 0.0
    %646 = vmatpush1.msra.mxu0 0.0
    %647 = vmatprep.subr.mxu0 0.0
    %648 = vmatpush1.msra.mxu0 0.0
    %649 = vmatprep.subr.mxu0 0.0
    %650 = vmatpush1.msra.mxu0 0.0
    %651 = vmatprep.subr.mxu0 0.0
    %652 = vmatpush1.msra.mxu0 0.0
    %653 = vmatprep.subr.mxu0 0.0
    %654 = vmatpush1.msra.mxu0 0.0
    %655 = vmatprep.subr.mxu0 0.0
    %656 = vmatpush1.msra.mxu0 0.0
    %657 = vmatprep.subr.mxu0 0.0
    %658 = vmatpush1.msra.mxu0 0.0
    %659 = vmatprep.subr.mxu0 0.0
    %660 = vmatpush1.msra.mxu0 0.0
    %661 = vmatprep.subr.mxu0 0.0
    %662 = vmatpush1.msra.mxu0 0.0
    %663 = vmatprep.subr.mxu0 0.0
    %664 = vmatpush1.msra.mxu0 0.0
    %665 = vmatprep.mubr.f32.mxu0 0.0
    %666 = vmatmul.mubr.f32.gmra.mrb[0].mxu0 %v590
    %v667 = vpop.f32.mrb[0].mxu0
    %v668 = vadd.f32 %v588, %v667
    %v669 = vpop.f32.mrb[0].mxu0
    %670 = vmatprep.mubr.f32.mxu0 0.0
    %671 = vmatmul.mubr.f32.gmra.mrb[0].mxu0 %v593
    %v672 = vpop.f32.mrb[0].mxu0
    %v673 = vadd.f32 %v588, %v672
    %v674 = vpop.f32.mrb[0].mxu0
    %675 = vmatprep.mubr.f32.mxu0 0.0
    %676 = vmatmul.mubr.f32.gmra.mrb[0].mxu0 %v596
    %v677 = vpop.f32.mrb[0].mxu0
    %v678 = vadd.f32 %v588, %v677
    %v679 = vpop.f32.mrb[0].mxu0
    %680 = vmatprep.mubr.f32.mxu0 0.0
    %681 = vmatmul.mubr.f32.gmra.mrb[0].mxu0 %v599
    %v682 = vpop.f32.mrb[0].mxu0
    %v683 = vadd.f32 %v588, %v682
    %v684 = vpop.f32.mrb[0].mxu0
    %685 = vdwg.mxu0
    %v687 = vsel %vm69, %v668, 0
    %v690 = vsel %vm69, %v673, 0
    %v693 = vsel %vm69, %v178, 0
    %v696 = vsel %vm69, %v179, 0
    %698 = vmatprep.subr.mxu0 0.0
    %699 = vmatpush1.xpose.msra.mxu0 %v693
    %700 = vmatprep.subr.mxu0 0.0
    %701 = vmatpush1.xpose.msra.mxu0 %v696
    %702 = vmatprep.subr.mxu0 0.0
    %703 = vmatpush1.xpose.msra.mxu0 0.0
    %704 = vmatprep.subr.mxu0 0.0
    %705 = vmatpush1.xpose.msra.mxu0 0.0
    %706 = vmatprep.subr.mxu0 0.0
    %707 = vmatpush1.xpose.msra.mxu0 0.0
    %708 = vmatprep.subr.mxu0 0.0
    %709 = vmatpush1.xpose.msra.mxu0 0.0
    %710 = vmatprep.subr.mxu0 0.0
    %711 = vmatpush1.xpose.msra.mxu0 0.0
    %712 = vmatprep.subr.mxu0 0.0
    %713 = vmatpush1.xpose.msra.mxu0 0.0
    %714 = vmatprep.subr.mxu0 0.0
    %715 = vmatpush1.xpose.msra.mxu0 0.0
    %716 = vmatprep.subr.mxu0 0.0
    %717 = vmatpush1.xpose.msra.mxu0 0.0
    %718 = vmatprep.subr.mxu0 0.0
    %719 = vmatpush1.xpose.msra.mxu0 0.0
    %720 = vmatprep.subr.mxu0 0.0
    %721 = vmatpush1.xpose.msra.mxu0 0.0
    %722 = vmatprep.subr.mxu0 0.0
    %723 = vmatpush1.xpose.msra.mxu0 0.0
    %724 = vmatprep.subr.mxu0 0.0
    %725 = vmatpush1.xpose.msra.mxu0 0.0
    %726 = vmatprep.subr.mxu0 0.0
    %727 = vmatpush1.xpose.msra.mxu0 0.0
    %728 = vmatprep.subr.mxu0 0.0
    %729 = vmatpush1.xpose.msra.mxu0 0.0
    %730 = vmatprep.subr.mxu0 0.0
    %731 = vmatpush1.xpose.msra.mxu0 0.0
    %732 = vmatprep.subr.mxu0 0.0
    %733 = vmatpush1.xpose.msra.mxu0 0.0
    %734 = vmatprep.subr.mxu0 0.0
    %735 = vmatpush1.xpose.msra.mxu0 0.0
    %736 = vmatprep.subr.mxu0 0.0
    %737 = vmatpush1.xpose.msra.mxu0 0.0
    %738 = vmatprep.subr.mxu0 0.0
    %739 = vmatpush1.xpose.msra.mxu0 0.0
    %740 = vmatprep.subr.mxu0 0.0
    %741 = vmatpush1.xpose.msra.mxu0 0.0
    %742 = vmatprep.subr.mxu0 0.0
    %743 = vmatpush1.xpose.msra.mxu0 0.0
    %744 = vmatprep.subr.mxu0 0.0
    %745 = vmatpush1.xpose.msra.mxu0 0.0
    %746 = vmatprep.subr.mxu0 0.0
    %747 = vmatpush1.xpose.msra.mxu0 0.0
    %748 = vmatprep.subr.mxu0 0.0
    %749 = vmatpush1.xpose.msra.mxu0 0.0
    %750 = vmatprep.subr.mxu0 0.0
    %751 = vmatpush1.xpose.msra.mxu0 0.0
    %752 = vmatprep.subr.mxu0 0.0
    %753 = vmatpush1.xpose.msra.mxu0 0.0
    %754 = vmatprep.subr.mxu0 0.0
    %755 = vmatpush1.xpose.msra.mxu0 0.0
    %756 = vmatprep.subr.mxu0 0.0
    %757 = vmatpush1.xpose.msra.mxu0 0.0
    %758 = vmatprep.subr.mxu0 0.0
    %759 = vmatpush1.xpose.msra.mxu0 0.0
    %760 = vmatprep.subr.mxu0 0.0
    %761 = vmatpush1.xpose.msra.mxu0 0.0
    %762 = vmatprep.mubr.f32.mxu0 0.0
    %763 = vmatmul.mubr.f32.gmra.mrb[0].mxu0 %v687
    %v764 = vpop.f32.mrb[0].mxu0
    %v765 = vadd.f32 0.0, %v764
    %v766 = vpop.f32.mrb[0].mxu0
    %767 = vmatprep.mubr.f32.mxu0 0.0
    %768 = vmatmul.mubr.f32.gmra.mrb[0].mxu0 %v690
    %v769 = vpop.f32.mrb[0].mxu0
    %v770 = vadd.f32 0.0, %v769
    %v771 = vpop.f32.mrb[0].mxu0
    %772 = vdwg.mxu0
    %v774 = vsel %vm69, %v678, 0
    %v777 = vsel %vm69, %v683, 0
    %v780 = vsel %vm69, %v180, 0
    %v783 = vsel %vm69, %v181, 0
    %785 = vmatprep.subr.mxu0 0.0
    %786 = vmatpush1.xpose.msra.mxu0 %v780
    %787 = vmatprep.subr.mxu0 0.0
    %788 = vmatpush1.xpose.msra.mxu0 %v783
    %789 = vmatprep.subr.mxu0 0.0
    %790 = vmatpush1.xpose.msra.mxu0 0.0
    %791 = vmatprep.subr.mxu0 0.0
    %792 = vmatpush1.xpose.msra.mxu0 0.0
    %793 = vmatprep.subr.mxu0 0.0
    %794 = vmatpush1.xpose.msra.mxu0 0.0
    %795 = vmatprep.subr.mxu0 0.0
    %796 = vmatpush1.xpose.msra.mxu0 0.0
    %797 = vmatprep.subr.mxu0 0.0
    %798 = vmatpush1.xpose.msra.mxu0 0.0
    %799 = vmatprep.subr.mxu0 0.0
    %800 = vmatpush1.xpose.msra.mxu0 0.0
    %801 = vmatprep.subr.mxu0 0.0
    %802 = vmatpush1.xpose.msra.mxu0 0.0
    %803 = vmatprep.subr.mxu0 0.0
    %804 = vmatpush1.xpose.msra.mxu0 0.0
    %805 = vmatprep.subr.mxu0 0.0
    %806 = vmatpush1.xpose.msra.mxu0 0.0
    %807 = vmatprep.subr.mxu0 0.0
    %808 = vmatpush1.xpose.msra.mxu0 0.0
    %809 = vmatprep.subr.mxu0 0.0
    %810 = vmatpush1.xpose.msra.mxu0 0.0
    %811 = vmatprep.subr.mxu0 0.0
    %812 = vmatpush1.xpose.msra.mxu0 0.0
    %813 = vmatprep.subr.mxu0 0.0
    %814 = vmatpush1.xpose.msra.mxu0 0.0
    %815 = vmatprep.subr.mxu0 0.0
    %816 = vmatpush1.xpose.msra.mxu0 0.0
    %817 = vmatprep.subr.mxu0 0.0
    %818 = vmatpush1.xpose.msra.mxu0 0.0
    %819 = vmatprep.subr.mxu0 0.0
    %820 = vmatpush1.xpose.msra.mxu0 0.0
    %821 = vmatprep.subr.mxu0 0.0
    %822 = vmatpush1.xpose.msra.mxu0 0.0
    %823 = vmatprep.subr.mxu0 0.0
    %824 = vmatpush1.xpose.msra.mxu0 0.0
    %825 = vmatprep.subr.mxu0 0.0
    %826 = vmatpush1.xpose.msra.mxu0 0.0
    %827 = vmatprep.subr.mxu0 0.0
    %828 = vmatpush1.xpose.msra.mxu0 0.0
    %829 = vmatprep.subr.mxu0 0.0
    %830 = vmatpush1.xpose.msra.mxu0 0.0
    %831 = vmatprep.subr.mxu0 0.0
    %832 = vmatpush1.xpose.msra.mxu0 0.0
    %833 = vmatprep.subr.mxu0 0.0
    %834 = vmatpush1.xpose.msra.mxu0 0.0
    %835 = vmatprep.subr.mxu0 0.0
    %836 = vmatpush1.xpose.msra.mxu0 0.0
    %837 = vmatprep.subr.mxu0 0.0
    %838 = vmatpush1.xpose.msra.mxu0 0.0
    %839 = vmatprep.subr.mxu0 0.0
    %840 = vmatpush1.xpose.msra.mxu0 0.0
    %841 = vmatprep.subr.mxu0 0.0
    %842 = vmatpush1.xpose.msra.mxu0 0.0
    %843 = vmatprep.subr.mxu0 0.0
    %844 = vmatpush1.xpose.msra.mxu0 0.0
    %845 = vmatprep.subr.mxu0 0.0
    %846 = vmatpush1.xpose.msra.mxu0 0.0
    %847 = vmatprep.subr.mxu0 0.0
    %848 = vmatpush1.xpose.msra.mxu0 0.0
    %849 = vmatprep.mubr.f32.mxu0 0.0
    %850 = vmatmul.mubr.f32.gmra.mrb[0].mxu0 %v774
    %v851 = vpop.f32.mrb[0].mxu0
    %v852 = vadd.f32 0.0, %v851
    %v853 = vpop.f32.mrb[0].mxu0
    %854 = vmatprep.mubr.f32.mxu0 0.0
    %855 = vmatmul.mubr.f32.gmra.mrb[0].mxu0 %v777
    %v856 = vpop.f32.mrb[0].mxu0
    %v857 = vadd.f32 0.0, %v856
    %v858 = vpop.f32.mrb[0].mxu0
    %859 = vdwg.mxu0
    %vm860 = vcmask 130048
    %v861 = vsel %vm860, %v765, -inf
    %862 = vmax.xlane.f32.xlu0 %v861
    %v863 = vpop.xlane.xlu0 %862
    %v864 = vsel %vm860, %v770, -inf
    %865 = vmax.xlane.f32.xlu0 %v864
    %v866 = vpop.xlane.xlu0 %865
    %v867 = vsel %vm860, %v852, -inf
    %868 = vmax.xlane.f32.xlu0 %v867
    %v869 = vpop.xlane.xlu0 %868
    %v870 = vsel %vm860, %v857, -inf
    %871 = vmax.xlane.f32.xlu0 %v870
    %v872 = vpop.xlane.xlu0 %871
    %v873 = vsub.f32 %v765, %v863
    %v874 = vsub.f32 %v770, %v866
    %v875 = vsub.f32 %v852, %v869
    %v876 = vsub.f32 %v857, %v872
    %v877 = vmul.f32 %v873, 1.442695
    %v878 = vpow.pop %v877
    %v879 = vmul.f32 %v874, 1.442695
    %v880 = vpow.pop %v879
    %v881 = vmul.f32 %v875, 1.442695
    %v882 = vpow.pop %v881
    %v883 = vmul.f32 %v876, 1.442695
    %v884 = vpow.pop %v883
    %v885 = vsel %vm860, %v878, 0.0
    %886 = vadd.xlane.f32.xlu0 %v885
    %v887 = vpop.xlane.xlu0 %886
    %v888 = vsel %vm860, %v880, 0.0
    %889 = vadd.xlane.f32.xlu0 %v888
    %v890 = vpop.xlane.xlu0 %889
    %v891 = vsel %vm860, %v882, 0.0
    %892 = vadd.xlane.f32.xlu0 %v891
    %v893 = vpop.xlane.xlu0 %892
    %v894 = vsel %vm860, %v884, 0.0
    %895 = vadd.xlane.f32.xlu0 %v894
    %v896 = vpop.xlane.xlu0 %895
    %v897 = vrcp.pop %v887
    %v898 = vrcp.pop %v890
    %v899 = vrcp.pop %v893
    %v900 = vrcp.pop %v896
    %v901 = vmul.f32 %v878, %v897
    %v902 = vmul.f32 %v880, %v898
    %v903 = vmul.f32 %v882, %v899
    %v904 = vmul.f32 %v884, %v900
    %v906 = vsel %vm69, %v288, 0
    %v909 = vsel %vm69, %v289, 0
    %911 = vmatprep.subr.mxu0 0.0
    %912 = vmatpush1.xpose.msra.mxu0 %v906
    %913 = vmatprep.subr.mxu0 0.0
    %914 = vmatpush1.xpose.msra.mxu0 %v909
    %915 = vmatprep.subr.mxu0 0.0
    %916 = vmatpush1.xpose.msra.mxu0 0.0
    %917 = vmatprep.subr.mxu0 0.0
    %918 = vmatpush1.xpose.msra.mxu0 0.0
    %919 = vmatprep.subr.mxu0 0.0
    %920 = vmatpush1.xpose.msra.mxu0 0.0
    %921 = vmatprep.subr.mxu0 0.0
    %922 = vmatpush1.xpose.msra.mxu0 0.0
    %923 = vmatprep.subr.mxu0 0.0
    %924 = vmatpush1.xpose.msra.mxu0 0.0
    %925 = vmatprep.subr.mxu0 0.0
    %926 = vmatpush1.xpose.msra.mxu0 0.0
    %927 = vmatprep.subr.mxu0 0.0
    %928 = vmatpush1.xpose.msra.mxu0 0.0
    %929 = vmatprep.subr.mxu0 0.0
    %930 = vmatpush1.xpose.msra.mxu0 0.0
    %931 = vmatprep.subr.mxu0 0.0
    %932 = vmatpush1.xpose.msra.mxu0 0.0
    %933 = vmatprep.subr.mxu0 0.0
    %934 = vmatpush1.xpose.msra.mxu0 0.0
    %935 = vmatprep.subr.mxu0 0.0
    %936 = vmatpush1.xpose.msra.mxu0 0.0
    %937 = vmatprep.subr.mxu0 0.0
    %938 = vmatpush1.xpose.msra.mxu0 0.0
    %939 = vmatprep.subr.mxu0 0.0
    %940 = vmatpush1.xpose.msra.mxu0 0.0
    %941 = vmatprep.subr.mxu0 0.0
    %942 = vmatpush1.xpose.msra.mxu0 0.0
    %943 = vmatprep.subr.mxu0 0.0
    %944 = vmatpush1.xpose.msra.mxu0 0.0
    %945 = vmatprep.subr.mxu0 0.0
    %946 = vmatpush1.xpose.msra.mxu0 0.0
    %947 = vmatprep.subr.mxu0 0.0
    %948 = vmatpush1.xpose.msra.mxu0 0.0
    %949 = vmatprep.subr.mxu0 0.0
    %950 = vmatpush1.xpose.msra.mxu0 0.0
    %951 = vmatprep.subr.mxu0 0.0
    %952 = vmatpush1.xpose.msra.mxu0 0.0
    %953 = vmatprep.subr.mxu0 0.0
    %954 = vmatpush1.xpose.msra.mxu0 0.0
    %955 = vmatprep.subr.mxu0 0.0
    %956 = vmatpush1.xpose.msra.mxu0 0.0
    %957 = vmatprep.subr.mxu0 0.0
    %958 = vmatpush1.xpose.msra.mxu0 0.0
    %959 = vmatprep.subr.mxu0 0.0
    %960 = vmatpush1.xpose.msra.mxu0 0.0
    %961 = vmatprep.subr.mxu0 0.0
    %962 = vmatpush1.xpose.msra.mxu0 0.0
    %963 = vmatprep.subr.mxu0 0.0
    %964 = vmatpush1.xpose.msra.mxu0 0.0
    %965 = vmatprep.subr.mxu0 0.0
    %966 = vmatpush1.xpose.msra.mxu0 0.0
    %967 = vmatprep.subr.mxu0 0.0
    %968 = vmatpush1.xpose.msra.mxu0 0.0
    %969 = vmatprep.subr.mxu0 0.0
    %970 = vmatpush1.xpose.msra.mxu0 0.0
    %971 = vmatprep.subr.mxu0 0.0
    %972 = vmatpush1.xpose.msra.mxu0 0.0
    %973 = vmatprep.subr.mxu0 0.0
    %974 = vmatpush1.xpose.msra.mxu0 0.0
    %975 = vmatprep.mubr.f32.mxu0 0.0
    %976 = vmatmul.mubr.f32.gmra.mrb[0].mxu0 %v687
    %v977 = vpop.f32.mrb[0].mxu0
    %v978 = vadd.f32 0.0, %v977
    %v979 = vpop.f32.mrb[0].mxu0
    %980 = vmatprep.mubr.f32.mxu0 0.0
    %981 = vmatmul.mubr.f32.gmra.mrb[0].mxu0 %v690
    %v982 = vpop.f32.mrb[0].mxu0
    %v983 = vadd.f32 0.0, %v982
    %v984 = vpop.f32.mrb[0].mxu0
    %985 = vdwg.mxu0
    %v987 = vsel %vm69, %v290, 0
    %v990 = vsel %vm69, %v291, 0
    %992 = vmatprep.subr.mxu0 0.0
    %993 = vmatpush1.xpose.msra.mxu0 %v987
    %994 = vmatprep.subr.mxu0 0.0
    %995 = vmatpush1.xpose.msra.mxu0 %v990
    %996 = vmatprep.subr.mxu0 0.0
    %997 = vmatpush1.xpose.msra.mxu0 0.0
    %998 = vmatprep.subr.mxu0 0.0
    %999 = vmatpush1.xpose.msra.mxu0 0.0
    %1000 = vmatprep.subr.mxu0 0.0
    %1001 = vmatpush1.xpose.msra.mxu0 0.0
    %1002 = vmatprep.subr.mxu0 0.0
    %1003 = vmatpush1.xpose.msra.mxu0 0.0
    %1004 = vmatprep.subr.mxu0 0.0
    %1005 = vmatpush1.xpose.msra.mxu0 0.0
    %1006 = vmatprep.subr.mxu0 0.0
    %1007 = vmatpush1.xpose.msra.mxu0 0.0
    %1008 = vmatprep.subr.mxu0 0.0
    %1009 = vmatpush1.xpose.msra.mxu0 0.0
    %1010 = vmatprep.subr.mxu0 0.0
    %1011 = vmatpush1.xpose.msra.mxu0 0.0
    %1012 = vmatprep.subr.mxu0 0.0
    %1013 = vmatpush1.xpose.msra.mxu0 0.0
    %1014 = vmatprep.subr.mxu0 0.0
    %1015 = vmatpush1.xpose.msra.mxu0 0.0
    %1016 = vmatprep.subr.mxu0 0.0
    %1017 = vmatpush1.xpose.msra.mxu0 0.0
    %1018 = vmatprep.subr.mxu0 0.0
    %1019 = vmatpush1.xpose.msra.mxu0 0.0
    %1020 = vmatprep.subr.mxu0 0.0
    %1021 = vmatpush1.xpose.msra.mxu0 0.0
    %1022 = vmatprep.subr.mxu0 0.0
    %1023 = vmatpush1.xpose.msra.mxu0 0.0
    %1024 = vmatprep.subr.mxu0 0.0
    %1025 = vmatpush1.xpose.msra.mxu0 0.0
    %1026 = vmatprep.subr.mxu0 0.0
    %1027 = vmatpush1.xpose.msra.mxu0 0.0
    %1028 = vmatprep.subr.mxu0 0.0
    %1029 = vmatpush1.xpose.msra.mxu0 0.0
    %1030 = vmatprep.subr.mxu0 0.0
    %1031 = vmatpush1.xpose.msra.mxu0 0.0
    %1032 = vmatprep.subr.mxu0 0.0
    %1033 = vmatpush1.xpose.msra.mxu0 0.0
    %1034 = vmatprep.subr.mxu0 0.0
    %1035 = vmatpush1.xpose.msra.mxu0 0.0
    %1036 = vmatprep.subr.mxu0 0.0
    %1037 = vmatpush1.xpose.msra.mxu0 0.0
    %1038 = vmatprep.subr.mxu0 0.0
    %1039 = vmatpush1.xpose.msra.mxu0 0.0
    %1040 = vmatprep.subr.mxu0 0.0
    %1041 = vmatpush1.xpose.msra.mxu0 0.0
    %1042 = vmatprep.subr.mxu0 0.0
    %1043 = vmatpush1.xpose.msra.mxu0 0.0
    %1044 = vmatprep.subr.mxu0 0.0
    %1045 = vmatpush1.xpose.msra.mxu0 0.0
    %1046 = vmatprep.subr.mxu0 0.0
    %1047 = vmatpush1.xpose.msra.mxu0 0.0
    %1048 = vmatprep.subr.mxu0 0.0
    %1049 = vmatpush1.xpose.msra.mxu0 0.0
    %1050 = vmatprep.subr.mxu0 0.0
    %1051 = vmatpush1.xpose.msra.mxu0 0.0
    %1052 = vmatprep.subr.mxu0 0.0
    %1053 = vmatpush1.xpose.msra.mxu0 0.0
    %1054 = vmatprep.subr.mxu0 0.0
    %1055 = vmatpush1.xpose.msra.mxu0 0.0
    %1056 = vmatprep.mubr.f32.mxu0 0.0
    %1057 = vmatmul.mubr.f32.gmra.mrb[0].mxu0 %v774
    %v1058 = vpop.f32.mrb[0].mxu0
    %v1059 = vadd.f32 0.0, %v1058
    %v1060 = vpop.f32.mrb[0].mxu0
    %1061 = vmatprep.mubr.f32.mxu0 0.0
    %1062 = vmatmul.mubr.f32.gmra.mrb[0].mxu0 %v777
    %v1063 = vpop.f32.mrb[0].mxu0
    %v1064 = vadd.f32 0.0, %v1063
    %v1065 = vpop.f32.mrb[0].mxu0
    %1066 = vdwg.mxu0
    %v1067 = vsel %vm860, %v978, -inf
    %1068 = vmax.xlane.f32.xlu0 %v1067
    %v1069 = vpop.xlane.xlu0 %1068
    %v1070 = vsel %vm860, %v983, -inf
    %1071 = vmax.xlane.f32.xlu0 %v1070
    %v1072 = vpop.xlane.xlu0 %1071
    %v1073 = vsel %vm860, %v1059, -inf
    %1074 = vmax.xlane.f32.xlu0 %v1073
    %v1075 = vpop.xlane.xlu0 %1074
    %v1076 = vsel %vm860, %v1064, -inf
    %1077 = vmax.xlane.f32.xlu0 %v1076
    %v1078 = vpop.xlane.xlu0 %1077
    %v1079 = vsub.f32 %v978, %v1069
    %v1080 = vsub.f32 %v983, %v1072
    %v1081 = vsub.f32 %v1059, %v1075
    %v1082 = vsub.f32 %v1064, %v1078
    %v1083 = vmul.f32 %v1079, 1.442695
    %v1084 = vpow.pop %v1083
    %v1085 = vmul.f32 %v1080, 1.442695
    %v1086 = vpow.pop %v1085
    %v1087 = vmul.f32 %v1081, 1.442695
    %v1088 = vpow.pop %v1087
    %v1089 = vmul.f32 %v1082, 1.442695
    %v1090 = vpow.pop %v1089
    %v1091 = vsel %vm860, %v1084, 0.0
    %1092 = vadd.xlane.f32.xlu0 %v1091
    %v1093 = vpop.xlane.xlu0 %1092
    %v1094 = vsel %vm860, %v1086, 0.0
    %1095 = vadd.xlane.f32.xlu0 %v1094
    %v1096 = vpop.xlane.xlu0 %1095
    %v1097 = vsel %vm860, %v1088, 0.0
    %1098 = vadd.xlane.f32.xlu0 %v1097
    %v1099 = vpop.xlane.xlu0 %1098
    %v1100 = vsel %vm860, %v1090, 0.0
    %1101 = vadd.xlane.f32.xlu0 %v1100
    %v1102 = vpop.xlane.xlu0 %1101
    %v1103 = vrcp.pop %v1093
    %v1104 = vrcp.pop %v1096
    %v1105 = vrcp.pop %v1099
    %v1106 = vrcp.pop %v1102
    %v1107 = vmul.f32 %v1084, %v1103
    %v1108 = vmul.f32 %v1086, %v1104
    %v1109 = vmul.f32 %v1088, %v1105
    %v1110 = vmul.f32 %v1090, %v1106
    %v1112 = vsel %vm860, %v1107, 0
    %v1115 = vsel %vm860, %v1108, 0
    %1117 = vmatprep.subr.mxu0 0.0
    %1118 = vmatpush1.msra.mxu0 %v363
    %1119 = vmatprep.subr.mxu0 0.0
    %1120 = vmatpush1.msra.mxu0 %v368
    %1121 = vmatprep.subr.mxu0 0.0
    %1122 = vmatpush1.msra.mxu0 0.0
    %1123 = vmatprep.subr.mxu0 0.0
    %1124 = vmatpush1.msra.mxu0 0.0
    %1125 = vmatprep.subr.mxu0 0.0
    %1126 = vmatpush1.msra.mxu0 0.0
    %1127 = vmatprep.subr.mxu0 0.0
    %1128 = vmatpush1.msra.mxu0 0.0
    %1129 = vmatprep.subr.mxu0 0.0
    %1130 = vmatpush1.msra.mxu0 0.0
    %1131 = vmatprep.subr.mxu0 0.0
    %1132 = vmatpush1.msra.mxu0 0.0
    %1133 = vmatprep.subr.mxu0 0.0
    %1134 = vmatpush1.msra.mxu0 0.0
    %1135 = vmatprep.subr.mxu0 0.0
    %1136 = vmatpush1.msra.mxu0 0.0
    %1137 = vmatprep.subr.mxu0 0.0
    %1138 = vmatpush1.msra.mxu0 0.0
    %1139 = vmatprep.subr.mxu0 0.0
    %1140 = vmatpush1.msra.mxu0 0.0
    %1141 = vmatprep.subr.mxu0 0.0
    %1142 = vmatpush1.msra.mxu0 0.0
    %1143 = vmatprep.subr.mxu0 0.0
    %1144 = vmatpush1.msra.mxu0 0.0
    %1145 = vmatprep.subr.mxu0 0.0
    %1146 = vmatpush1.msra.mxu0 0.0
    %1147 = vmatprep.subr.mxu0 0.0
    %1148 = vmatpush1.msra.mxu0 0.0
    %1149 = vmatprep.subr.mxu0 0.0
    %1150 = vmatpush1.msra.mxu0 0.0
    %1151 = vmatprep.subr.mxu0 0.0
    %1152 = vmatpush1.msra.mxu0 0.0
    %1153 = vmatprep.subr.mxu0 0.0
    %1154 = vmatpush1.msra.mxu0 0.0
    %1155 = vmatprep.subr.mxu0 0.0
    %1156 = vmatpush1.msra.mxu0 0.0
    %1157 = vmatprep.subr.mxu0 0.0
    %1158 = vmatpush1.msra.mxu0 0.0
    %1159 = vmatprep.subr.mxu0 0.0
    %1160 = vmatpush1.msra.mxu0 0.0
    %1161 = vmatprep.subr.mxu0 0.0
    %1162 = vmatpush1.msra.mxu0 0.0
    %1163 = vmatprep.subr.mxu0 0.0
    %1164 = vmatpush1.msra.mxu0 0.0
    %1165 = vmatprep.subr.mxu0 0.0
    %1166 = vmatpush1.msra.mxu0 0.0
    %1167 = vmatprep.subr.mxu0 0.0
    %1168 = vmatpush1.msra.mxu0 0.0
    %1169 = vmatprep.subr.mxu0 0.0
    %1170 = vmatpush1.msra.mxu0 0.0
    %1171 = vmatprep.subr.mxu0 0.0
    %1172 = vmatpush1.msra.mxu0 0.0
    %1173 = vmatprep.subr.mxu0 0.0
    %1174 = vmatpush1.msra.mxu0 0.0
    %1175 = vmatprep.subr.mxu0 0.0
    %1176 = vmatpush1.msra.mxu0 0.0
    %1177 = vmatprep.subr.mxu0 0.0
    %1178 = vmatpush1.msra.mxu0 0.0
    %1179 = vmatprep.subr.mxu0 0.0
    %1180 = vmatpush1.msra.mxu0 0.0
    %1181 = vmatprep.mubr.f32.mxu0 0.0
    %1182 = vmatmul.mubr.f32.gmra.mrb[0].mxu0 %v1112
    %v1183 = vpop.f32.mrb[0].mxu0
    %v1184 = vadd.f32 0.0, %v1183
    %v1185 = vpop.f32.mrb[0].mxu0
    %1186 = vmatprep.mubr.f32.mxu0 0.0
    %1187 = vmatmul.mubr.f32.gmra.mrb[0].mxu0 %v1115
    %v1188 = vpop.f32.mrb[0].mxu0
    %v1189 = vadd.f32 0.0, %v1188
    %v1190 = vpop.f32.mrb[0].mxu0
    %1191 = vdwg.mxu0
    %v1193 = vsel %vm860, %v1109, 0
    %v1196 = vsel %vm860, %v1110, 0
    %1198 = vmatprep.subr.mxu0 0.0
    %1199 = vmatpush1.msra.mxu0 %v373
    %1200 = vmatprep.subr.mxu0 0.0
    %1201 = vmatpush1.msra.mxu0 %v378
    %1202 = vmatprep.subr.mxu0 0.0
    %1203 = vmatpush1.msra.mxu0 0.0
    %1204 = vmatprep.subr.mxu0 0.0
    %1205 = vmatpush1.msra.mxu0 0.0
    %1206 = vmatprep.subr.mxu0 0.0
    %1207 = vmatpush1.msra.mxu0 0.0
    %1208 = vmatprep.subr.mxu0 0.0
    %1209 = vmatpush1.msra.mxu0 0.0
    %1210 = vmatprep.subr.mxu0 0.0
    %1211 = vmatpush1.msra.mxu0 0.0
    %1212 = vmatprep.subr.mxu0 0.0
    %1213 = vmatpush1.msra.mxu0 0.0
    %1214 = vmatprep.subr.mxu0 0.0
    %1215 = vmatpush1.msra.mxu0 0.0
    %1216 = vmatprep.subr.mxu0 0.0
    %1217 = vmatpush1.msra.mxu0 0.0
    %1218 = vmatprep.subr.mxu0 0.0
    %1219 = vmatpush1.msra.mxu0 0.0
    %1220 = vmatprep.subr.mxu0 0.0
    %1221 = vmatpush1.msra.mxu0 0.0
    %1222 = vmatprep.subr.mxu0 0.0
    %1223 = vmatpush1.msra.mxu0 0.0
    %1224 = vmatprep.subr.mxu0 0.0
    %1225 = vmatpush1.msra.mxu0 0.0
    %1226 = vmatprep.subr.mxu0 0.0
    %1227 = vmatpush1.msra.mxu0 0.0
    %1228 = vmatprep.subr.mxu0 0.0
    %1229 = vmatpush1.msra.mxu0 0.0
    %1230 = vmatprep.subr.mxu0 0.0
    %1231 = vmatpush1.msra.mxu0 0.0
    %1232 = vmatprep.subr.mxu0 0.0
    %1233 = vmatpush1.msra.mxu0 0.0
    %1234 = vmatprep.subr.mxu0 0.0
    %1235 = vmatpush1.msra.mxu0 0.0
    %1236 = vmatprep.subr.mxu0 0.0
    %1237 = vmatpush1.msra.mxu0 0.0
    %1238 = vmatprep.subr.mxu0 0.0
    %1239 = vmatpush1.msra.mxu0 0.0
    %1240 = vmatprep.subr.mxu0 0.0
    %1241 = vmatpush1.msra.mxu0 0.0
    %1242 = vmatprep.subr.mxu0 0.0
    %1243 = vmatpush1.msra.mxu0 0.0
    %1244 = vmatprep.subr.mxu0 0.0
    %1245 = vmatpush1.msra.mxu0 0.0
    %1246 = vmatprep.subr.mxu0 0.0
    %1247 = vmatpush1.msra.mxu0 0.0
    %1248 = vmatprep.subr.mxu0 0.0
    %1249 = vmatpush1.msra.mxu0 0.0
    %1250 = vmatprep.subr.mxu0 0.0
    %1251 = vmatpush1.msra.mxu0 0.0
    %1252 = vmatprep.subr.mxu0 0.0
    %1253 = vmatpush1.msra.mxu0 0.0
    %1254 = vmatprep.subr.mxu0 0.0
    %1255 = vmatpush1.msra.mxu0 0.0
    %1256 = vmatprep.subr.mxu0 0.0
    %1257 = vmatpush1.msra.mxu0 0.0
    %1258 = vmatprep.subr.mxu0 0.0
    %1259 = vmatpush1.msra.mxu0 0.0
    %1260 = vmatprep.subr.mxu0 0.0
    %1261 = vmatpush1.msra.mxu0 0.0
    %1262 = vmatprep.mubr.f32.mxu0 0.0
    %1263 = vmatmul.mubr.f32.gmra.mrb[0].mxu0 %v1193
    %v1264 = vpop.f32.mrb[0].mxu0
    %v1265 = vadd.f32 0.0, %v1264
    %v1266 = vpop.f32.mrb[0].mxu0
    %1267 = vmatprep.mubr.f32.mxu0 0.0
    %1268 = vmatmul.mubr.f32.gmra.mrb[0].mxu0 %v1196
    %v1269 = vpop.f32.mrb[0].mxu0
    %v1270 = vadd.f32 0.0, %v1269
    %v1271 = vpop.f32.mrb[0].mxu0
    %1272 = vdwg.mxu0
    %v1274 = vsel %vm860, %v901, 0
    %v1277 = vsel %vm860, %v902, 0
    %1279 = vmatprep.subr.mxu0 0.0
    %1280 = vmatpush1.msra.mxu0 %v265
    %1281 = vmatprep.subr.mxu0 0.0
    %1282 = vmatpush1.msra.mxu0 %v270
    %1283 = vmatprep.subr.mxu0 0.0
    %1284 = vmatpush1.msra.mxu0 0.0
    %1285 = vmatprep.subr.mxu0 0.0
    %1286 = vmatpush1.msra.mxu0 0.0
    %1287 = vmatprep.subr.mxu0 0.0
    %1288 = vmatpush1.msra.mxu0 0.0
    %1289 = vmatprep.subr.mxu0 0.0
    %1290 = vmatpush1.msra.mxu0 0.0
    %1291 = vmatprep.subr.mxu0 0.0
    %1292 = vmatpush1.msra.mxu0 0.0
    %1293 = vmatprep.subr.mxu0 0.0
    %1294 = vmatpush1.msra.mxu0 0.0
    %1295 = vmatprep.subr.mxu0 0.0
    %1296 = vmatpush1.msra.mxu0 0.0
    %1297 = vmatprep.subr.mxu0 0.0
    %1298 = vmatpush1.msra.mxu0 0.0
    %1299 = vmatprep.subr.mxu0 0.0
    %1300 = vmatpush1.msra.mxu0 0.0
    %1301 = vmatprep.subr.mxu0 0.0
    %1302 = vmatpush1.msra.mxu0 0.0
    %1303 = vmatprep.subr.mxu0 0.0
    %1304 = vmatpush1.msra.mxu0 0.0
    %1305 = vmatprep.subr.mxu0 0.0
    %1306 = vmatpush1.msra.mxu0 0.0
    %1307 = vmatprep.subr.mxu0 0.0
    %1308 = vmatpush1.msra.mxu0 0.0
    %1309 = vmatprep.subr.mxu0 0.0
    %1310 = vmatpush1.msra.mxu0 0.0
    %1311 = vmatprep.subr.mxu0 0.0
    %1312 = vmatpush1.msra.mxu0 0.0
    %1313 = vmatprep.subr.mxu0 0.0
    %1314 = vmatpush1.msra.mxu0 0.0
    %1315 = vmatprep.subr.mxu0 0.0
    %1316 = vmatpush1.msra.mxu0 0.0
    %1317 = vmatprep.subr.mxu0 0.0
    %1318 = vmatpush1.msra.mxu0 0.0
    %1319 = vmatprep.subr.mxu0 0.0
    %1320 = vmatpush1.msra.mxu0 0.0
    %1321 = vmatprep.subr.mxu0 0.0
    %1322 = vmatpush1.msra.mxu0 0.0
    %1323 = vmatprep.subr.mxu0 0.0
    %1324 = vmatpush1.msra.mxu0 0.0
    %1325 = vmatprep.subr.mxu0 0.0
    %1326 = vmatpush1.msra.mxu0 0.0
    %1327 = vmatprep.subr.mxu0 0.0
    %1328 = vmatpush1.msra.mxu0 0.0
    %1329 = vmatprep.subr.mxu0 0.0
    %1330 = vmatpush1.msra.mxu0 0.0
    %1331 = vmatprep.subr.mxu0 0.0
    %1332 = vmatpush1.msra.mxu0 0.0
    %1333 = vmatprep.subr.mxu0 0.0
    %1334 = vmatpush1.msra.mxu0 0.0
    %1335 = vmatprep.subr.mxu0 0.0
    %1336 = vmatpush1.msra.mxu0 0.0
    %1337 = vmatprep.subr.mxu0 0.0
    %1338 = vmatpush1.msra.mxu0 0.0
    %1339 = vmatprep.subr.mxu0 0.0
    %1340 = vmatpush1.msra.mxu0 0.0
    %1341 = vmatprep.subr.mxu0 0.0
    %1342 = vmatpush1.msra.mxu0 0.0
    %1343 = vmatprep.mubr.f32.mxu0 0.0
    %1344 = vmatmul.mubr.f32.gmra.mrb[0].mxu0 %v1274
    %v1345 = vpop.f32.mrb[0].mxu0
    %v1346 = vadd.f32 %v1184, %v1345
    %v1347 = vpop.f32.mrb[0].mxu0
    %1348 = vmatprep.mubr.f32.mxu0 0.0
    %1349 = vmatmul.mubr.f32.gmra.mrb[0].mxu0 %v1277
    %v1350 = vpop.f32.mrb[0].mxu0
    %v1351 = vadd.f32 %v1189, %v1350
    %v1352 = vpop.f32.mrb[0].mxu0
    %1353 = vdwg.mxu0
    %v1355 = vsel %vm860, %v903, 0
    %v1358 = vsel %vm860, %v904, 0
    %1360 = vmatprep.subr.mxu0 0.0
    %1361 = vmatpush1.msra.mxu0 %v275
    %1362 = vmatprep.subr.mxu0 0.0
    %1363 = vmatpush1.msra.mxu0 %v280
    %1364 = vmatprep.subr.mxu0 0.0
    %1365 = vmatpush1.msra.mxu0 0.0
    %1366 = vmatprep.subr.mxu0 0.0
    %1367 = vmatpush1.msra.mxu0 0.0
    %1368 = vmatprep.subr.mxu0 0.0
    %1369 = vmatpush1.msra.mxu0 0.0
    %1370 = vmatprep.subr.mxu0 0.0
    %1371 = vmatpush1.msra.mxu0 0.0
    %1372 = vmatprep.subr.mxu0 0.0
    %1373 = vmatpush1.msra.mxu0 0.0
    %1374 = vmatprep.subr.mxu0 0.0
    %1375 = vmatpush1.msra.mxu0 0.0
    %1376 = vmatprep.subr.mxu0 0.0
    %1377 = vmatpush1.msra.mxu0 0.0
    %1378 = vmatprep.subr.mxu0 0.0
    %1379 = vmatpush1.msra.mxu0 0.0
    %1380 = vmatprep.subr.mxu0 0.0
    %1381 = vmatpush1.msra.mxu0 0.0
    %1382 = vmatprep.subr.mxu0 0.0
    %1383 = vmatpush1.msra.mxu0 0.0
    %1384 = vmatprep.subr.mxu0 0.0
    %1385 = vmatpush1.msra.mxu0 0.0
    %1386 = vmatprep.subr.mxu0 0.0
    %1387 = vmatpush1.msra.mxu0 0.0
    %1388 = vmatprep.subr.mxu0 0.0
    %1389 = vmatpush1.msra.mxu0 0.0
    %1390 = vmatprep.subr.mxu0 0.0
    %1391 = vmatpush1.msra.mxu0 0.0
    %1392 = vmatprep.subr.mxu0 0.0
    %1393 = vmatpush1.msra.mxu0 0.0
    %1394 = vmatprep.subr.mxu0 0.0
    %1395 = vmatpush1.msra.mxu0 0.0
    %1396 = vmatprep.subr.mxu0 0.0
    %1397 = vmatpush1.msra.mxu0 0.0
    %1398 = vmatprep.subr.mxu0 0.0
    %1399 = vmatpush1.msra.mxu0 0.0
    %1400 = vmatprep.subr.mxu0 0.0
    %1401 = vmatpush1.msra.mxu0 0.0
    %1402 = vmatprep.subr.mxu0 0.0
    %1403 = vmatpush1.msra.mxu0 0.0
    %1404 = vmatprep.subr.mxu0 0.0
    %1405 = vmatpush1.msra.mxu0 0.0
    %1406 = vmatprep.subr.mxu0 0.0
    %1407 = vmatpush1.msra.mxu0 0.0
    %1408 = vmatprep.subr.mxu0 0.0
    %1409 = vmatpush1.msra.mxu0 0.0
    %1410 = vmatprep.subr.mxu0 0.0
    %1411 = vmatpush1.msra.mxu0 0.0
    %1412 = vmatprep.subr.mxu0 0.0
    %1413 = vmatpush1.msra.mxu0 0.0
    %1414 = vmatprep.subr.mxu0 0.0
    %1415 = vmatpush1.msra.mxu0 0.0
    %1416 = vmatprep.subr.mxu0 0.0
    %1417 = vmatpush1.msra.mxu0 0.0
    %1418 = vmatprep.subr.mxu0 0.0
    %1419 = vmatpush1.msra.mxu0 0.0
    %1420 = vmatprep.subr.mxu0 0.0
    %1421 = vmatpush1.msra.mxu0 0.0
    %1422 = vmatprep.subr.mxu0 0.0
    %1423 = vmatpush1.msra.mxu0 0.0
    %1424 = vmatprep.mubr.f32.mxu0 0.0
    %1425 = vmatmul.mubr.f32.gmra.mrb[0].mxu0 %v1355
    %v1426 = vpop.f32.mrb[0].mxu0
    %v1427 = vadd.f32 %v1265, %v1426
    %v1428 = vpop.f32.mrb[0].mxu0
    %1429 = vmatprep.mubr.f32.mxu0 0.0
    %1430 = vmatmul.mubr.f32.gmra.mrb[0].mxu0 %v1358
    %v1431 = vpop.f32.mrb[0].mxu0
    %v1432 = vadd.f32 %v1270, %v1431
    %v1433 = vpop.f32.mrb[0].mxu0
    %1434 = vdwg.mxu0
    %v1436 = vsel %vm69, %v386, 0
    %v1439 = vsel %vm69, %v387, 0
    %1441 = vmatprep.subr.mxu0 0.0
    %1442 = vmatpush1.xpose.msra.mxu0 %v1436
    %1443 = vmatprep.subr.mxu0 0.0
    %1444 = vmatpush1.xpose.msra.mxu0 %v1439
    %1445 = vmatprep.subr.mxu0 0.0
    %1446 = vmatpush1.xpose.msra.mxu0 0.0
    %1447 = vmatprep.subr.mxu0 0.0
    %1448 = vmatpush1.xpose.msra.mxu0 0.0
    %1449 = vmatprep.subr.mxu0 0.0
    %1450 = vmatpush1.xpose.msra.mxu0 0.0
    %1451 = vmatprep.subr.mxu0 0.0
    %1452 = vmatpush1.xpose.msra.mxu0 0.0
    %1453 = vmatprep.subr.mxu0 0.0
    %1454 = vmatpush1.xpose.msra.mxu0 0.0
    %1455 = vmatprep.subr.mxu0 0.0
    %1456 = vmatpush1.xpose.msra.mxu0 0.0
    %1457 = vmatprep.subr.mxu0 0.0
    %1458 = vmatpush1.xpose.msra.mxu0 0.0
    %1459 = vmatprep.subr.mxu0 0.0
    %1460 = vmatpush1.xpose.msra.mxu0 0.0
    %1461 = vmatprep.subr.mxu0 0.0
    %1462 = vmatpush1.xpose.msra.mxu0 0.0
    %1463 = vmatprep.subr.mxu0 0.0
    %1464 = vmatpush1.xpose.msra.mxu0 0.0
    %1465 = vmatprep.subr.mxu0 0.0
    %1466 = vmatpush1.xpose.msra.mxu0 0.0
    %1467 = vmatprep.subr.mxu0 0.0
    %1468 = vmatpush1.xpose.msra.mxu0 0.0
    %1469 = vmatprep.subr.mxu0 0.0
    %1470 = vmatpush1.xpose.msra.mxu0 0.0
    %1471 = vmatprep.subr.mxu0 0.0
    %1472 = vmatpush1.xpose.msra.mxu0 0.0
    %1473 = vmatprep.subr.mxu0 0.0
    %1474 = vmatpush1.xpose.msra.mxu0 0.0
    %1475 = vmatprep.subr.mxu0 0.0
    %1476 = vmatpush1.xpose.msra.mxu0 0.0
    %1477 = vmatprep.subr.mxu0 0.0
    %1478 = vmatpush1.xpose.msra.mxu0 0.0
    %1479 = vmatprep.subr.mxu0 0.0
    %1480 = vmatpush1.xpose.msra.mxu0 0.0
    %1481 = vmatprep.subr.mxu0 0.0
    %1482 = vmatpush1.xpose.msra.mxu0 0.0
    %1483 = vmatprep.subr.mxu0 0.0
    %1484 = vmatpush1.xpose.msra.mxu0 0.0
    %1485 = vmatprep.subr.mxu0 0.0
    %1486 = vmatpush1.xpose.msra.mxu0 0.0
    %1487 = vmatprep.subr.mxu0 0.0
    %1488 = vmatpush1.xpose.msra.mxu0 0.0
    %1489 = vmatprep.subr.mxu0 0.0
    %1490 = vmatpush1.xpose.msra.mxu0 0.0
    %1491 = vmatprep.subr.mxu0 0.0
    %1492 = vmatpush1.xpose.msra.mxu0 0.0
    %1493 = vmatprep.subr.mxu0 0.0
    %1494 = vmatpush1.xpose.msra.mxu0 0.0
    %1495 = vmatprep.subr.mxu0 0.0
    %1496 = vmatpush1.xpose.msra.mxu0 0.0
    %1497 = vmatprep.subr.mxu0 0.0
    %1498 = vmatpush1.xpose.msra.mxu0 0.0
    %1499 = vmatprep.subr.mxu0 0.0
    %1500 = vmatpush1.xpose.msra.mxu0 0.0
    %1501 = vmatprep.subr.mxu0 0.0
    %1502 = vmatpush1.xpose.msra.mxu0 0.0
    %1503 = vmatprep.subr.mxu0 0.0
    %1504 = vmatpush1.xpose.msra.mxu0 0.0
    %1505 = vmatprep.mubr.f32.mxu0 0.0
    %1506 = vmatmul.mubr.f32.gmra.mrb[0].mxu0 %v687
    %v1507 = vpop.f32.mrb[0].mxu0
    %v1508 = vadd.f32 0.0, %v1507
    %v1509 = vpop.f32.mrb[0].mxu0
    %1510 = vmatprep.mubr.f32.mxu0 0.0
    %1511 = vmatmul.mubr.f32.gmra.mrb[0].mxu0 %v690
    %v1512 = vpop.f32.mrb[0].mxu0
    %v1513 = vadd.f32 0.0, %v1512
    %v1514 = vpop.f32.mrb[0].mxu0
    %1515 = vdwg.mxu0
    %v1517 = vsel %vm69, %v388, 0
    %v1520 = vsel %vm69, %v389, 0
    %1522 = vmatprep.subr.mxu0 0.0
    %1523 = vmatpush1.xpose.msra.mxu0 %v1517
    %1524 = vmatprep.subr.mxu0 0.0
    %1525 = vmatpush1.xpose.msra.mxu0 %v1520
    %1526 = vmatprep.subr.mxu0 0.0
    %1527 = vmatpush1.xpose.msra.mxu0 0.0
    %1528 = vmatprep.subr.mxu0 0.0
    %1529 = vmatpush1.xpose.msra.mxu0 0.0
    %1530 = vmatprep.subr.mxu0 0.0
    %1531 = vmatpush1.xpose.msra.mxu0 0.0
    %1532 = vmatprep.subr.mxu0 0.0
    %1533 = vmatpush1.xpose.msra.mxu0 0.0
    %1534 = vmatprep.subr.mxu0 0.0
    %1535 = vmatpush1.xpose.msra.mxu0 0.0
    %1536 = vmatprep.subr.mxu0 0.0
    %1537 = vmatpush1.xpose.msra.mxu0 0.0
    %1538 = vmatprep.subr.mxu0 0.0
    %1539 = vmatpush1.xpose.msra.mxu0 0.0
    %1540 = vmatprep.subr.mxu0 0.0
    %1541 = vmatpush1.xpose.msra.mxu0 0.0
    %1542 = vmatprep.subr.mxu0 0.0
    %1543 = vmatpush1.xpose.msra.mxu0 0.0
    %1544 = vmatprep.subr.mxu0 0.0
    %1545 = vmatpush1.xpose.msra.mxu0 0.0
    %1546 = vmatprep.subr.mxu0 0.0
    %1547 = vmatpush1.xpose.msra.mxu0 0.0
    %1548 = vmatprep.subr.mxu0 0.0
    %1549 = vmatpush1.xpose.msra.mxu0 0.0
    %1550 = vmatprep.subr.mxu0 0.0
    %1551 = vmatpush1.xpose.msra.mxu0 0.0
    %1552 = vmatprep.subr.mxu0 0.0
    %1553 = vmatpush1.xpose.msra.mxu0 0.0
    %1554 = vmatprep.subr.mxu0 0.0
    %1555 = vmatpush1.xpose.msra.mxu0 0.0
    %1556 = vmatprep.subr.mxu0 0.0
    %1557 = vmatpush1.xpose.msra.mxu0 0.0
    %1558 = vmatprep.subr.mxu0 0.0
    %1559 = vmatpush1.xpose.msra.mxu0 0.0
    %1560 = vmatprep.subr.mxu0 0.0
    %1561 = vmatpush1.xpose.msra.mxu0 0.0
    %1562 = vmatprep.subr.mxu0 0.0
    %1563 = vmatpush1.xpose.msra.mxu0 0.0
    %1564 = vmatprep.subr.mxu0 0.0
    %1565 = vmatpush1.xpose.msra.mxu0 0.0
    %1566 = vmatprep.subr.mxu0 0.0
    %1567 = vmatpush1.xpose.msra.mxu0 0.0
    %1568 = vmatprep.subr.mxu0 0.0
    %1569 = vmatpush1.xpose.msra.mxu0 0.0
    %1570 = vmatprep.subr.mxu0 0.0
    %1571 = vmatpush1.xpose.msra.mxu0 0.0
    %1572 = vmatprep.subr.mxu0 0.0
    %1573 = vmatpush1.xpose.msra.mxu0 0.0
    %1574 = vmatprep.subr.mxu0 0.0
    %1575 = vmatpush1.xpose.msra.mxu0 0.0
    %1576 = vmatprep.subr.mxu0 0.0
    %1577 = vmatpush1.xpose.msra.mxu0 0.0
    %1578 = vmatprep.subr.mxu0 0.0
    %1579 = vmatpush1.xpose.msra.mxu0 0.0
    %1580 = vmatprep.subr.mxu0 0.0
    %1581 = vmatpush1.xpose.msra.mxu0 0.0
    %1582 = vmatprep.subr.mxu0 0.0
    %1583 = vmatpush1.xpose.msra.mxu0 0.0
    %1584 = vmatprep.subr.mxu0 0.0
    %1585 = vmatpush1.xpose.msra.mxu0 0.0
    %1586 = vmatprep.mubr.f32.mxu0 0.0
    %1587 = vmatmul.mubr.f32.gmra.mrb[0].mxu0 %v774
    %v1588 = vpop.f32.mrb[0].mxu0
    %v1589 = vadd.f32 0.0, %v1588
    %v1590 = vpop.f32.mrb[0].mxu0
    %1591 = vmatprep.mubr.f32.mxu0 0.0
    %1592 = vmatmul.mubr.f32.gmra.mrb[0].mxu0 %v777
    %v1593 = vpop.f32.mrb[0].mxu0
    %v1594 = vadd.f32 0.0, %v1593
    %v1595 = vpop.f32.mrb[0].mxu0
    %1596 = vdwg.mxu0
    %v1597 = vsel %vm860, %v1508, -inf
    %1598 = vmax.xlane.f32.xlu0 %v1597
    %v1599 = vpop.xlane.xlu0 %1598
    %v1600 = vsel %vm860, %v1513, -inf
    %1601 = vmax.xlane.f32.xlu0 %v1600
    %v1602 = vpop.xlane.xlu0 %1601
    %v1603 = vsel %vm860, %v1589, -inf
    %1604 = vmax.xlane.f32.xlu0 %v1603
    %v1605 = vpop.xlane.xlu0 %1604
    %v1606 = vsel %vm860, %v1594, -inf
    %1607 = vmax.xlane.f32.xlu0 %v1606
    %v1608 = vpop.xlane.xlu0 %1607
    %v1609 = vsub.f32 %v1508, %v1599
    %v1610 = vsub.f32 %v1513, %v1602
    %v1611 = vsub.f32 %v1589, %v1605
    %v1612 = vsub.f32 %v1594, %v1608
    %v1613 = vmul.f32 %v1609, 1.442695
    %v1614 = vpow.pop %v1613
    %v1615 = vmul.f32 %v1610, 1.442695
    %v1616 = vpow.pop %v1615
    %v1617 = vmul.f32 %v1611, 1.442695
    %v1618 = vpow.pop %v1617
    %v1619 = vmul.f32 %v1612, 1.442695
    %v1620 = vpow.pop %v1619
    %v1621 = vsel %vm860, %v1614, 0.0
    %1622 = vadd.xlane.f32.xlu0 %v1621
    %v1623 = vpop.xlane.xlu0 %1622
    %v1624 = vsel %vm860, %v1616, 0.0
    %1625 = vadd.xlane.f32.xlu0 %v1624
    %v1626 = vpop.xlane.xlu0 %1625
    %v1627 = vsel %vm860, %v1618, 0.0
    %1628 = vadd.xlane.f32.xlu0 %v1627
    %v1629 = vpop.xlane.xlu0 %1628
    %v1630 = vsel %vm860, %v1620, 0.0
    %1631 = vadd.xlane.f32.xlu0 %v1630
    %v1632 = vpop.xlane.xlu0 %1631
    %v1633 = vrcp.pop %v1623
    %v1634 = vrcp.pop %v1626
    %v1635 = vrcp.pop %v1629
    %v1636 = vrcp.pop %v1632
    %v1637 = vmul.f32 %v1614, %v1633
    %v1638 = vmul.f32 %v1616, %v1634
    %v1639 = vmul.f32 %v1618, %v1635
    %v1640 = vmul.f32 %v1620, %v1636
    %v1642 = vsel %vm860, %v1637, 0
    %v1645 = vsel %vm860, %v1638, 0
    %1647 = vmatprep.subr.mxu0 0.0
    %1648 = vmatpush1.msra.mxu0 %v461
    %1649 = vmatprep.subr.mxu0 0.0
    %1650 = vmatpush1.msra.mxu0 %v466
    %1651 = vmatprep.subr.mxu0 0.0
    %1652 = vmatpush1.msra.mxu0 0.0
    %1653 = vmatprep.subr.mxu0 0.0
    %1654 = vmatpush1.msra.mxu0 0.0
    %1655 = vmatprep.subr.mxu0 0.0
    %1656 = vmatpush1.msra.mxu0 0.0
    %1657 = vmatprep.subr.mxu0 0.0
    %1658 = vmatpush1.msra.mxu0 0.0
    %1659 = vmatprep.subr.mxu0 0.0
    %1660 = vmatpush1.msra.mxu0 0.0
    %1661 = vmatprep.subr.mxu0 0.0
    %1662 = vmatpush1.msra.mxu0 0.0
    %1663 = vmatprep.subr.mxu0 0.0
    %1664 = vmatpush1.msra.mxu0 0.0
    %1665 = vmatprep.subr.mxu0 0.0
    %1666 = vmatpush1.msra.mxu0 0.0
    %1667 = vmatprep.subr.mxu0 0.0
    %1668 = vmatpush1.msra.mxu0 0.0
    %1669 = vmatprep.subr.mxu0 0.0
    %1670 = vmatpush1.msra.mxu0 0.0
    %1671 = vmatprep.subr.mxu0 0.0
    %1672 = vmatpush1.msra.mxu0 0.0
    %1673 = vmatprep.subr.mxu0 0.0
    %1674 = vmatpush1.msra.mxu0 0.0
    %1675 = vmatprep.subr.mxu0 0.0
    %1676 = vmatpush1.msra.mxu0 0.0
    %1677 = vmatprep.subr.mxu0 0.0
    %1678 = vmatpush1.msra.mxu0 0.0
    %1679 = vmatprep.subr.mxu0 0.0
    %1680 = vmatpush1.msra.mxu0 0.0
    %1681 = vmatprep.subr.mxu0 0.0
    %1682 = vmatpush1.msra.mxu0 0.0
    %1683 = vmatprep.subr.mxu0 0.0
    %1684 = vmatpush1.msra.mxu0 0.0
    %1685 = vmatprep.subr.mxu0 0.0
    %1686 = vmatpush1.msra.mxu0 0.0
    %1687 = vmatprep.subr.mxu0 0.0
    %1688 = vmatpush1.msra.mxu0 0.0
    %1689 = vmatprep.subr.mxu0 0.0
    %1690 = vmatpush1.msra.mxu0 0.0
    %1691 = vmatprep.subr.mxu0 0.0
    %1692 = vmatpush1.msra.mxu0 0.0
    %1693 = vmatprep.subr.mxu0 0.0
    %1694 = vmatpush1.msra.mxu0 0.0
    %1695 = vmatprep.subr.mxu0 0.0
    %1696 = vmatpush1.msra.mxu0 0.0
    %1697 = vmatprep.subr.mxu0 0.0
    %1698 = vmatpush1.msra.mxu0 0.0
    %1699 = vmatprep.subr.mxu0 0.0
    %1700 = vmatpush1.msra.mxu0 0.0
    %1701 = vmatprep.subr.mxu0 0.0
    %1702 = vmatpush1.msra.mxu0 0.0
    %1703 = vmatprep.subr.mxu0 0.0
    %1704 = vmatpush1.msra.mxu0 0.0
    %1705 = vmatprep.subr.mxu0 0.0
    %1706 = vmatpush1.msra.mxu0 0.0
    %1707 = vmatprep.subr.mxu0 0.0
    %1708 = vmatpush1.msra.mxu0 0.0
    %1709 = vmatprep.subr.mxu0 0.0
    %1710 = vmatpush1.msra.mxu0 0.0
    %1711 = vmatprep.mubr.f32.mxu0 0.0
    %1712 = vmatmul.mubr.f32.gmra.mrb[0].mxu0 %v1642
    %v1713 = vpop.f32.mrb[0].mxu0
    %v1714 = vadd.f32 0.0, %v1713
    %v1715 = vpop.f32.mrb[0].mxu0
    %1716 = vmatprep.mubr.f32.mxu0 0.0
    %1717 = vmatmul.mubr.f32.gmra.mrb[0].mxu0 %v1645
    %v1718 = vpop.f32.mrb[0].mxu0
    %v1719 = vadd.f32 0.0, %v1718
    %v1720 = vpop.f32.mrb[0].mxu0
    %1721 = vdwg.mxu0
    %v1723 = vsel %vm860, %v1639, 0
    %v1726 = vsel %vm860, %v1640, 0
    %1728 = vmatprep.subr.mxu0 0.0
    %1729 = vmatpush1.msra.mxu0 %v471
    %1730 = vmatprep.subr.mxu0 0.0
    %1731 = vmatpush1.msra.mxu0 %v476
    %1732 = vmatprep.subr.mxu0 0.0
    %1733 = vmatpush1.msra.mxu0 0.0
    %1734 = vmatprep.subr.mxu0 0.0
    %1735 = vmatpush1.msra.mxu0 0.0
    %1736 = vmatprep.subr.mxu0 0.0
    %1737 = vmatpush1.msra.mxu0 0.0
    %1738 = vmatprep.subr.mxu0 0.0
    %1739 = vmatpush1.msra.mxu0 0.0
    %1740 = vmatprep.subr.mxu0 0.0
    %1741 = vmatpush1.msra.mxu0 0.0
    %1742 = vmatprep.subr.mxu0 0.0
    %1743 = vmatpush1.msra.mxu0 0.0
    %1744 = vmatprep.subr.mxu0 0.0
    %1745 = vmatpush1.msra.mxu0 0.0
    %1746 = vmatprep.subr.mxu0 0.0
    %1747 = vmatpush1.msra.mxu0 0.0
    %1748 = vmatprep.subr.mxu0 0.0
    %1749 = vmatpush1.msra.mxu0 0.0
    %1750 = vmatprep.subr.mxu0 0.0
    %1751 = vmatpush1.msra.mxu0 0.0
    %1752 = vmatprep.subr.mxu0 0.0
    %1753 = vmatpush1.msra.mxu0 0.0
    %1754 = vmatprep.subr.mxu0 0.0
    %1755 = vmatpush1.msra.mxu0 0.0
    %1756 = vmatprep.subr.mxu0 0.0
    %1757 = vmatpush1.msra.mxu0 0.0
    %1758 = vmatprep.subr.mxu0 0.0
    %1759 = vmatpush1.msra.mxu0 0.0
    %1760 = vmatprep.subr.mxu0 0.0
    %1761 = vmatpush1.msra.mxu0 0.0
    %1762 = vmatprep.subr.mxu0 0.0
    %1763 = vmatpush1.msra.mxu0 0.0
    %1764 = vmatprep.subr.mxu0 0.0
    %1765 = vmatpush1.msra.mxu0 0.0
    %1766 = vmatprep.subr.mxu0 0.0
    %1767 = vmatpush1.msra.mxu0 0.0
    %1768 = vmatprep.subr.mxu0 0.0
    %1769 = vmatpush1.msra.mxu0 0.0
    %1770 = vmatprep.subr.mxu0 0.0
    %1771 = vmatpush1.msra.mxu0 0.0
    %1772 = vmatprep.subr.mxu0 0.0
    %1773 = vmatpush1.msra.mxu0 0.0
    %1774 = vmatprep.subr.mxu0 0.0
    %1775 = vmatpush1.msra.mxu0 0.0
    %1776 = vmatprep.subr.mxu0 0.0
    %1777 = vmatpush1.msra.mxu0 0.0
    %1778 = vmatprep.subr.mxu0 0.0
    %1779 = vmatpush1.msra.mxu0 0.0
    %1780 = vmatprep.subr.mxu0 0.0
    %1781 = vmatpush1.msra.mxu0 0.0
    %1782 = vmatprep.subr.mxu0 0.0
    %1783 = vmatpush1.msra.mxu0 0.0
    %1784 = vmatprep.subr.mxu0 0.0
    %1785 = vmatpush1.msra.mxu0 0.0
    %1786 = vmatprep.subr.mxu0 0.0
    %1787 = vmatpush1.msra.mxu0 0.0
    %1788 = vmatprep.subr.mxu0 0.0
    %1789 = vmatpush1.msra.mxu0 0.0
    %1790 = vmatprep.subr.mxu0 0.0
    %1791 = vmatpush1.msra.mxu0 0.0
    %1792 = vmatprep.mubr.f32.mxu0 0.0
    %1793 = vmatmul.mubr.f32.gmra.mrb[0].mxu0 %v1723
    %v1794 = vpop.f32.mrb[0].mxu0
    %v1795 = vadd.f32 0.0, %v1794
    %v1796 = vpop.f32.mrb[0].mxu0
    %1797 = vmatprep.mubr.f32.mxu0 0.0
    %1798 = vmatmul.mubr.f32.gmra.mrb[0].mxu0 %v1726
    %v1799 = vpop.f32.mrb[0].mxu0
    %v1800 = vadd.f32 0.0, %v1799
    %v1801 = vpop.f32.mrb[0].mxu0
    %1802 = vdwg.mxu0
    %v1803 = vadd.f32 %v1346, %v1714
    %v1804 = vadd.f32 %v1351, %v1719
    %v1805 = vadd.f32 %v1427, %v1795
    %v1806 = vadd.f32 %v1432, %v1800
    %v1808 = vsel %vm69, %v484, 0
    %v1811 = vsel %vm69, %v485, 0
    %1813 = vmatprep.subr.mxu0 0.0
    %1814 = vmatpush1.xpose.msra.mxu0 %v1808
    %1815 = vmatprep.subr.mxu0 0.0
    %1816 = vmatpush1.xpose.msra.mxu0 %v1811
    %1817 = vmatprep.subr.mxu0 0.0
    %1818 = vmatpush1.xpose.msra.mxu0 0.0
    %1819 = vmatprep.subr.mxu0 0.0
    %1820 = vmatpush1.xpose.msra.mxu0 0.0
    %1821 = vmatprep.subr.mxu0 0.0
    %1822 = vmatpush1.xpose.msra.mxu0 0.0
    %1823 = vmatprep.subr.mxu0 0.0
    %1824 = vmatpush1.xpose.msra.mxu0 0.0
    %1825 = vmatprep.subr.mxu0 0.0
    %1826 = vmatpush1.xpose.msra.mxu0 0.0
    %1827 = vmatprep.subr.mxu0 0.0
    %1828 = vmatpush1.xpose.msra.mxu0 0.0
    %1829 = vmatprep.subr.mxu0 0.0
    %1830 = vmatpush1.xpose.msra.mxu0 0.0
    %1831 = vmatprep.subr.mxu0 0.0
    %1832 = vmatpush1.xpose.msra.mxu0 0.0
    %1833 = vmatprep.subr.mxu0 0.0
    %1834 = vmatpush1.xpose.msra.mxu0 0.0
    %1835 = vmatprep.subr.mxu0 0.0
    %1836 = vmatpush1.xpose.msra.mxu0 0.0
    %1837 = vmatprep.subr.mxu0 0.0
    %1838 = vmatpush1.xpose.msra.mxu0 0.0
    %1839 = vmatprep.subr.mxu0 0.0
    %1840 = vmatpush1.xpose.msra.mxu0 0.0
    %1841 = vmatprep.subr.mxu0 0.0
    %1842 = vmatpush1.xpose.msra.mxu0 0.0
    %1843 = vmatprep.subr.mxu0 0.0
    %1844 = vmatpush1.xpose.msra.mxu0 0.0
    %1845 = vmatprep.subr.mxu0 0.0
    %1846 = vmatpush1.xpose.msra.mxu0 0.0
    %1847 = vmatprep.subr.mxu0 0.0
    %1848 = vmatpush1.xpose.msra.mxu0 0.0
    %1849 = vmatprep.subr.mxu0 0.0
    %1850 = vmatpush1.xpose.msra.mxu0 0.0
    %1851 = vmatprep.subr.mxu0 0.0
    %1852 = vmatpush1.xpose.msra.mxu0 0.0
    %1853 = vmatprep.subr.mxu0 0.0
    %1854 = vmatpush1.xpose.msra.mxu0 0.0
    %1855 = vmatprep.subr.mxu0 0.0
    %1856 = vmatpush1.xpose.msra.mxu0 0.0
    %1857 = vmatprep.subr.mxu0 0.0
    %1858 = vmatpush1.xpose.msra.mxu0 0.0
    %1859 = vmatprep.subr.mxu0 0.0
    %1860 = vmatpush1.xpose.msra.mxu0 0.0
    %1861 = vmatprep.subr.mxu0 0.0
    %1862 = vmatpush1.xpose.msra.mxu0 0.0
    %1863 = vmatprep.subr.mxu0 0.0
    %1864 = vmatpush1.xpose.msra.mxu0 0.0
    %1865 = vmatprep.subr.mxu0 0.0
    %1866 = vmatpush1.xpose.msra.mxu0 0.0
    %1867 = vmatprep.subr.mxu0 0.0
    %1868 = vmatpush1.xpose.msra.mxu0 0.0
    %1869 = vmatprep.subr.mxu0 0.0
    %1870 = vmatpush1.xpose.msra.mxu0 0.0
    %1871 = vmatprep.subr.mxu0 0.0
    %1872 = vmatpush1.xpose.msra.mxu0 0.0
    %1873 = vmatprep.subr.mxu0 0.0
    %1874 = vmatpush1.xpose.msra.mxu0 0.0
    %1875 = vmatprep.subr.mxu0 0.0
    %1876 = vmatpush1.xpose.msra.mxu0 0.0
    %1877 = vmatprep.mubr.f32.mxu0 0.0
    %1878 = vmatmul.mubr.f32.gmra.mrb[0].mxu0 %v687
    %v1879 = vpop.f32.mrb[0].mxu0
    %v1880 = vadd.f32 0.0, %v1879
    %v1881 = vpop.f32.mrb[0].mxu0
    %1882 = vmatprep.mubr.f32.mxu0 0.0
    %1883 = vmatmul.mubr.f32.gmra.mrb[0].mxu0 %v690
    %v1884 = vpop.f32.mrb[0].mxu0
    %v1885 = vadd.f32 0.0, %v1884
    %v1886 = vpop.f32.mrb[0].mxu0
    %1887 = vdwg.mxu0
    %v1889 = vsel %vm69, %v486, 0
    %v1892 = vsel %vm69, %v487, 0
    %1894 = vmatprep.subr.mxu0 0.0
    %1895 = vmatpush1.xpose.msra.mxu0 %v1889
    %1896 = vmatprep.subr.mxu0 0.0
    %1897 = vmatpush1.xpose.msra.mxu0 %v1892
    %1898 = vmatprep.subr.mxu0 0.0
    %1899 = vmatpush1.xpose.msra.mxu0 0.0
    %1900 = vmatprep.subr.mxu0 0.0
    %1901 = vmatpush1.xpose.msra.mxu0 0.0
    %1902 = vmatprep.subr.mxu0 0.0
    %1903 = vmatpush1.xpose.msra.mxu0 0.0
    %1904 = vmatprep.subr.mxu0 0.0
    %1905 = vmatpush1.xpose.msra.mxu0 0.0
    %1906 = vmatprep.subr.mxu0 0.0
    %1907 = vmatpush1.xpose.msra.mxu0 0.0
    %1908 = vmatprep.subr.mxu0 0.0
    %1909 = vmatpush1.xpose.msra.mxu0 0.0
    %1910 = vmatprep.subr.mxu0 0.0
    %1911 = vmatpush1.xpose.msra.mxu0 0.0
    %1912 = vmatprep.subr.mxu0 0.0
    %1913 = vmatpush1.xpose.msra.mxu0 0.0
    %1914 = vmatprep.subr.mxu0 0.0
    %1915 = vmatpush1.xpose.msra.mxu0 0.0
    %1916 = vmatprep.subr.mxu0 0.0
    %1917 = vmatpush1.xpose.msra.mxu0 0.0
    %1918 = vmatprep.subr.mxu0 0.0
    %1919 = vmatpush1.xpose.msra.mxu0 0.0
    %1920 = vmatprep.subr.mxu0 0.0
    %1921 = vmatpush1.xpose.msra.mxu0 0.0
    %1922 = vmatprep.subr.mxu0 0.0
    %1923 = vmatpush1.xpose.msra.mxu0 0.0
    %1924 = vmatprep.subr.mxu0 0.0
    %1925 = vmatpush1.xpose.msra.mxu0 0.0
    %1926 = vmatprep.subr.mxu0 0.0
    %1927 = vmatpush1.xpose.msra.mxu0 0.0
    %1928 = vmatprep.subr.mxu0 0.0
    %1929 = vmatpush1.xpose.msra.mxu0 0.0
    %1930 = vmatprep.subr.mxu0 0.0
    %1931 = vmatpush1.xpose.msra.mxu0 0.0
    %1932 = vmatprep.subr.mxu0 0.0
    %1933 = vmatpush1.xpose.msra.mxu0 0.0
    %1934 = vmatprep.subr.mxu0 0.0
    %1935 = vmatpush1.xpose.msra.mxu0 0.0
    %1936 = vmatprep.subr.mxu0 0.0
    %1937 = vmatpush1.xpose.msra.mxu0 0.0
    %1938 = vmatprep.subr.mxu0 0.0
    %1939 = vmatpush1.xpose.msra.mxu0 0.0
    %1940 = vmatprep.subr.mxu0 0.0
    %1941 = vmatpush1.xpose.msra.mxu0 0.0
    %1942 = vmatprep.subr.mxu0 0.0
    %1943 = vmatpush1.xpose.msra.mxu0 0.0
    %1944 = vmatprep.subr.mxu0 0.0
    %1945 = vmatpush1.xpose.msra.mxu0 0.0
    %1946 = vmatprep.subr.mxu0 0.0
    %1947 = vmatpush1.xpose.msra.mxu0 0.0
    %1948 = vmatprep.subr.mxu0 0.0
    %1949 = vmatpush1.xpose.msra.mxu0 0.0
    %1950 = vmatprep.subr.mxu0 0.0
    %1951 = vmatpush1.xpose.msra.mxu0 0.0
    %1952 = vmatprep.subr.mxu0 0.0
    %1953 = vmatpush1.xpose.msra.mxu0 0.0
    %1954 = vmatprep.subr.mxu0 0.0
    %1955 = vmatpush1.xpose.msra.mxu0 0.0
    %1956 = vmatprep.subr.mxu0 0.0
    %1957 = vmatpush1.xpose.msra.mxu0 0.0
    %1958 = vmatprep.mubr.f32.mxu0 0.0
    %1959 = vmatmul.mubr.f32.gmra.mrb[0].mxu0 %v774
    %v1960 = vpop.f32.mrb[0].mxu0
    %v1961 = vadd.f32 0.0, %v1960
    %v1962 = vpop.f32.mrb[0].mxu0
    %1963 = vmatprep.mubr.f32.mxu0 0.0
    %1964 = vmatmul.mubr.f32.gmra.mrb[0].mxu0 %v777
    %v1965 = vpop.f32.mrb[0].mxu0
    %v1966 = vadd.f32 0.0, %v1965
    %v1967 = vpop.f32.mrb[0].mxu0
    %1968 = vdwg.mxu0
    %v1969 = vsel %vm860, %v1880, -inf
    %1970 = vmax.xlane.f32.xlu0 %v1969
    %v1971 = vpop.xlane.xlu0 %1970
    %v1972 = vsel %vm860, %v1885, -inf
    %1973 = vmax.xlane.f32.xlu0 %v1972
    %v1974 = vpop.xlane.xlu0 %1973
    %v1975 = vsel %vm860, %v1961, -inf
    %1976 = vmax.xlane.f32.xlu0 %v1975
    %v1977 = vpop.xlane.xlu0 %1976
    %v1978 = vsel %vm860, %v1966, -inf
    %1979 = vmax.xlane.f32.xlu0 %v1978
    %v1980 = vpop.xlane.xlu0 %1979
    %v1981 = vsub.f32 %v1880, %v1971
    %v1982 = vsub.f32 %v1885, %v1974
    %v1983 = vsub.f32 %v1961, %v1977
    %v1984 = vsub.f32 %v1966, %v1980
    %v1985 = vmul.f32 %v1981, 1.442695
    %v1986 = vpow.pop %v1985
    %v1987 = vmul.f32 %v1982, 1.442695
    %v1988 = vpow.pop %v1987
    %v1989 = vmul.f32 %v1983, 1.442695
    %v1990 = vpow.pop %v1989
    %v1991 = vmul.f32 %v1984, 1.442695
    %v1992 = vpow.pop %v1991
    %v1993 = vsel %vm860, %v1986, 0.0
    %1994 = vadd.xlane.f32.xlu0 %v1993
    %v1995 = vpop.xlane.xlu0 %1994
    %v1996 = vsel %vm860, %v1988, 0.0
    %1997 = vadd.xlane.f32.xlu0 %v1996
    %v1998 = vpop.xlane.xlu0 %1997
    %v1999 = vsel %vm860, %v1990, 0.0
    %2000 = vadd.xlane.f32.xlu0 %v1999
    %v2001 = vpop.xlane.xlu0 %2000
    %v2002 = vsel %vm860, %v1992, 0.0
    %2003 = vadd.xlane.f32.xlu0 %v2002
    %v2004 = vpop.xlane.xlu0 %2003
    %v2005 = vrcp.pop %v1995
    %v2006 = vrcp.pop %v1998
    %v2007 = vrcp.pop %v2001
    %v2008 = vrcp.pop %v2004
    %v2009 = vmul.f32 %v1986, %v2005
    %v2010 = vmul.f32 %v1988, %v2006
    %v2011 = vmul.f32 %v1990, %v2007
    %v2012 = vmul.f32 %v1992, %v2008
    %v2014 = vsel %vm860, %v2009, 0
    %v2017 = vsel %vm860, %v2010, 0
    %2019 = vmatprep.subr.mxu0 0.0
    %2020 = vmatpush1.msra.mxu0 %v559
    %2021 = vmatprep.subr.mxu0 0.0
    %2022 = vmatpush1.msra.mxu0 %v564
    %2023 = vmatprep.subr.mxu0 0.0
    %2024 = vmatpush1.msra.mxu0 0.0
    %2025 = vmatprep.subr.mxu0 0.0
    %2026 = vmatpush1.msra.mxu0 0.0
    %2027 = vmatprep.subr.mxu0 0.0
    %2028 = vmatpush1.msra.mxu0 0.0
    %2029 = vmatprep.subr.mxu0 0.0
    %2030 = vmatpush1.msra.mxu0 0.0
    %2031 = vmatprep.subr.mxu0 0.0
    %2032 = vmatpush1.msra.mxu0 0.0
    %2033 = vmatprep.subr.mxu0 0.0
    %2034 = vmatpush1.msra.mxu0 0.0
    %2035 = vmatprep.subr.mxu0 0.0
    %2036 = vmatpush1.msra.mxu0 0.0
    %2037 = vmatprep.subr.mxu0 0.0
    %2038 = vmatpush1.msra.mxu0 0.0
    %2039 = vmatprep.subr.mxu0 0.0
    %2040 = vmatpush1.msra.mxu0 0.0
    %2041 = vmatprep.subr.mxu0 0.0
    %2042 = vmatpush1.msra.mxu0 0.0
    %2043 = vmatprep.subr.mxu0 0.0
    %2044 = vmatpush1.msra.mxu0 0.0
    %2045 = vmatprep.subr.mxu0 0.0
    %2046 = vmatpush1.msra.mxu0 0.0
    %2047 = vmatprep.subr.mxu0 0.0
    %2048 = vmatpush1.msra.mxu0 0.0
    %2049 = vmatprep.subr.mxu0 0.0
    %2050 = vmatpush1.msra.mxu0 0.0
    %2051 = vmatprep.subr.mxu0 0.0
    %2052 = vmatpush1.msra.mxu0 0.0
    %2053 = vmatprep.subr.mxu0 0.0
    %2054 = vmatpush1.msra.mxu0 0.0
    %2055 = vmatprep.subr.mxu0 0.0
    %2056 = vmatpush1.msra.mxu0 0.0
    %2057 = vmatprep.subr.mxu0 0.0
    %2058 = vmatpush1.msra.mxu0 0.0
    %2059 = vmatprep.subr.mxu0 0.0
    %2060 = vmatpush1.msra.mxu0 0.0
    %2061 = vmatprep.subr.mxu0 0.0
    %2062 = vmatpush1.msra.mxu0 0.0
    %2063 = vmatprep.subr.mxu0 0.0
    %2064 = vmatpush1.msra.mxu0 0.0
    %2065 = vmatprep.subr.mxu0 0.0
    %2066 = vmatpush1.msra.mxu0 0.0
    %2067 = vmatprep.subr.mxu0 0.0
    %2068 = vmatpush1.msra.mxu0 0.0
    %2069 = vmatprep.subr.mxu0 0.0
    %2070 = vmatpush1.msra.mxu0 0.0
    %2071 = vmatprep.subr.mxu0 0.0
    %2072 = vmatpush1.msra.mxu0 0.0
    %2073 = vmatprep.subr.mxu0 0.0
    %2074 = vmatpush1.msra.mxu0 0.0
    %2075 = vmatprep.subr.mxu0 0.0
    %2076 = vmatpush1.msra.mxu0 0.0
    %2077 = vmatprep.subr.mxu0 0.0
    %2078 = vmatpush1.msra.mxu0 0.0
    %2079 = vmatprep.subr.mxu0 0.0
    %2080 = vmatpush1.msra.mxu0 0.0
    %2081 = vmatprep.subr.mxu0 0.0
    %2082 = vmatpush1.msra.mxu0 0.0
    %2083 = vmatprep.mubr.f32.mxu0 0.0
    %2084 = vmatmul.mubr.f32.gmra.mrb[0].mxu0 %v2014
    %v2085 = vpop.f32.mrb[0].mxu0
    %v2086 = vadd.f32 0.0, %v2085
    %v2087 = vpop.f32.mrb[0].mxu0
    %2088 = vmatprep.mubr.f32.mxu0 0.0
    %2089 = vmatmul.mubr.f32.gmra.mrb[0].mxu0 %v2017
    %v2090 = vpop.f32.mrb[0].mxu0
    %v2091 = vadd.f32 0.0, %v2090
    %v2092 = vpop.f32.mrb[0].mxu0
    %2093 = vdwg.mxu0
    %v2095 = vsel %vm860, %v2011, 0
    %v2098 = vsel %vm860, %v2012, 0
    %2100 = vmatprep.subr.mxu0 0.0
    %2101 = vmatpush1.msra.mxu0 %v569
    %2102 = vmatprep.subr.mxu0 0.0
    %2103 = vmatpush1.msra.mxu0 %v574
    %2104 = vmatprep.subr.mxu0 0.0
    %2105 = vmatpush1.msra.mxu0 0.0
    %2106 = vmatprep.subr.mxu0 0.0
    %2107 = vmatpush1.msra.mxu0 0.0
    %2108 = vmatprep.subr.mxu0 0.0
    %2109 = vmatpush1.msra.mxu0 0.0
    %2110 = vmatprep.subr.mxu0 0.0
    %2111 = vmatpush1.msra.mxu0 0.0
    %2112 = vmatprep.subr.mxu0 0.0
    %2113 = vmatpush1.msra.mxu0 0.0
    %2114 = vmatprep.subr.mxu0 0.0
    %2115 = vmatpush1.msra.mxu0 0.0
    %2116 = vmatprep.subr.mxu0 0.0
    %2117 = vmatpush1.msra.mxu0 0.0
    %2118 = vmatprep.subr.mxu0 0.0
    %2119 = vmatpush1.msra.mxu0 0.0
    %2120 = vmatprep.subr.mxu0 0.0
    %2121 = vmatpush1.msra.mxu0 0.0
    %2122 = vmatprep.subr.mxu0 0.0
    %2123 = vmatpush1.msra.mxu0 0.0
    %2124 = vmatprep.subr.mxu0 0.0
    %2125 = vmatpush1.msra.mxu0 0.0
    %2126 = vmatprep.subr.mxu0 0.0
    %2127 = vmatpush1.msra.mxu0 0.0
    %2128 = vmatprep.subr.mxu0 0.0
    %2129 = vmatpush1.msra.mxu0 0.0
    %2130 = vmatprep.subr.mxu0 0.0
    %2131 = vmatpush1.msra.mxu0 0.0
    %2132 = vmatprep.subr.mxu0 0.0
    %2133 = vmatpush1.msra.mxu0 0.0
    %2134 = vmatprep.subr.mxu0 0.0
    %2135 = vmatpush1.msra.mxu0 0.0
    %2136 = vmatprep.subr.mxu0 0.0
    %2137 = vmatpush1.msra.mxu0 0.0
    %2138 = vmatprep.subr.mxu0 0.0
    %2139 = vmatpush1.msra.mxu0 0.0
    %2140 = vmatprep.subr.mxu0 0.0
    %2141 = vmatpush1.msra.mxu0 0.0
    %2142 = vmatprep.subr.mxu0 0.0
    %2143 = vmatpush1.msra.mxu0 0.0
    %2144 = vmatprep.subr.mxu0 0.0
    %2145 = vmatpush1.msra.mxu0 0.0
    %2146 = vmatprep.subr.mxu0 0.0
    %2147 = vmatpush1.msra.mxu0 0.0
    %2148 = vmatprep.subr.mxu0 0.0
    %2149 = vmatpush1.msra.mxu0 0.0
    %2150 = vmatprep.subr.mxu0 0.0
    %2151 = vmatpush1.msra.mxu0 0.0
    %2152 = vmatprep.subr.mxu0 0.0
    %2153 = vmatpush1.msra.mxu0 0.0
    %2154 = vmatprep.subr.mxu0 0.0
    %2155 = vmatpush1.msra.mxu0 0.0
    %2156 = vmatprep.subr.mxu0 0.0
    %2157 = vmatpush1.msra.mxu0 0.0
    %2158 = vmatprep.subr.mxu0 0.0
    %2159 = vmatpush1.msra.mxu0 0.0
    %2160 = vmatprep.subr.mxu0 0.0
    %2161 = vmatpush1.msra.mxu0 0.0
    %2162 = vmatprep.subr.mxu0 0.0
    %2163 = vmatpush1.msra.mxu0 0.0
    %2164 = vmatprep.mubr.f32.mxu0 0.0
    %2165 = vmatmul.mubr.f32.gmra.mrb[0].mxu0 %v2095
    %v2166 = vpop.f32.mrb[0].mxu0
    %v2167 = vadd.f32 0.0, %v2166
    %v2168 = vpop.f32.mrb[0].mxu0
    %2169 = vmatprep.mubr.f32.mxu0 0.0
    %2170 = vmatmul.mubr.f32.gmra.mrb[0].mxu0 %v2098
    %v2171 = vpop.f32.mrb[0].mxu0
    %v2172 = vadd.f32 0.0, %v2171
    %v2173 = vpop.f32.mrb[0].mxu0
    %2174 = vdwg.mxu0
    %v2175 = vadd.f32 %v1803, %v2086
    %v2176 = vadd.f32 %v1804, %v2091
    %v2177 = vadd.f32 %v1805, %v2167
    %v2178 = vadd.f32 %v1806, %v2172
    %v2179 = vlaneseq
    %v2180 = vshrl.u32 %v2179, 7
    %v2181 = vsub.s32 2, %v2180
    %v2182 = vrot.slane %v37, %v2181
    %v2183 = vadd.f32 %v2175, %v2182
    %v2184 = vadd.f32 %v2176, %v2182
    %v2185 = vadd.f32 %v2177, %v2182
    %v2186 = vadd.f32 %v2178, %v2182
    %v2187 = vadd.f32 %v2183, %v577
    %v2188 = vadd.f32 %v2184, %v578
    %v2189 = vadd.f32 %v2185, %v579
    %v2190 = vadd.f32 %v2186, %v580
    %v2191 = vsel %vm69, %v2187, 0.0
    %v2192 = vsel %vm69, %v2188, 0.0
    %v2193 = vadd.f32 %v2191, %v2192
    %v2194 = vrot.slane %v2193, 4
    %v2195 = vadd.f32 %v2193, %v2194
    %v2196 = vrot.slane %v2195, 2
    %v2197 = vadd.f32 %v2195, %v2196
    %v2198 = vrot.slane %v2197, 1
    %v2199 = vadd.f32 %v2197, %v2198
    %v2200 = vsel %vm69, %v2189, 0.0
    %v2201 = vsel %vm69, %v2190, 0.0
    %v2202 = vadd.f32 %v2200, %v2201
    %v2203 = vrot.slane %v2202, 4
    %v2204 = vadd.f32 %v2202, %v2203
    %v2205 = vrot.slane %v2204, 2
    %v2206 = vadd.f32 %v2204, %v2205
    %v2207 = vrot.slane %v2206, 1
    %v2208 = vadd.f32 %v2206, %v2207
    %v2209 = vrcp.pop 16.0
    %v2210 = vmul.f32 %v2199, %v2209
    %v2211 = vmul.f32 %v2208, %v2209
    %v2212 = vsub.f32 %v2187, %v2210
    %v2213 = vsub.f32 %v2188, %v2210
    %v2214 = vsub.f32 %v2189, %v2211
    %v2215 = vsub.f32 %v2190, %v2211
    %v2216 = vmul.f32 %v2212, %v2212
    %v2217 = vmul.f32 %v2213, %v2213
    %v2218 = vmul.f32 %v2214, %v2214
    %v2219 = vmul.f32 %v2215, %v2215
    %v2220 = vsel %vm69, %v2216, 0.0
    %v2221 = vsel %vm69, %v2217, 0.0
    %v2222 = vadd.f32 %v2220, %v2221
    %v2223 = vrot.slane %v2222, 4
    %v2224 = vadd.f32 %v2222, %v2223
    %v2225 = vrot.slane %v2224, 2
    %v2226 = vadd.f32 %v2224, %v2225
    %v2227 = vrot.slane %v2226, 1
    %v2228 = vadd.f32 %v2226, %v2227
    %v2229 = vsel %vm69, %v2218, 0.0
    %v2230 = vsel %vm69, %v2219, 0.0
    %v2231 = vadd.f32 %v2229, %v2230
    %v2232 = vrot.slane %v2231, 4
    %v2233 = vadd.f32 %v2231, %v2232
    %v2234 = vrot.slane %v2233, 2
    %v2235 = vadd.f32 %v2233, %v2234
    %v2236 = vrot.slane %v2235, 1
    %v2237 = vadd.f32 %v2235, %v2236
    %v2238 = vmul.f32 %v2228, %v2209
    %v2239 = vmul.f32 %v2237, %v2209
    %v2240 = vadd.f32 %v2238, 1e-05
    %v2241 = vadd.f32 %v2239, 1e-05
    %v2242 = vrsqrt.pop %v2240
    %v2243 = vrsqrt.pop %v2241
    %v2244 = vmul.f32 %v2212, %v2242
    %v2245 = vmul.f32 %v2213, %v2242
    %v2246 = vmul.f32 %v2214, %v2243
    %v2247 = vmul.f32 %v2215, %v2243
    %v2248 = vlaneseq
    %v2249 = vshrl.u32 %v2248, 7
    %v2250 = vsub.s32 4, %v2249
    %v2251 = vrot.slane %v37, %v2250
    %v2252 = vmul.f32 %v2244, %v2251
    %v2253 = vmul.f32 %v2245, %v2251
    %v2254 = vmul.f32 %v2246, %v2251
    %v2255 = vmul.f32 %v2247, %v2251
    %v2256 = vlaneseq
    %v2257 = vshrl.u32 %v2256, 7
    %v2258 = vsub.s32 5, %v2257
    %v2259 = vrot.slane %v37, %v2258
    %v2260 = vadd.f32 %v2252, %v2259
    %v2261 = vadd.f32 %v2253, %v2259
    %v2262 = vadd.f32 %v2254, %v2259
    %v2263 = vadd.f32 %v2255, %v2259
    %v2264 = vpack.c.bf16 %v2261, %v2260
    %v2265 = vpack.c.bf16 %v2263, %v2262
    %v2266 = vld [vmem:[%s6] sm:$0xff]
    %v2267 = vld [vmem:[%s6 + $0x8] sm:$0xff]
    %v2268 = vld [vmem:[%s6 + $0x10] sm:$0xff]
    %v2269 = vld [vmem:[%s6 + $0x18] sm:$0xff]
    %v2270 = vld [vmem:[%s6 + $0x20] sm:$0xff]
    %v2271 = vld [vmem:[%s6 + $0x28] sm:$0xff]
    %v2272 = vld [vmem:[%s6 + $0x30] sm:$0xff]
    %v2273 = vld [vmem:[%s6 + $0x38] sm:$0xff]
    %v2274 = vld [vmem:[%s6 + $0x40] sm:$0xff]
    %v2275 = vld [vmem:[%s6 + $0x48] sm:$0xff]
    %v2276 = vld [vmem:[%s6 + $0x50] sm:$0xff]
    %v2277 = vld [vmem:[%s6 + $0x58] sm:$0xff]
    %v2278 = vld [vmem:[%s6 + $0x60] sm:$0xff]
    %v2279 = vld [vmem:[%s6 + $0x68] sm:$0xff]
    %v2280 = vld [vmem:[%s6 + $0x70] sm:$0xff]
    %v2281 = vld [vmem:[%s6 + $0x78] sm:$0xff]
    %v2282 = vld [vmem:[%s6 + $0x80] sm:$0xff]
    %v2283 = vld [vmem:[%s6 + $0x88] sm:$0xff]
    %v2284 = vld [vmem:[%s6 + $0x90] sm:$0xff]
    %v2285 = vld [vmem:[%s6 + $0x98] sm:$0xff]
    %v2286 = vld [vmem:[%s6 + $0xa0] sm:$0xff]
    %v2287 = vld [vmem:[%s6 + $0xa8] sm:$0xff]
    %v2288 = vld [vmem:[%s6 + $0xb0] sm:$0xff]
    %v2289 = vld [vmem:[%s6 + $0xb8] sm:$0xff]
    %v2290 = vld [vmem:[%s6 + $0xc0] sm:$0xff]
    %v2291 = vld [vmem:[%s6 + $0xc8] sm:$0xff]
    %v2292 = vld [vmem:[%s6 + $0xd0] sm:$0xff]
    %v2293 = vld [vmem:[%s6 + $0xd8] sm:$0xff]
    %v2294 = vld [vmem:[%s6 + $0xe0] sm:$0xff]
    %v2295 = vld [vmem:[%s6 + $0xe8] sm:$0xff]
    %v2296 = vld [vmem:[%s6 + $0xf0] sm:$0xff]
    %v2297 = vld [vmem:[%s6 + $0xf8] sm:$0xff]
    %v2300 = vlaneseq
    %v2301 = vshrl.u32 %v2300, 7
    %v2302 = vsub.s32 0, %v2301
    %v2303 = vrot.slane %v39, %v2302
    %v2304 = vlaneseq
    %v2305 = vshrl.u32 %v2304, 7
    %v2306 = vsub.s32 1, %v2305
    %v2307 = vrot.slane %v39, %v2306
    %v2308 = vlaneseq
    %v2309 = vshrl.u32 %v2308, 7
    %v2310 = vsub.s32 2, %v2309
    %v2311 = vrot.slane %v39, %v2310
    %v2312 = vlaneseq
    %v2313 = vshrl.u32 %v2312, 7
    %v2314 = vsub.s32 3, %v2313
    %v2315 = vrot.slane %v39, %v2314
    %v2316 = vlaneseq
    %v2317 = vshrl.u32 %v2316, 7
    %v2318 = vsub.s32 4, %v2317
    %v2319 = vrot.slane %v39, %v2318
    %v2320 = vlaneseq
    %v2321 = vshrl.u32 %v2320, 7
    %v2322 = vsub.s32 5, %v2321
    %v2323 = vrot.slane %v39, %v2322
    %v2324 = vlaneseq
    %v2325 = vshrl.u32 %v2324, 7
    %v2326 = vsub.s32 6, %v2325
    %v2327 = vrot.slane %v39, %v2326
    %v2328 = vlaneseq
    %v2329 = vshrl.u32 %v2328, 7
    %v2330 = vsub.s32 7, %v2329
    %v2331 = vrot.slane %v39, %v2330
    %v2332 = vlaneseq
    %v2333 = vshrl.u32 %v2332, 7
    %v2334 = vsub.s32 0, %v2333
    %v2335 = vrot.slane %v40, %v2334
    %v2336 = vlaneseq
    %v2337 = vshrl.u32 %v2336, 7
    %v2338 = vsub.s32 1, %v2337
    %v2339 = vrot.slane %v40, %v2338
    %v2340 = vlaneseq
    %v2341 = vshrl.u32 %v2340, 7
    %v2342 = vsub.s32 2, %v2341
    %v2343 = vrot.slane %v40, %v2342
    %v2344 = vlaneseq
    %v2345 = vshrl.u32 %v2344, 7
    %v2346 = vsub.s32 3, %v2345
    %v2347 = vrot.slane %v40, %v2346
    %v2348 = vlaneseq
    %v2349 = vshrl.u32 %v2348, 7
    %v2350 = vsub.s32 4, %v2349
    %v2351 = vrot.slane %v40, %v2350
    %v2352 = vlaneseq
    %v2353 = vshrl.u32 %v2352, 7
    %v2354 = vsub.s32 5, %v2353
    %v2355 = vrot.slane %v40, %v2354
    %v2356 = vlaneseq
    %v2357 = vshrl.u32 %v2356, 7
    %v2358 = vsub.s32 6, %v2357
    %v2359 = vrot.slane %v40, %v2358
    %v2360 = vlaneseq
    %v2361 = vshrl.u32 %v2360, 7
    %v2362 = vsub.s32 7, %v2361
    %v2363 = vrot.slane %v40, %v2362
    %v2412 = vunpack.c.l.b16 %v2266
    %v2413 = vunpack.c.h.b16 %v2266
    %v2414 = vunpack.c.l.b16 %v2267
    %v2415 = vunpack.c.h.b16 %v2267
    %v2416 = vunpack.c.l.b16 %v2268
    %v2417 = vunpack.c.h.b16 %v2268
    %v2418 = vunpack.c.l.b16 %v2269
    %v2419 = vunpack.c.h.b16 %v2269
    %v2420 = vunpack.c.l.b16 %v2270
    %v2421 = vunpack.c.h.b16 %v2270
    %v2422 = vunpack.c.l.b16 %v2271
    %v2423 = vunpack.c.h.b16 %v2271
    %v2424 = vunpack.c.l.b16 %v2272
    %v2425 = vunpack.c.h.b16 %v2272
    %v2426 = vunpack.c.l.b16 %v2273
    %v2427 = vunpack.c.h.b16 %v2273
    %v2428 = vunpack.c.l.b16 %v2274
    %v2429 = vunpack.c.h.b16 %v2274
    %v2430 = vunpack.c.l.b16 %v2275
    %v2431 = vunpack.c.h.b16 %v2275
    %v2432 = vunpack.c.l.b16 %v2276
    %v2433 = vunpack.c.h.b16 %v2276
    %v2434 = vunpack.c.l.b16 %v2277
    %v2435 = vunpack.c.h.b16 %v2277
    %v2436 = vunpack.c.l.b16 %v2278
    %v2437 = vunpack.c.h.b16 %v2278
    %v2438 = vunpack.c.l.b16 %v2279
    %v2439 = vunpack.c.h.b16 %v2279
    %v2440 = vunpack.c.l.b16 %v2280
    %v2441 = vunpack.c.h.b16 %v2280
    %v2442 = vunpack.c.l.b16 %v2281
    %v2443 = vunpack.c.h.b16 %v2281
    %v2444 = vunpack.c.l.b16 %v2282
    %v2445 = vunpack.c.h.b16 %v2282
    %v2446 = vunpack.c.l.b16 %v2283
    %v2447 = vunpack.c.h.b16 %v2283
    %v2448 = vunpack.c.l.b16 %v2284
    %v2449 = vunpack.c.h.b16 %v2284
    %v2450 = vunpack.c.l.b16 %v2285
    %v2451 = vunpack.c.h.b16 %v2285
    %v2452 = vunpack.c.l.b16 %v2286
    %v2453 = vunpack.c.h.b16 %v2286
    %v2454 = vunpack.c.l.b16 %v2287
    %v2455 = vunpack.c.h.b16 %v2287
    %v2456 = vunpack.c.l.b16 %v2288
    %v2457 = vunpack.c.h.b16 %v2288
    %v2458 = vunpack.c.l.b16 %v2289
    %v2459 = vunpack.c.h.b16 %v2289
    %v2460 = vunpack.c.l.b16 %v2290
    %v2461 = vunpack.c.h.b16 %v2290
    %v2462 = vunpack.c.l.b16 %v2291
    %v2463 = vunpack.c.h.b16 %v2291
    %v2464 = vunpack.c.l.b16 %v2292
    %v2465 = vunpack.c.h.b16 %v2292
    %v2466 = vunpack.c.l.b16 %v2293
    %v2467 = vunpack.c.h.b16 %v2293
    %v2468 = vunpack.c.l.b16 %v2294
    %v2469 = vunpack.c.h.b16 %v2294
    %v2470 = vunpack.c.l.b16 %v2295
    %v2471 = vunpack.c.h.b16 %v2295
    %v2472 = vunpack.c.l.b16 %v2296
    %v2473 = vunpack.c.h.b16 %v2296
    %v2474 = vunpack.c.l.b16 %v2297
    %v2475 = vunpack.c.h.b16 %v2297
    %v2476 = vpack.c.b16 %v2428, %v2412
    %v2477 = vpack.c.b16 %v2429, %v2413
    %v2478 = vpack.c.b16 %v2430, %v2414
    %v2479 = vpack.c.b16 %v2431, %v2415
    %v2480 = vpack.c.b16 %v2432, %v2416
    %v2481 = vpack.c.b16 %v2433, %v2417
    %v2482 = vpack.c.b16 %v2434, %v2418
    %v2483 = vpack.c.b16 %v2435, %v2419
    %v2484 = vpack.c.b16 %v2436, %v2420
    %v2485 = vpack.c.b16 %v2437, %v2421
    %v2486 = vpack.c.b16 %v2438, %v2422
    %v2487 = vpack.c.b16 %v2439, %v2423
    %v2488 = vpack.c.b16 %v2440, %v2424
    %v2489 = vpack.c.b16 %v2441, %v2425
    %v2490 = vpack.c.b16 %v2442, %v2426
    %v2491 = vpack.c.b16 %v2443, %v2427
    %v2492 = vpack.c.b16 %v2460, %v2444
    %v2493 = vpack.c.b16 %v2461, %v2445
    %v2494 = vpack.c.b16 %v2462, %v2446
    %v2495 = vpack.c.b16 %v2463, %v2447
    %v2496 = vpack.c.b16 %v2464, %v2448
    %v2497 = vpack.c.b16 %v2465, %v2449
    %v2498 = vpack.c.b16 %v2466, %v2450
    %v2499 = vpack.c.b16 %v2467, %v2451
    %v2500 = vpack.c.b16 %v2468, %v2452
    %v2501 = vpack.c.b16 %v2469, %v2453
    %v2502 = vpack.c.b16 %v2470, %v2454
    %v2503 = vpack.c.b16 %v2471, %v2455
    %v2504 = vpack.c.b16 %v2472, %v2456
    %v2505 = vpack.c.b16 %v2473, %v2457
    %v2506 = vpack.c.b16 %v2474, %v2458
    %v2507 = vpack.c.b16 %v2475, %v2459
    %v2541 = vsel %vm69, %v2264, 0
    %v2544 = vsel %vm69, %v2265, 0
    %2546 = vmatprep.subr.bf16.mxu0 %v2477
    %2547 = vmatpush1.bf16.msra.mxu0 %v2476
    %2548 = vmatprep.subr.bf16.mxu0 %v2493
    %2549 = vmatpush1.bf16.msra.mxu0 %v2492
    %2550 = vmatprep.subr.bf16.mxu0 0
    %2551 = vmatpush1.bf16.msra.mxu0 0
    %2552 = vmatprep.subr.bf16.mxu0 0
    %2553 = vmatpush1.bf16.msra.mxu0 0
    %2554 = vmatprep.subr.bf16.mxu0 0
    %2555 = vmatpush1.bf16.msra.mxu0 0
    %2556 = vmatprep.subr.bf16.mxu0 0
    %2557 = vmatpush1.bf16.msra.mxu0 0
    %2558 = vmatprep.subr.bf16.mxu0 0
    %2559 = vmatpush1.bf16.msra.mxu0 0
    %2560 = vmatprep.subr.bf16.mxu0 0
    %2561 = vmatpush1.bf16.msra.mxu0 0
    %2562 = vmatprep.subr.bf16.mxu0 0
    %2563 = vmatpush1.bf16.msra.mxu0 0
    %2564 = vmatprep.subr.bf16.mxu0 0
    %2565 = vmatpush1.bf16.msra.mxu0 0
    %2566 = vmatprep.subr.bf16.mxu0 0
    %2567 = vmatpush1.bf16.msra.mxu0 0
    %2568 = vmatprep.subr.bf16.mxu0 0
    %2569 = vmatpush1.bf16.msra.mxu0 0
    %2570 = vmatprep.subr.bf16.mxu0 0
    %2571 = vmatpush1.bf16.msra.mxu0 0
    %2572 = vmatprep.subr.bf16.mxu0 0
    %2573 = vmatpush1.bf16.msra.mxu0 0
    %2574 = vmatprep.subr.bf16.mxu0 0
    %2575 = vmatpush1.bf16.msra.mxu0 0
    %2576 = vmatprep.subr.bf16.mxu0 0
    %2577 = vmatpush1.bf16.msra.mxu0 0
    %2578 = vmatprep.mubr.bf16.mxu0 0
    %2579 = vmatmul.mubr.bf16.gmra.mrb[0].mxu0 %v2541
    %v2580 = vpop.f32.mrb[0].mxu0
    %v2581 = vadd.f32 %v2303, %v2580
    %v2582 = vpop.f32.mrb[0].mxu0
    %v2583 = vadd.f32 %v2307, %v2582
    %v2584 = vpop.f32.mrb[0].mxu0
    %v2585 = vadd.f32 %v2303, %v2584
    %v2586 = vpop.f32.mrb[0].mxu0
    %v2587 = vadd.f32 %v2307, %v2586
    %2588 = vmatprep.mubr.bf16.mxu0 0
    %2589 = vmatmul.mubr.bf16.gmra.mrb[0].mxu0 %v2544
    %v2590 = vpop.f32.mrb[0].mxu0
    %v2591 = vadd.f32 %v2303, %v2590
    %v2592 = vpop.f32.mrb[0].mxu0
    %v2593 = vadd.f32 %v2307, %v2592
    %v2594 = vpop.f32.mrb[0].mxu0
    %v2595 = vadd.f32 %v2303, %v2594
    %v2596 = vpop.f32.mrb[0].mxu0
    %v2597 = vadd.f32 %v2307, %v2596
    %2598 = vdwg.mxu0
    %2599 = vmatprep.subr.bf16.mxu0 %v2479
    %2600 = vmatpush1.bf16.msra.mxu0 %v2478
    %2601 = vmatprep.subr.bf16.mxu0 %v2495
    %2602 = vmatpush1.bf16.msra.mxu0 %v2494
    %2603 = vmatprep.subr.bf16.mxu0 0
    %2604 = vmatpush1.bf16.msra.mxu0 0
    %2605 = vmatprep.subr.bf16.mxu0 0
    %2606 = vmatpush1.bf16.msra.mxu0 0
    %2607 = vmatprep.subr.bf16.mxu0 0
    %2608 = vmatpush1.bf16.msra.mxu0 0
    %2609 = vmatprep.subr.bf16.mxu0 0
    %2610 = vmatpush1.bf16.msra.mxu0 0
    %2611 = vmatprep.subr.bf16.mxu0 0
    %2612 = vmatpush1.bf16.msra.mxu0 0
    %2613 = vmatprep.subr.bf16.mxu0 0
    %2614 = vmatpush1.bf16.msra.mxu0 0
    %2615 = vmatprep.subr.bf16.mxu0 0
    %2616 = vmatpush1.bf16.msra.mxu0 0
    %2617 = vmatprep.subr.bf16.mxu0 0
    %2618 = vmatpush1.bf16.msra.mxu0 0
    %2619 = vmatprep.subr.bf16.mxu0 0
    %2620 = vmatpush1.bf16.msra.mxu0 0
    %2621 = vmatprep.subr.bf16.mxu0 0
    %2622 = vmatpush1.bf16.msra.mxu0 0
    %2623 = vmatprep.subr.bf16.mxu0 0
    %2624 = vmatpush1.bf16.msra.mxu0 0
    %2625 = vmatprep.subr.bf16.mxu0 0
    %2626 = vmatpush1.bf16.msra.mxu0 0
    %2627 = vmatprep.subr.bf16.mxu0 0
    %2628 = vmatpush1.bf16.msra.mxu0 0
    %2629 = vmatprep.subr.bf16.mxu0 0
    %2630 = vmatpush1.bf16.msra.mxu0 0
    %2631 = vmatprep.mubr.bf16.mxu0 0
    %2632 = vmatmul.mubr.bf16.gmra.mrb[0].mxu0 %v2541
    %v2633 = vpop.f32.mrb[0].mxu0
    %v2634 = vadd.f32 %v2311, %v2633
    %v2635 = vpop.f32.mrb[0].mxu0
    %v2636 = vadd.f32 %v2315, %v2635
    %v2637 = vpop.f32.mrb[0].mxu0
    %v2638 = vadd.f32 %v2311, %v2637
    %v2639 = vpop.f32.mrb[0].mxu0
    %v2640 = vadd.f32 %v2315, %v2639
    %2641 = vmatprep.mubr.bf16.mxu0 0
    %2642 = vmatmul.mubr.bf16.gmra.mrb[0].mxu0 %v2544
    %v2643 = vpop.f32.mrb[0].mxu0
    %v2644 = vadd.f32 %v2311, %v2643
    %v2645 = vpop.f32.mrb[0].mxu0
    %v2646 = vadd.f32 %v2315, %v2645
    %v2647 = vpop.f32.mrb[0].mxu0
    %v2648 = vadd.f32 %v2311, %v2647
    %v2649 = vpop.f32.mrb[0].mxu0
    %v2650 = vadd.f32 %v2315, %v2649
    %2651 = vdwg.mxu0
    %2652 = vmatprep.subr.bf16.mxu0 %v2481
    %2653 = vmatpush1.bf16.msra.mxu0 %v2480
    %2654 = vmatprep.subr.bf16.mxu0 %v2497
    %2655 = vmatpush1.bf16.msra.mxu0 %v2496
    %2656 = vmatprep.subr.bf16.mxu0 0
    %2657 = vmatpush1.bf16.msra.mxu0 0
    %2658 = vmatprep.subr.bf16.mxu0 0
    %2659 = vmatpush1.bf16.msra.mxu0 0
    %2660 = vmatprep.subr.bf16.mxu0 0
    %2661 = vmatpush1.bf16.msra.mxu0 0
    %2662 = vmatprep.subr.bf16.mxu0 0
    %2663 = vmatpush1.bf16.msra.mxu0 0
    %2664 = vmatprep.subr.bf16.mxu0 0
    %2665 = vmatpush1.bf16.msra.mxu0 0
    %2666 = vmatprep.subr.bf16.mxu0 0
    %2667 = vmatpush1.bf16.msra.mxu0 0
    %2668 = vmatprep.subr.bf16.mxu0 0
    %2669 = vmatpush1.bf16.msra.mxu0 0
    %2670 = vmatprep.subr.bf16.mxu0 0
    %2671 = vmatpush1.bf16.msra.mxu0 0
    %2672 = vmatprep.subr.bf16.mxu0 0
    %2673 = vmatpush1.bf16.msra.mxu0 0
    %2674 = vmatprep.subr.bf16.mxu0 0
    %2675 = vmatpush1.bf16.msra.mxu0 0
    %2676 = vmatprep.subr.bf16.mxu0 0
    %2677 = vmatpush1.bf16.msra.mxu0 0
    %2678 = vmatprep.subr.bf16.mxu0 0
    %2679 = vmatpush1.bf16.msra.mxu0 0
    %2680 = vmatprep.subr.bf16.mxu0 0
    %2681 = vmatpush1.bf16.msra.mxu0 0
    %2682 = vmatprep.subr.bf16.mxu0 0
    %2683 = vmatpush1.bf16.msra.mxu0 0
    %2684 = vmatprep.mubr.bf16.mxu0 0
    %2685 = vmatmul.mubr.bf16.gmra.mrb[0].mxu0 %v2541
    %v2686 = vpop.f32.mrb[0].mxu0
    %v2687 = vadd.f32 %v2319, %v2686
    %v2688 = vpop.f32.mrb[0].mxu0
    %v2689 = vadd.f32 %v2323, %v2688
    %v2690 = vpop.f32.mrb[0].mxu0
    %v2691 = vadd.f32 %v2319, %v2690
    %v2692 = vpop.f32.mrb[0].mxu0
    %v2693 = vadd.f32 %v2323, %v2692
    %2694 = vmatprep.mubr.bf16.mxu0 0
    %2695 = vmatmul.mubr.bf16.gmra.mrb[0].mxu0 %v2544
    %v2696 = vpop.f32.mrb[0].mxu0
    %v2697 = vadd.f32 %v2319, %v2696
    %v2698 = vpop.f32.mrb[0].mxu0
    %v2699 = vadd.f32 %v2323, %v2698
    %v2700 = vpop.f32.mrb[0].mxu0
    %v2701 = vadd.f32 %v2319, %v2700
    %v2702 = vpop.f32.mrb[0].mxu0
    %v2703 = vadd.f32 %v2323, %v2702
    %2704 = vdwg.mxu0
    %2705 = vmatprep.subr.bf16.mxu0 %v2483
    %2706 = vmatpush1.bf16.msra.mxu0 %v2482
    %2707 = vmatprep.subr.bf16.mxu0 %v2499
    %2708 = vmatpush1.bf16.msra.mxu0 %v2498
    %2709 = vmatprep.subr.bf16.mxu0 0
    %2710 = vmatpush1.bf16.msra.mxu0 0
    %2711 = vmatprep.subr.bf16.mxu0 0
    %2712 = vmatpush1.bf16.msra.mxu0 0
    %2713 = vmatprep.subr.bf16.mxu0 0
    %2714 = vmatpush1.bf16.msra.mxu0 0
    %2715 = vmatprep.subr.bf16.mxu0 0
    %2716 = vmatpush1.bf16.msra.mxu0 0
    %2717 = vmatprep.subr.bf16.mxu0 0
    %2718 = vmatpush1.bf16.msra.mxu0 0
    %2719 = vmatprep.subr.bf16.mxu0 0
    %2720 = vmatpush1.bf16.msra.mxu0 0
    %2721 = vmatprep.subr.bf16.mxu0 0
    %2722 = vmatpush1.bf16.msra.mxu0 0
    %2723 = vmatprep.subr.bf16.mxu0 0
    %2724 = vmatpush1.bf16.msra.mxu0 0
    %2725 = vmatprep.subr.bf16.mxu0 0
    %2726 = vmatpush1.bf16.msra.mxu0 0
    %2727 = vmatprep.subr.bf16.mxu0 0
    %2728 = vmatpush1.bf16.msra.mxu0 0
    %2729 = vmatprep.subr.bf16.mxu0 0
    %2730 = vmatpush1.bf16.msra.mxu0 0
    %2731 = vmatprep.subr.bf16.mxu0 0
    %2732 = vmatpush1.bf16.msra.mxu0 0
    %2733 = vmatprep.subr.bf16.mxu0 0
    %2734 = vmatpush1.bf16.msra.mxu0 0
    %2735 = vmatprep.subr.bf16.mxu0 0
    %2736 = vmatpush1.bf16.msra.mxu0 0
    %2737 = vmatprep.mubr.bf16.mxu0 0
    %2738 = vmatmul.mubr.bf16.gmra.mrb[0].mxu0 %v2541
    %v2739 = vpop.f32.mrb[0].mxu0
    %v2740 = vadd.f32 %v2327, %v2739
    %v2741 = vpop.f32.mrb[0].mxu0
    %v2742 = vadd.f32 %v2331, %v2741
    %v2743 = vpop.f32.mrb[0].mxu0
    %v2744 = vadd.f32 %v2327, %v2743
    %v2745 = vpop.f32.mrb[0].mxu0
    %v2746 = vadd.f32 %v2331, %v2745
    %2747 = vmatprep.mubr.bf16.mxu0 0
    %2748 = vmatmul.mubr.bf16.gmra.mrb[0].mxu0 %v2544
    %v2749 = vpop.f32.mrb[0].mxu0
    %v2750 = vadd.f32 %v2327, %v2749
    %v2751 = vpop.f32.mrb[0].mxu0
    %v2752 = vadd.f32 %v2331, %v2751
    %v2753 = vpop.f32.mrb[0].mxu0
    %v2754 = vadd.f32 %v2327, %v2753
    %v2755 = vpop.f32.mrb[0].mxu0
    %v2756 = vadd.f32 %v2331, %v2755
    %2757 = vdwg.mxu0
    %2758 = vmatprep.subr.bf16.mxu0 %v2485
    %2759 = vmatpush1.bf16.msra.mxu0 %v2484
    %2760 = vmatprep.subr.bf16.mxu0 %v2501
    %2761 = vmatpush1.bf16.msra.mxu0 %v2500
    %2762 = vmatprep.subr.bf16.mxu0 0
    %2763 = vmatpush1.bf16.msra.mxu0 0
    %2764 = vmatprep.subr.bf16.mxu0 0
    %2765 = vmatpush1.bf16.msra.mxu0 0
    %2766 = vmatprep.subr.bf16.mxu0 0
    %2767 = vmatpush1.bf16.msra.mxu0 0
    %2768 = vmatprep.subr.bf16.mxu0 0
    %2769 = vmatpush1.bf16.msra.mxu0 0
    %2770 = vmatprep.subr.bf16.mxu0 0
    %2771 = vmatpush1.bf16.msra.mxu0 0
    %2772 = vmatprep.subr.bf16.mxu0 0
    %2773 = vmatpush1.bf16.msra.mxu0 0
    %2774 = vmatprep.subr.bf16.mxu0 0
    %2775 = vmatpush1.bf16.msra.mxu0 0
    %2776 = vmatprep.subr.bf16.mxu0 0
    %2777 = vmatpush1.bf16.msra.mxu0 0
    %2778 = vmatprep.subr.bf16.mxu0 0
    %2779 = vmatpush1.bf16.msra.mxu0 0
    %2780 = vmatprep.subr.bf16.mxu0 0
    %2781 = vmatpush1.bf16.msra.mxu0 0
    %2782 = vmatprep.subr.bf16.mxu0 0
    %2783 = vmatpush1.bf16.msra.mxu0 0
    %2784 = vmatprep.subr.bf16.mxu0 0
    %2785 = vmatpush1.bf16.msra.mxu0 0
    %2786 = vmatprep.subr.bf16.mxu0 0
    %2787 = vmatpush1.bf16.msra.mxu0 0
    %2788 = vmatprep.subr.bf16.mxu0 0
    %2789 = vmatpush1.bf16.msra.mxu0 0
    %2790 = vmatprep.mubr.bf16.mxu0 0
    %2791 = vmatmul.mubr.bf16.gmra.mrb[0].mxu0 %v2541
    %v2792 = vpop.f32.mrb[0].mxu0
    %v2793 = vadd.f32 %v2335, %v2792
    %v2794 = vpop.f32.mrb[0].mxu0
    %v2795 = vadd.f32 %v2339, %v2794
    %v2796 = vpop.f32.mrb[0].mxu0
    %v2797 = vadd.f32 %v2335, %v2796
    %v2798 = vpop.f32.mrb[0].mxu0
    %v2799 = vadd.f32 %v2339, %v2798
    %2800 = vmatprep.mubr.bf16.mxu0 0
    %2801 = vmatmul.mubr.bf16.gmra.mrb[0].mxu0 %v2544
    %v2802 = vpop.f32.mrb[0].mxu0
    %v2803 = vadd.f32 %v2335, %v2802
    %v2804 = vpop.f32.mrb[0].mxu0
    %v2805 = vadd.f32 %v2339, %v2804
    %v2806 = vpop.f32.mrb[0].mxu0
    %v2807 = vadd.f32 %v2335, %v2806
    %v2808 = vpop.f32.mrb[0].mxu0
    %v2809 = vadd.f32 %v2339, %v2808
    %2810 = vdwg.mxu0
    %2811 = vmatprep.subr.bf16.mxu0 %v2487
    %2812 = vmatpush1.bf16.msra.mxu0 %v2486
    %2813 = vmatprep.subr.bf16.mxu0 %v2503
    %2814 = vmatpush1.bf16.msra.mxu0 %v2502
    %2815 = vmatprep.subr.bf16.mxu0 0
    %2816 = vmatpush1.bf16.msra.mxu0 0
    %2817 = vmatprep.subr.bf16.mxu0 0
    %2818 = vmatpush1.bf16.msra.mxu0 0
    %2819 = vmatprep.subr.bf16.mxu0 0
    %2820 = vmatpush1.bf16.msra.mxu0 0
    %2821 = vmatprep.subr.bf16.mxu0 0
    %2822 = vmatpush1.bf16.msra.mxu0 0
    %2823 = vmatprep.subr.bf16.mxu0 0
    %2824 = vmatpush1.bf16.msra.mxu0 0
    %2825 = vmatprep.subr.bf16.mxu0 0
    %2826 = vmatpush1.bf16.msra.mxu0 0
    %2827 = vmatprep.subr.bf16.mxu0 0
    %2828 = vmatpush1.bf16.msra.mxu0 0
    %2829 = vmatprep.subr.bf16.mxu0 0
    %2830 = vmatpush1.bf16.msra.mxu0 0
    %2831 = vmatprep.subr.bf16.mxu0 0
    %2832 = vmatpush1.bf16.msra.mxu0 0
    %2833 = vmatprep.subr.bf16.mxu0 0
    %2834 = vmatpush1.bf16.msra.mxu0 0
    %2835 = vmatprep.subr.bf16.mxu0 0
    %2836 = vmatpush1.bf16.msra.mxu0 0
    %2837 = vmatprep.subr.bf16.mxu0 0
    %2838 = vmatpush1.bf16.msra.mxu0 0
    %2839 = vmatprep.subr.bf16.mxu0 0
    %2840 = vmatpush1.bf16.msra.mxu0 0
    %2841 = vmatprep.subr.bf16.mxu0 0
    %2842 = vmatpush1.bf16.msra.mxu0 0
    %2843 = vmatprep.mubr.bf16.mxu0 0
    %2844 = vmatmul.mubr.bf16.gmra.mrb[0].mxu0 %v2541
    %v2845 = vpop.f32.mrb[0].mxu0
    %v2846 = vadd.f32 %v2343, %v2845
    %v2847 = vpop.f32.mrb[0].mxu0
    %v2848 = vadd.f32 %v2347, %v2847
    %v2849 = vpop.f32.mrb[0].mxu0
    %v2850 = vadd.f32 %v2343, %v2849
    %v2851 = vpop.f32.mrb[0].mxu0
    %v2852 = vadd.f32 %v2347, %v2851
    %2853 = vmatprep.mubr.bf16.mxu0 0
    %2854 = vmatmul.mubr.bf16.gmra.mrb[0].mxu0 %v2544
    %v2855 = vpop.f32.mrb[0].mxu0
    %v2856 = vadd.f32 %v2343, %v2855
    %v2857 = vpop.f32.mrb[0].mxu0
    %v2858 = vadd.f32 %v2347, %v2857
    %v2859 = vpop.f32.mrb[0].mxu0
    %v2860 = vadd.f32 %v2343, %v2859
    %v2861 = vpop.f32.mrb[0].mxu0
    %v2862 = vadd.f32 %v2347, %v2861
    %2863 = vdwg.mxu0
    %2864 = vmatprep.subr.bf16.mxu0 %v2489
    %2865 = vmatpush1.bf16.msra.mxu0 %v2488
    %2866 = vmatprep.subr.bf16.mxu0 %v2505
    %2867 = vmatpush1.bf16.msra.mxu0 %v2504
    %2868 = vmatprep.subr.bf16.mxu0 0
    %2869 = vmatpush1.bf16.msra.mxu0 0
    %2870 = vmatprep.subr.bf16.mxu0 0
    %2871 = vmatpush1.bf16.msra.mxu0 0
    %2872 = vmatprep.subr.bf16.mxu0 0
    %2873 = vmatpush1.bf16.msra.mxu0 0
    %2874 = vmatprep.subr.bf16.mxu0 0
    %2875 = vmatpush1.bf16.msra.mxu0 0
    %2876 = vmatprep.subr.bf16.mxu0 0
    %2877 = vmatpush1.bf16.msra.mxu0 0
    %2878 = vmatprep.subr.bf16.mxu0 0
    %2879 = vmatpush1.bf16.msra.mxu0 0
    %2880 = vmatprep.subr.bf16.mxu0 0
    %2881 = vmatpush1.bf16.msra.mxu0 0
    %2882 = vmatprep.subr.bf16.mxu0 0
    %2883 = vmatpush1.bf16.msra.mxu0 0
    %2884 = vmatprep.subr.bf16.mxu0 0
    %2885 = vmatpush1.bf16.msra.mxu0 0
    %2886 = vmatprep.subr.bf16.mxu0 0
    %2887 = vmatpush1.bf16.msra.mxu0 0
    %2888 = vmatprep.subr.bf16.mxu0 0
    %2889 = vmatpush1.bf16.msra.mxu0 0
    %2890 = vmatprep.subr.bf16.mxu0 0
    %2891 = vmatpush1.bf16.msra.mxu0 0
    %2892 = vmatprep.subr.bf16.mxu0 0
    %2893 = vmatpush1.bf16.msra.mxu0 0
    %2894 = vmatprep.subr.bf16.mxu0 0
    %2895 = vmatpush1.bf16.msra.mxu0 0
    %2896 = vmatprep.mubr.bf16.mxu0 0
    %2897 = vmatmul.mubr.bf16.gmra.mrb[0].mxu0 %v2541
    %v2898 = vpop.f32.mrb[0].mxu0
    %v2899 = vadd.f32 %v2351, %v2898
    %v2900 = vpop.f32.mrb[0].mxu0
    %v2901 = vadd.f32 %v2355, %v2900
    %v2902 = vpop.f32.mrb[0].mxu0
    %v2903 = vadd.f32 %v2351, %v2902
    %v2904 = vpop.f32.mrb[0].mxu0
    %v2905 = vadd.f32 %v2355, %v2904
    %2906 = vmatprep.mubr.bf16.mxu0 0
    %2907 = vmatmul.mubr.bf16.gmra.mrb[0].mxu0 %v2544
    %v2908 = vpop.f32.mrb[0].mxu0
    %v2909 = vadd.f32 %v2351, %v2908
    %v2910 = vpop.f32.mrb[0].mxu0
    %v2911 = vadd.f32 %v2355, %v2910
    %v2912 = vpop.f32.mrb[0].mxu0
    %v2913 = vadd.f32 %v2351, %v2912
    %v2914 = vpop.f32.mrb[0].mxu0
    %v2915 = vadd.f32 %v2355, %v2914
    %2916 = vdwg.mxu0
    %2917 = vmatprep.subr.bf16.mxu0 %v2491
    %2918 = vmatpush1.bf16.msra.mxu0 %v2490
    %2919 = vmatprep.subr.bf16.mxu0 %v2507
    %2920 = vmatpush1.bf16.msra.mxu0 %v2506
    %2921 = vmatprep.subr.bf16.mxu0 0
    %2922 = vmatpush1.bf16.msra.mxu0 0
    %2923 = vmatprep.subr.bf16.mxu0 0
    %2924 = vmatpush1.bf16.msra.mxu0 0
    %2925 = vmatprep.subr.bf16.mxu0 0
    %2926 = vmatpush1.bf16.msra.mxu0 0
    %2927 = vmatprep.subr.bf16.mxu0 0
    %2928 = vmatpush1.bf16.msra.mxu0 0
    %2929 = vmatprep.subr.bf16.mxu0 0
    %2930 = vmatpush1.bf16.msra.mxu0 0
    %2931 = vmatprep.subr.bf16.mxu0 0
    %2932 = vmatpush1.bf16.msra.mxu0 0
    %2933 = vmatprep.subr.bf16.mxu0 0
    %2934 = vmatpush1.bf16.msra.mxu0 0
    %2935 = vmatprep.subr.bf16.mxu0 0
    %2936 = vmatpush1.bf16.msra.mxu0 0
    %2937 = vmatprep.subr.bf16.mxu0 0
    %2938 = vmatpush1.bf16.msra.mxu0 0
    %2939 = vmatprep.subr.bf16.mxu0 0
    %2940 = vmatpush1.bf16.msra.mxu0 0
    %2941 = vmatprep.subr.bf16.mxu0 0
    %2942 = vmatpush1.bf16.msra.mxu0 0
    %2943 = vmatprep.subr.bf16.mxu0 0
    %2944 = vmatpush1.bf16.msra.mxu0 0
    %2945 = vmatprep.subr.bf16.mxu0 0
    %2946 = vmatpush1.bf16.msra.mxu0 0
    %2947 = vmatprep.subr.bf16.mxu0 0
    %2948 = vmatpush1.bf16.msra.mxu0 0
    %2949 = vmatprep.mubr.bf16.mxu0 0
    %2950 = vmatmul.mubr.bf16.gmra.mrb[0].mxu0 %v2541
    %v2951 = vpop.f32.mrb[0].mxu0
    %v2952 = vadd.f32 %v2359, %v2951
    %v2953 = vpop.f32.mrb[0].mxu0
    %v2954 = vadd.f32 %v2363, %v2953
    %v2955 = vpop.f32.mrb[0].mxu0
    %v2956 = vadd.f32 %v2359, %v2955
    %v2957 = vpop.f32.mrb[0].mxu0
    %v2958 = vadd.f32 %v2363, %v2957
    %2959 = vmatprep.mubr.bf16.mxu0 0
    %2960 = vmatmul.mubr.bf16.gmra.mrb[0].mxu0 %v2544
    %v2961 = vpop.f32.mrb[0].mxu0
    %v2962 = vadd.f32 %v2359, %v2961
    %v2963 = vpop.f32.mrb[0].mxu0
    %v2964 = vadd.f32 %v2363, %v2963
    %v2965 = vpop.f32.mrb[0].mxu0
    %v2966 = vadd.f32 %v2359, %v2965
    %v2967 = vpop.f32.mrb[0].mxu0
    %v2968 = vadd.f32 %v2363, %v2967
    %2969 = vdwg.mxu0
    %vm2970 = vcmp.gt.f32.partialorder %v2581, 0.0
    %vm2971 = vcmp.gt.f32.partialorder %v2583, 0.0
    %vm2972 = vcmp.gt.f32.partialorder %v2634, 0.0
    %vm2973 = vcmp.gt.f32.partialorder %v2636, 0.0
    %vm2974 = vcmp.gt.f32.partialorder %v2687, 0.0
    %vm2975 = vcmp.gt.f32.partialorder %v2689, 0.0
    %vm2976 = vcmp.gt.f32.partialorder %v2740, 0.0
    %vm2977 = vcmp.gt.f32.partialorder %v2742, 0.0
    %vm2978 = vcmp.gt.f32.partialorder %v2793, 0.0
    %vm2979 = vcmp.gt.f32.partialorder %v2795, 0.0
    %vm2980 = vcmp.gt.f32.partialorder %v2846, 0.0
    %vm2981 = vcmp.gt.f32.partialorder %v2848, 0.0
    %vm2982 = vcmp.gt.f32.partialorder %v2899, 0.0
    %vm2983 = vcmp.gt.f32.partialorder %v2901, 0.0
    %vm2984 = vcmp.gt.f32.partialorder %v2952, 0.0
    %vm2985 = vcmp.gt.f32.partialorder %v2954, 0.0
    %vm2986 = vcmp.gt.f32.partialorder %v2585, 0.0
    %vm2987 = vcmp.gt.f32.partialorder %v2587, 0.0
    %vm2988 = vcmp.gt.f32.partialorder %v2638, 0.0
    %vm2989 = vcmp.gt.f32.partialorder %v2640, 0.0
    %vm2990 = vcmp.gt.f32.partialorder %v2691, 0.0
    %vm2991 = vcmp.gt.f32.partialorder %v2693, 0.0
    %vm2992 = vcmp.gt.f32.partialorder %v2744, 0.0
    %vm2993 = vcmp.gt.f32.partialorder %v2746, 0.0
    %vm2994 = vcmp.gt.f32.partialorder %v2797, 0.0
    %vm2995 = vcmp.gt.f32.partialorder %v2799, 0.0
    %vm2996 = vcmp.gt.f32.partialorder %v2850, 0.0
    %vm2997 = vcmp.gt.f32.partialorder %v2852, 0.0
    %vm2998 = vcmp.gt.f32.partialorder %v2903, 0.0
    %vm2999 = vcmp.gt.f32.partialorder %v2905, 0.0
    %vm3000 = vcmp.gt.f32.partialorder %v2956, 0.0
    %vm3001 = vcmp.gt.f32.partialorder %v2958, 0.0
    %vm3002 = vcmp.gt.f32.partialorder %v2591, 0.0
    %vm3003 = vcmp.gt.f32.partialorder %v2593, 0.0
    %vm3004 = vcmp.gt.f32.partialorder %v2644, 0.0
    %vm3005 = vcmp.gt.f32.partialorder %v2646, 0.0
    %vm3006 = vcmp.gt.f32.partialorder %v2697, 0.0
    %vm3007 = vcmp.gt.f32.partialorder %v2699, 0.0
    %vm3008 = vcmp.gt.f32.partialorder %v2750, 0.0
    %vm3009 = vcmp.gt.f32.partialorder %v2752, 0.0
    %vm3010 = vcmp.gt.f32.partialorder %v2803, 0.0
    %vm3011 = vcmp.gt.f32.partialorder %v2805, 0.0
    %vm3012 = vcmp.gt.f32.partialorder %v2856, 0.0
    %vm3013 = vcmp.gt.f32.partialorder %v2858, 0.0
    %vm3014 = vcmp.gt.f32.partialorder %v2909, 0.0
    %vm3015 = vcmp.gt.f32.partialorder %v2911, 0.0
    %vm3016 = vcmp.gt.f32.partialorder %v2962, 0.0
    %vm3017 = vcmp.gt.f32.partialorder %v2964, 0.0
    %vm3018 = vcmp.gt.f32.partialorder %v2595, 0.0
    %vm3019 = vcmp.gt.f32.partialorder %v2597, 0.0
    %vm3020 = vcmp.gt.f32.partialorder %v2648, 0.0
    %vm3021 = vcmp.gt.f32.partialorder %v2650, 0.0
    %vm3022 = vcmp.gt.f32.partialorder %v2701, 0.0
    %vm3023 = vcmp.gt.f32.partialorder %v2703, 0.0
    %vm3024 = vcmp.gt.f32.partialorder %v2754, 0.0
    %vm3025 = vcmp.gt.f32.partialorder %v2756, 0.0
    %vm3026 = vcmp.gt.f32.partialorder %v2807, 0.0
    %vm3027 = vcmp.gt.f32.partialorder %v2809, 0.0
    %vm3028 = vcmp.gt.f32.partialorder %v2860, 0.0
    %vm3029 = vcmp.gt.f32.partialorder %v2862, 0.0
    %vm3030 = vcmp.gt.f32.partialorder %v2913, 0.0
    %vm3031 = vcmp.gt.f32.partialorder %v2915, 0.0
    %vm3032 = vcmp.gt.f32.partialorder %v2966, 0.0
    %vm3033 = vcmp.gt.f32.partialorder %v2968, 0.0
    %v3034 = vmul.f32 %v2581, 0.2
    %v3035 = vmul.f32 %v2583, 0.2
    %v3036 = vmul.f32 %v2634, 0.2
    %v3037 = vmul.f32 %v2636, 0.2
    %v3038 = vmul.f32 %v2687, 0.2
    %v3039 = vmul.f32 %v2689, 0.2
    %v3040 = vmul.f32 %v2740, 0.2
    %v3041 = vmul.f32 %v2742, 0.2
    %v3042 = vmul.f32 %v2793, 0.2
    %v3043 = vmul.f32 %v2795, 0.2
    %v3044 = vmul.f32 %v2846, 0.2
    %v3045 = vmul.f32 %v2848, 0.2
    %v3046 = vmul.f32 %v2899, 0.2
    %v3047 = vmul.f32 %v2901, 0.2
    %v3048 = vmul.f32 %v2952, 0.2
    %v3049 = vmul.f32 %v2954, 0.2
    %v3050 = vmul.f32 %v2585, 0.2
    %v3051 = vmul.f32 %v2587, 0.2
    %v3052 = vmul.f32 %v2638, 0.2
    %v3053 = vmul.f32 %v2640, 0.2
    %v3054 = vmul.f32 %v2691, 0.2
    %v3055 = vmul.f32 %v2693, 0.2
    %v3056 = vmul.f32 %v2744, 0.2
    %v3057 = vmul.f32 %v2746, 0.2
    %v3058 = vmul.f32 %v2797, 0.2
    %v3059 = vmul.f32 %v2799, 0.2
    %v3060 = vmul.f32 %v2850, 0.2
    %v3061 = vmul.f32 %v2852, 0.2
    %v3062 = vmul.f32 %v2903, 0.2
    %v3063 = vmul.f32 %v2905, 0.2
    %v3064 = vmul.f32 %v2956, 0.2
    %v3065 = vmul.f32 %v2958, 0.2
    %v3066 = vmul.f32 %v2591, 0.2
    %v3067 = vmul.f32 %v2593, 0.2
    %v3068 = vmul.f32 %v2644, 0.2
    %v3069 = vmul.f32 %v2646, 0.2
    %v3070 = vmul.f32 %v2697, 0.2
    %v3071 = vmul.f32 %v2699, 0.2
    %v3072 = vmul.f32 %v2750, 0.2
    %v3073 = vmul.f32 %v2752, 0.2
    %v3074 = vmul.f32 %v2803, 0.2
    %v3075 = vmul.f32 %v2805, 0.2
    %v3076 = vmul.f32 %v2856, 0.2
    %v3077 = vmul.f32 %v2858, 0.2
    %v3078 = vmul.f32 %v2909, 0.2
    %v3079 = vmul.f32 %v2911, 0.2
    %v3080 = vmul.f32 %v2962, 0.2
    %v3081 = vmul.f32 %v2964, 0.2
    %v3082 = vmul.f32 %v2595, 0.2
    %v3083 = vmul.f32 %v2597, 0.2
    %v3084 = vmul.f32 %v2648, 0.2
    %v3085 = vmul.f32 %v2650, 0.2
    %v3086 = vmul.f32 %v2701, 0.2
    %v3087 = vmul.f32 %v2703, 0.2
    %v3088 = vmul.f32 %v2754, 0.2
    %v3089 = vmul.f32 %v2756, 0.2
    %v3090 = vmul.f32 %v2807, 0.2
    %v3091 = vmul.f32 %v2809, 0.2
    %v3092 = vmul.f32 %v2860, 0.2
    %v3093 = vmul.f32 %v2862, 0.2
    %v3094 = vmul.f32 %v2913, 0.2
    %v3095 = vmul.f32 %v2915, 0.2
    %v3096 = vmul.f32 %v2966, 0.2
    %v3097 = vmul.f32 %v2968, 0.2
    %v3098 = vsel %vm2970, %v2581, %v3034
    %v3099 = vsel %vm2971, %v2583, %v3035
    %v3100 = vsel %vm2972, %v2634, %v3036
    %v3101 = vsel %vm2973, %v2636, %v3037
    %v3102 = vsel %vm2974, %v2687, %v3038
    %v3103 = vsel %vm2975, %v2689, %v3039
    %v3104 = vsel %vm2976, %v2740, %v3040
    %v3105 = vsel %vm2977, %v2742, %v3041
    %v3106 = vsel %vm2978, %v2793, %v3042
    %v3107 = vsel %vm2979, %v2795, %v3043
    %v3108 = vsel %vm2980, %v2846, %v3044
    %v3109 = vsel %vm2981, %v2848, %v3045
    %v3110 = vsel %vm2982, %v2899, %v3046
    %v3111 = vsel %vm2983, %v2901, %v3047
    %v3112 = vsel %vm2984, %v2952, %v3048
    %v3113 = vsel %vm2985, %v2954, %v3049
    %v3114 = vsel %vm2986, %v2585, %v3050
    %v3115 = vsel %vm2987, %v2587, %v3051
    %v3116 = vsel %vm2988, %v2638, %v3052
    %v3117 = vsel %vm2989, %v2640, %v3053
    %v3118 = vsel %vm2990, %v2691, %v3054
    %v3119 = vsel %vm2991, %v2693, %v3055
    %v3120 = vsel %vm2992, %v2744, %v3056
    %v3121 = vsel %vm2993, %v2746, %v3057
    %v3122 = vsel %vm2994, %v2797, %v3058
    %v3123 = vsel %vm2995, %v2799, %v3059
    %v3124 = vsel %vm2996, %v2850, %v3060
    %v3125 = vsel %vm2997, %v2852, %v3061
    %v3126 = vsel %vm2998, %v2903, %v3062
    %v3127 = vsel %vm2999, %v2905, %v3063
    %v3128 = vsel %vm3000, %v2956, %v3064
    %v3129 = vsel %vm3001, %v2958, %v3065
    %v3130 = vsel %vm3002, %v2591, %v3066
    %v3131 = vsel %vm3003, %v2593, %v3067
    %v3132 = vsel %vm3004, %v2644, %v3068
    %v3133 = vsel %vm3005, %v2646, %v3069
    %v3134 = vsel %vm3006, %v2697, %v3070
    %v3135 = vsel %vm3007, %v2699, %v3071
    %v3136 = vsel %vm3008, %v2750, %v3072
    %v3137 = vsel %vm3009, %v2752, %v3073
    %v3138 = vsel %vm3010, %v2803, %v3074
    %v3139 = vsel %vm3011, %v2805, %v3075
    %v3140 = vsel %vm3012, %v2856, %v3076
    %v3141 = vsel %vm3013, %v2858, %v3077
    %v3142 = vsel %vm3014, %v2909, %v3078
    %v3143 = vsel %vm3015, %v2911, %v3079
    %v3144 = vsel %vm3016, %v2962, %v3080
    %v3145 = vsel %vm3017, %v2964, %v3081
    %v3146 = vsel %vm3018, %v2595, %v3082
    %v3147 = vsel %vm3019, %v2597, %v3083
    %v3148 = vsel %vm3020, %v2648, %v3084
    %v3149 = vsel %vm3021, %v2650, %v3085
    %v3150 = vsel %vm3022, %v2701, %v3086
    %v3151 = vsel %vm3023, %v2703, %v3087
    %v3152 = vsel %vm3024, %v2754, %v3088
    %v3153 = vsel %vm3025, %v2756, %v3089
    %v3154 = vsel %vm3026, %v2807, %v3090
    %v3155 = vsel %vm3027, %v2809, %v3091
    %v3156 = vsel %vm3028, %v2860, %v3092
    %v3157 = vsel %vm3029, %v2862, %v3093
    %v3158 = vsel %vm3030, %v2913, %v3094
    %v3159 = vsel %vm3031, %v2915, %v3095
    %v3160 = vsel %vm3032, %v2966, %v3096
    %v3161 = vsel %vm3033, %v2968, %v3097
    %v3162 = vpack.c.bf16 %v3114, %v3098
    %v3163 = vpack.c.bf16 %v3115, %v3099
    %v3164 = vpack.c.bf16 %v3116, %v3100
    %v3165 = vpack.c.bf16 %v3117, %v3101
    %v3166 = vpack.c.bf16 %v3118, %v3102
    %v3167 = vpack.c.bf16 %v3119, %v3103
    %v3168 = vpack.c.bf16 %v3120, %v3104
    %v3169 = vpack.c.bf16 %v3121, %v3105
    %v3170 = vpack.c.bf16 %v3122, %v3106
    %v3171 = vpack.c.bf16 %v3123, %v3107
    %v3172 = vpack.c.bf16 %v3124, %v3108
    %v3173 = vpack.c.bf16 %v3125, %v3109
    %v3174 = vpack.c.bf16 %v3126, %v3110
    %v3175 = vpack.c.bf16 %v3127, %v3111
    %v3176 = vpack.c.bf16 %v3128, %v3112
    %v3177 = vpack.c.bf16 %v3129, %v3113
    %v3178 = vpack.c.bf16 %v3146, %v3130
    %v3179 = vpack.c.bf16 %v3147, %v3131
    %v3180 = vpack.c.bf16 %v3148, %v3132
    %v3181 = vpack.c.bf16 %v3149, %v3133
    %v3182 = vpack.c.bf16 %v3150, %v3134
    %v3183 = vpack.c.bf16 %v3151, %v3135
    %v3184 = vpack.c.bf16 %v3152, %v3136
    %v3185 = vpack.c.bf16 %v3153, %v3137
    %v3186 = vpack.c.bf16 %v3154, %v3138
    %v3187 = vpack.c.bf16 %v3155, %v3139
    %v3188 = vpack.c.bf16 %v3156, %v3140
    %v3189 = vpack.c.bf16 %v3157, %v3141
    %v3190 = vpack.c.bf16 %v3158, %v3142
    %v3191 = vpack.c.bf16 %v3159, %v3143
    %v3192 = vpack.c.bf16 %v3160, %v3144
    %v3193 = vpack.c.bf16 %v3161, %v3145
    %v3194 = vld [vmem:[%s7] sm:$0xf]
    %v3195 = vld [vmem:[%s7 + $0x4] sm:$0xf]
    %v3196 = vld [vmem:[%s7 + $0x8] sm:$0xf]
    %v3197 = vld [vmem:[%s7 + $0xc] sm:$0xf]
    %v3198 = vld [vmem:[%s7 + $0x10] sm:$0xf]
    %v3199 = vld [vmem:[%s7 + $0x14] sm:$0xf]
    %v3200 = vld [vmem:[%s7 + $0x18] sm:$0xf]
    %v3201 = vld [vmem:[%s7 + $0x1c] sm:$0xf]
    %v3202 = vld [vmem:[%s7 + $0x20] sm:$0xf]
    %v3203 = vld [vmem:[%s7 + $0x24] sm:$0xf]
    %v3204 = vld [vmem:[%s7 + $0x28] sm:$0xf]
    %v3205 = vld [vmem:[%s7 + $0x2c] sm:$0xf]
    %v3206 = vld [vmem:[%s7 + $0x30] sm:$0xf]
    %v3207 = vld [vmem:[%s7 + $0x34] sm:$0xf]
    %v3208 = vld [vmem:[%s7 + $0x38] sm:$0xf]
    %v3209 = vld [vmem:[%s7 + $0x3c] sm:$0xf]
    %v3210 = vld [vmem:[%s7 + $0x40] sm:$0xf]
    %v3211 = vld [vmem:[%s7 + $0x44] sm:$0xf]
    %v3212 = vld [vmem:[%s7 + $0x48] sm:$0xf]
    %v3213 = vld [vmem:[%s7 + $0x4c] sm:$0xf]
    %v3214 = vld [vmem:[%s7 + $0x50] sm:$0xf]
    %v3215 = vld [vmem:[%s7 + $0x54] sm:$0xf]
    %v3216 = vld [vmem:[%s7 + $0x58] sm:$0xf]
    %v3217 = vld [vmem:[%s7 + $0x5c] sm:$0xf]
    %v3218 = vld [vmem:[%s7 + $0x60] sm:$0xf]
    %v3219 = vld [vmem:[%s7 + $0x64] sm:$0xf]
    %v3220 = vld [vmem:[%s7 + $0x68] sm:$0xf]
    %v3221 = vld [vmem:[%s7 + $0x6c] sm:$0xf]
    %v3222 = vld [vmem:[%s7 + $0x70] sm:$0xf]
    %v3223 = vld [vmem:[%s7 + $0x74] sm:$0xf]
    %v3224 = vld [vmem:[%s7 + $0x78] sm:$0xf]
    %v3225 = vld [vmem:[%s7 + $0x7c] sm:$0xf]
    %v3226 = vld [vmem:[%s7 + $0x80] sm:$0xf]
    %v3227 = vld [vmem:[%s7 + $0x84] sm:$0xf]
    %v3228 = vld [vmem:[%s7 + $0x88] sm:$0xf]
    %v3229 = vld [vmem:[%s7 + $0x8c] sm:$0xf]
    %v3230 = vld [vmem:[%s7 + $0x90] sm:$0xf]
    %v3231 = vld [vmem:[%s7 + $0x94] sm:$0xf]
    %v3232 = vld [vmem:[%s7 + $0x98] sm:$0xf]
    %v3233 = vld [vmem:[%s7 + $0x9c] sm:$0xf]
    %v3234 = vld [vmem:[%s7 + $0xa0] sm:$0xf]
    %v3235 = vld [vmem:[%s7 + $0xa4] sm:$0xf]
    %v3236 = vld [vmem:[%s7 + $0xa8] sm:$0xf]
    %v3237 = vld [vmem:[%s7 + $0xac] sm:$0xf]
    %v3238 = vld [vmem:[%s7 + $0xb0] sm:$0xf]
    %v3239 = vld [vmem:[%s7 + $0xb4] sm:$0xf]
    %v3240 = vld [vmem:[%s7 + $0xb8] sm:$0xf]
    %v3241 = vld [vmem:[%s7 + $0xbc] sm:$0xf]
    %v3242 = vld [vmem:[%s7 + $0xc0] sm:$0xf]
    %v3243 = vld [vmem:[%s7 + $0xc4] sm:$0xf]
    %v3244 = vld [vmem:[%s7 + $0xc8] sm:$0xf]
    %v3245 = vld [vmem:[%s7 + $0xcc] sm:$0xf]
    %v3246 = vld [vmem:[%s7 + $0xd0] sm:$0xf]
    %v3247 = vld [vmem:[%s7 + $0xd4] sm:$0xf]
    %v3248 = vld [vmem:[%s7 + $0xd8] sm:$0xf]
    %v3249 = vld [vmem:[%s7 + $0xdc] sm:$0xf]
    %v3250 = vld [vmem:[%s7 + $0xe0] sm:$0xf]
    %v3251 = vld [vmem:[%s7 + $0xe4] sm:$0xf]
    %v3252 = vld [vmem:[%s7 + $0xe8] sm:$0xf]
    %v3253 = vld [vmem:[%s7 + $0xec] sm:$0xf]
    %v3254 = vld [vmem:[%s7 + $0xf0] sm:$0xf]
    %v3255 = vld [vmem:[%s7 + $0xf4] sm:$0xf]
    %v3256 = vld [vmem:[%s7 + $0xf8] sm:$0xf]
    %v3257 = vld [vmem:[%s7 + $0xfc] sm:$0xf]
    %v3258 = vld [vmem:[%s7 + $0x100] sm:$0xf]
    %v3259 = vld [vmem:[%s7 + $0x104] sm:$0xf]
    %v3260 = vld [vmem:[%s7 + $0x108] sm:$0xf]
    %v3261 = vld [vmem:[%s7 + $0x10c] sm:$0xf]
    %v3262 = vld [vmem:[%s7 + $0x110] sm:$0xf]
    %v3263 = vld [vmem:[%s7 + $0x114] sm:$0xf]
    %v3264 = vld [vmem:[%s7 + $0x118] sm:$0xf]
    %v3265 = vld [vmem:[%s7 + $0x11c] sm:$0xf]
    %v3266 = vld [vmem:[%s7 + $0x120] sm:$0xf]
    %v3267 = vld [vmem:[%s7 + $0x124] sm:$0xf]
    %v3268 = vld [vmem:[%s7 + $0x128] sm:$0xf]
    %v3269 = vld [vmem:[%s7 + $0x12c] sm:$0xf]
    %v3270 = vld [vmem:[%s7 + $0x130] sm:$0xf]
    %v3271 = vld [vmem:[%s7 + $0x134] sm:$0xf]
    %v3272 = vld [vmem:[%s7 + $0x138] sm:$0xf]
    %v3273 = vld [vmem:[%s7 + $0x13c] sm:$0xf]
    %v3274 = vld [vmem:[%s7 + $0x140] sm:$0xf]
    %v3275 = vld [vmem:[%s7 + $0x144] sm:$0xf]
    %v3276 = vld [vmem:[%s7 + $0x148] sm:$0xf]
    %v3277 = vld [vmem:[%s7 + $0x14c] sm:$0xf]
    %v3278 = vld [vmem:[%s7 + $0x150] sm:$0xf]
    %v3279 = vld [vmem:[%s7 + $0x154] sm:$0xf]
    %v3280 = vld [vmem:[%s7 + $0x158] sm:$0xf]
    %v3281 = vld [vmem:[%s7 + $0x15c] sm:$0xf]
    %v3282 = vld [vmem:[%s7 + $0x160] sm:$0xf]
    %v3283 = vld [vmem:[%s7 + $0x164] sm:$0xf]
    %v3284 = vld [vmem:[%s7 + $0x168] sm:$0xf]
    %v3285 = vld [vmem:[%s7 + $0x16c] sm:$0xf]
    %v3286 = vld [vmem:[%s7 + $0x170] sm:$0xf]
    %v3287 = vld [vmem:[%s7 + $0x174] sm:$0xf]
    %v3288 = vld [vmem:[%s7 + $0x178] sm:$0xf]
    %v3289 = vld [vmem:[%s7 + $0x17c] sm:$0xf]
    %v3290 = vld [vmem:[%s7 + $0x180] sm:$0xf]
    %v3291 = vld [vmem:[%s7 + $0x184] sm:$0xf]
    %v3292 = vld [vmem:[%s7 + $0x188] sm:$0xf]
    %v3293 = vld [vmem:[%s7 + $0x18c] sm:$0xf]
    %v3294 = vld [vmem:[%s7 + $0x190] sm:$0xf]
    %v3295 = vld [vmem:[%s7 + $0x194] sm:$0xf]
    %v3296 = vld [vmem:[%s7 + $0x198] sm:$0xf]
    %v3297 = vld [vmem:[%s7 + $0x19c] sm:$0xf]
    %v3298 = vld [vmem:[%s7 + $0x1a0] sm:$0xf]
    %v3299 = vld [vmem:[%s7 + $0x1a4] sm:$0xf]
    %v3300 = vld [vmem:[%s7 + $0x1a8] sm:$0xf]
    %v3301 = vld [vmem:[%s7 + $0x1ac] sm:$0xf]
    %v3302 = vld [vmem:[%s7 + $0x1b0] sm:$0xf]
    %v3303 = vld [vmem:[%s7 + $0x1b4] sm:$0xf]
    %v3304 = vld [vmem:[%s7 + $0x1b8] sm:$0xf]
    %v3305 = vld [vmem:[%s7 + $0x1bc] sm:$0xf]
    %v3306 = vld [vmem:[%s7 + $0x1c0] sm:$0xf]
    %v3307 = vld [vmem:[%s7 + $0x1c4] sm:$0xf]
    %v3308 = vld [vmem:[%s7 + $0x1c8] sm:$0xf]
    %v3309 = vld [vmem:[%s7 + $0x1cc] sm:$0xf]
    %v3310 = vld [vmem:[%s7 + $0x1d0] sm:$0xf]
    %v3311 = vld [vmem:[%s7 + $0x1d4] sm:$0xf]
    %v3312 = vld [vmem:[%s7 + $0x1d8] sm:$0xf]
    %v3313 = vld [vmem:[%s7 + $0x1dc] sm:$0xf]
    %v3314 = vld [vmem:[%s7 + $0x1e0] sm:$0xf]
    %v3315 = vld [vmem:[%s7 + $0x1e4] sm:$0xf]
    %v3316 = vld [vmem:[%s7 + $0x1e8] sm:$0xf]
    %v3317 = vld [vmem:[%s7 + $0x1ec] sm:$0xf]
    %v3318 = vld [vmem:[%s7 + $0x1f0] sm:$0xf]
    %v3319 = vld [vmem:[%s7 + $0x1f4] sm:$0xf]
    %v3320 = vld [vmem:[%s7 + $0x1f8] sm:$0xf]
    %v3321 = vld [vmem:[%s7 + $0x1fc] sm:$0xf]
    %v3322 = vld [vmem:[%s7 + $0x200] sm:$0xf]
    %v3323 = vld [vmem:[%s7 + $0x204] sm:$0xf]
    %v3324 = vld [vmem:[%s7 + $0x208] sm:$0xf]
    %v3325 = vld [vmem:[%s7 + $0x20c] sm:$0xf]
    %v3326 = vld [vmem:[%s7 + $0x210] sm:$0xf]
    %v3327 = vld [vmem:[%s7 + $0x214] sm:$0xf]
    %v3328 = vld [vmem:[%s7 + $0x218] sm:$0xf]
    %v3329 = vld [vmem:[%s7 + $0x21c] sm:$0xf]
    %v3330 = vld [vmem:[%s7 + $0x220] sm:$0xf]
    %v3331 = vld [vmem:[%s7 + $0x224] sm:$0xf]
    %v3332 = vld [vmem:[%s7 + $0x228] sm:$0xf]
    %v3333 = vld [vmem:[%s7 + $0x22c] sm:$0xf]
    %v3334 = vld [vmem:[%s7 + $0x230] sm:$0xf]
    %v3335 = vld [vmem:[%s7 + $0x234] sm:$0xf]
    %v3336 = vld [vmem:[%s7 + $0x238] sm:$0xf]
    %v3337 = vld [vmem:[%s7 + $0x23c] sm:$0xf]
    %v3338 = vld [vmem:[%s7 + $0x240] sm:$0xf]
    %v3339 = vld [vmem:[%s7 + $0x244] sm:$0xf]
    %v3340 = vld [vmem:[%s7 + $0x248] sm:$0xf]
    %v3341 = vld [vmem:[%s7 + $0x24c] sm:$0xf]
    %v3342 = vld [vmem:[%s7 + $0x250] sm:$0xf]
    %v3343 = vld [vmem:[%s7 + $0x254] sm:$0xf]
    %v3344 = vld [vmem:[%s7 + $0x258] sm:$0xf]
    %v3345 = vld [vmem:[%s7 + $0x25c] sm:$0xf]
    %v3346 = vld [vmem:[%s7 + $0x260] sm:$0xf]
    %v3347 = vld [vmem:[%s7 + $0x264] sm:$0xf]
    %v3348 = vld [vmem:[%s7 + $0x268] sm:$0xf]
    %v3349 = vld [vmem:[%s7 + $0x26c] sm:$0xf]
    %v3350 = vld [vmem:[%s7 + $0x270] sm:$0xf]
    %v3351 = vld [vmem:[%s7 + $0x274] sm:$0xf]
    %v3352 = vld [vmem:[%s7 + $0x278] sm:$0xf]
    %v3353 = vld [vmem:[%s7 + $0x27c] sm:$0xf]
    %v3354 = vld [vmem:[%s7 + $0x280] sm:$0xf]
    %v3355 = vld [vmem:[%s7 + $0x284] sm:$0xf]
    %v3356 = vld [vmem:[%s7 + $0x288] sm:$0xf]
    %v3357 = vld [vmem:[%s7 + $0x28c] sm:$0xf]
    %v3358 = vld [vmem:[%s7 + $0x290] sm:$0xf]
    %v3359 = vld [vmem:[%s7 + $0x294] sm:$0xf]
    %v3360 = vld [vmem:[%s7 + $0x298] sm:$0xf]
    %v3361 = vld [vmem:[%s7 + $0x29c] sm:$0xf]
    %v3362 = vld [vmem:[%s7 + $0x2a0] sm:$0xf]
    %v3363 = vld [vmem:[%s7 + $0x2a4] sm:$0xf]
    %v3364 = vld [vmem:[%s7 + $0x2a8] sm:$0xf]
    %v3365 = vld [vmem:[%s7 + $0x2ac] sm:$0xf]
    %v3366 = vld [vmem:[%s7 + $0x2b0] sm:$0xf]
    %v3367 = vld [vmem:[%s7 + $0x2b4] sm:$0xf]
    %v3368 = vld [vmem:[%s7 + $0x2b8] sm:$0xf]
    %v3369 = vld [vmem:[%s7 + $0x2bc] sm:$0xf]
    %v3370 = vld [vmem:[%s7 + $0x2c0] sm:$0xf]
    %v3371 = vld [vmem:[%s7 + $0x2c4] sm:$0xf]
    %v3372 = vld [vmem:[%s7 + $0x2c8] sm:$0xf]
    %v3373 = vld [vmem:[%s7 + $0x2cc] sm:$0xf]
    %v3374 = vld [vmem:[%s7 + $0x2d0] sm:$0xf]
    %v3375 = vld [vmem:[%s7 + $0x2d4] sm:$0xf]
    %v3376 = vld [vmem:[%s7 + $0x2d8] sm:$0xf]
    %v3377 = vld [vmem:[%s7 + $0x2dc] sm:$0xf]
    %v3378 = vld [vmem:[%s7 + $0x2e0] sm:$0xf]
    %v3379 = vld [vmem:[%s7 + $0x2e4] sm:$0xf]
    %v3380 = vld [vmem:[%s7 + $0x2e8] sm:$0xf]
    %v3381 = vld [vmem:[%s7 + $0x2ec] sm:$0xf]
    %v3382 = vld [vmem:[%s7 + $0x2f0] sm:$0xf]
    %v3383 = vld [vmem:[%s7 + $0x2f4] sm:$0xf]
    %v3384 = vld [vmem:[%s7 + $0x2f8] sm:$0xf]
    %v3385 = vld [vmem:[%s7 + $0x2fc] sm:$0xf]
    %v3386 = vld [vmem:[%s7 + $0x300] sm:$0xf]
    %v3387 = vld [vmem:[%s7 + $0x304] sm:$0xf]
    %v3388 = vld [vmem:[%s7 + $0x308] sm:$0xf]
    %v3389 = vld [vmem:[%s7 + $0x30c] sm:$0xf]
    %v3390 = vld [vmem:[%s7 + $0x310] sm:$0xf]
    %v3391 = vld [vmem:[%s7 + $0x314] sm:$0xf]
    %v3392 = vld [vmem:[%s7 + $0x318] sm:$0xf]
    %v3393 = vld [vmem:[%s7 + $0x31c] sm:$0xf]
    %v3394 = vld [vmem:[%s7 + $0x320] sm:$0xf]
    %v3395 = vld [vmem:[%s7 + $0x324] sm:$0xf]
    %v3396 = vld [vmem:[%s7 + $0x328] sm:$0xf]
    %v3397 = vld [vmem:[%s7 + $0x32c] sm:$0xf]
    %v3398 = vld [vmem:[%s7 + $0x330] sm:$0xf]
    %v3399 = vld [vmem:[%s7 + $0x334] sm:$0xf]
    %v3400 = vld [vmem:[%s7 + $0x338] sm:$0xf]
    %v3401 = vld [vmem:[%s7 + $0x33c] sm:$0xf]
    %v3402 = vld [vmem:[%s7 + $0x340] sm:$0xf]
    %v3403 = vld [vmem:[%s7 + $0x344] sm:$0xf]
    %v3404 = vld [vmem:[%s7 + $0x348] sm:$0xf]
    %v3405 = vld [vmem:[%s7 + $0x34c] sm:$0xf]
    %v3406 = vld [vmem:[%s7 + $0x350] sm:$0xf]
    %v3407 = vld [vmem:[%s7 + $0x354] sm:$0xf]
    %v3408 = vld [vmem:[%s7 + $0x358] sm:$0xf]
    %v3409 = vld [vmem:[%s7 + $0x35c] sm:$0xf]
    %v3410 = vld [vmem:[%s7 + $0x360] sm:$0xf]
    %v3411 = vld [vmem:[%s7 + $0x364] sm:$0xf]
    %v3412 = vld [vmem:[%s7 + $0x368] sm:$0xf]
    %v3413 = vld [vmem:[%s7 + $0x36c] sm:$0xf]
    %v3414 = vld [vmem:[%s7 + $0x370] sm:$0xf]
    %v3415 = vld [vmem:[%s7 + $0x374] sm:$0xf]
    %v3416 = vld [vmem:[%s7 + $0x378] sm:$0xf]
    %v3417 = vld [vmem:[%s7 + $0x37c] sm:$0xf]
    %v3418 = vld [vmem:[%s7 + $0x380] sm:$0xf]
    %v3419 = vld [vmem:[%s7 + $0x384] sm:$0xf]
    %v3420 = vld [vmem:[%s7 + $0x388] sm:$0xf]
    %v3421 = vld [vmem:[%s7 + $0x38c] sm:$0xf]
    %v3422 = vld [vmem:[%s7 + $0x390] sm:$0xf]
    %v3423 = vld [vmem:[%s7 + $0x394] sm:$0xf]
    %v3424 = vld [vmem:[%s7 + $0x398] sm:$0xf]
    %v3425 = vld [vmem:[%s7 + $0x39c] sm:$0xf]
    %v3426 = vld [vmem:[%s7 + $0x3a0] sm:$0xf]
    %v3427 = vld [vmem:[%s7 + $0x3a4] sm:$0xf]
    %v3428 = vld [vmem:[%s7 + $0x3a8] sm:$0xf]
    %v3429 = vld [vmem:[%s7 + $0x3ac] sm:$0xf]
    %v3430 = vld [vmem:[%s7 + $0x3b0] sm:$0xf]
    %v3431 = vld [vmem:[%s7 + $0x3b4] sm:$0xf]
    %v3432 = vld [vmem:[%s7 + $0x3b8] sm:$0xf]
    %v3433 = vld [vmem:[%s7 + $0x3bc] sm:$0xf]
    %v3434 = vld [vmem:[%s7 + $0x3c0] sm:$0xf]
    %v3435 = vld [vmem:[%s7 + $0x3c4] sm:$0xf]
    %v3436 = vld [vmem:[%s7 + $0x3c8] sm:$0xf]
    %v3437 = vld [vmem:[%s7 + $0x3cc] sm:$0xf]
    %v3438 = vld [vmem:[%s7 + $0x3d0] sm:$0xf]
    %v3439 = vld [vmem:[%s7 + $0x3d4] sm:$0xf]
    %v3440 = vld [vmem:[%s7 + $0x3d8] sm:$0xf]
    %v3441 = vld [vmem:[%s7 + $0x3dc] sm:$0xf]
    %v3442 = vld [vmem:[%s7 + $0x3e0] sm:$0xf]
    %v3443 = vld [vmem:[%s7 + $0x3e4] sm:$0xf]
    %v3444 = vld [vmem:[%s7 + $0x3e8] sm:$0xf]
    %v3445 = vld [vmem:[%s7 + $0x3ec] sm:$0xf]
    %v3446 = vld [vmem:[%s7 + $0x3f0] sm:$0xf]
    %v3447 = vld [vmem:[%s7 + $0x3f4] sm:$0xf]
    %v3448 = vld [vmem:[%s7 + $0x3f8] sm:$0xf]
    %v3449 = vld [vmem:[%s7 + $0x3fc] sm:$0xf]
    %v3450 = vlaneseq
    %v3451 = vshrl.u32 %v3450, 7
    %v3452 = vsub.s32 3, %v3451
    %v3453 = vrot.slane %v37, %v3452
    %v3710 = vunpack.c.l.b16 %v3194
    %v3711 = vunpack.c.l.b16 %v3195
    %v3712 = vunpack.c.l.b16 %v3196
    %v3713 = vunpack.c.l.b16 %v3197
    %v3714 = vunpack.c.l.b16 %v3198
    %v3715 = vunpack.c.l.b16 %v3199
    %v3716 = vunpack.c.l.b16 %v3200
    %v3717 = vunpack.c.l.b16 %v3201
    %v3718 = vunpack.c.l.b16 %v3202
    %v3719 = vunpack.c.l.b16 %v3203
    %v3720 = vunpack.c.l.b16 %v3204
    %v3721 = vunpack.c.l.b16 %v3205
    %v3722 = vunpack.c.l.b16 %v3206
    %v3723 = vunpack.c.l.b16 %v3207
    %v3724 = vunpack.c.l.b16 %v3208
    %v3725 = vunpack.c.l.b16 %v3209
    %v3726 = vunpack.c.l.b16 %v3210
    %v3727 = vunpack.c.l.b16 %v3211
    %v3728 = vunpack.c.l.b16 %v3212
    %v3729 = vunpack.c.l.b16 %v3213
    %v3730 = vunpack.c.l.b16 %v3214
    %v3731 = vunpack.c.l.b16 %v3215
    %v3732 = vunpack.c.l.b16 %v3216
    %v3733 = vunpack.c.l.b16 %v3217
    %v3734 = vunpack.c.l.b16 %v3218
    %v3735 = vunpack.c.l.b16 %v3219
    %v3736 = vunpack.c.l.b16 %v3220
    %v3737 = vunpack.c.l.b16 %v3221
    %v3738 = vunpack.c.l.b16 %v3222
    %v3739 = vunpack.c.l.b16 %v3223
    %v3740 = vunpack.c.l.b16 %v3224
    %v3741 = vunpack.c.l.b16 %v3225
    %v3742 = vunpack.c.l.b16 %v3226
    %v3743 = vunpack.c.l.b16 %v3227
    %v3744 = vunpack.c.l.b16 %v3228
    %v3745 = vunpack.c.l.b16 %v3229
    %v3746 = vunpack.c.l.b16 %v3230
    %v3747 = vunpack.c.l.b16 %v3231
    %v3748 = vunpack.c.l.b16 %v3232
    %v3749 = vunpack.c.l.b16 %v3233
    %v3750 = vunpack.c.l.b16 %v3234
    %v3751 = vunpack.c.l.b16 %v3235
    %v3752 = vunpack.c.l.b16 %v3236
    %v3753 = vunpack.c.l.b16 %v3237
    %v3754 = vunpack.c.l.b16 %v3238
    %v3755 = vunpack.c.l.b16 %v3239
    %v3756 = vunpack.c.l.b16 %v3240
    %v3757 = vunpack.c.l.b16 %v3241
    %v3758 = vunpack.c.l.b16 %v3242
    %v3759 = vunpack.c.l.b16 %v3243
    %v3760 = vunpack.c.l.b16 %v3244
    %v3761 = vunpack.c.l.b16 %v3245
    %v3762 = vunpack.c.l.b16 %v3246
    %v3763 = vunpack.c.l.b16 %v3247
    %v3764 = vunpack.c.l.b16 %v3248
    %v3765 = vunpack.c.l.b16 %v3249
    %v3766 = vunpack.c.l.b16 %v3250
    %v3767 = vunpack.c.l.b16 %v3251
    %v3768 = vunpack.c.l.b16 %v3252
    %v3769 = vunpack.c.l.b16 %v3253
    %v3770 = vunpack.c.l.b16 %v3254
    %v3771 = vunpack.c.l.b16 %v3255
    %v3772 = vunpack.c.l.b16 %v3256
    %v3773 = vunpack.c.l.b16 %v3257
    %v3774 = vunpack.c.l.b16 %v3258
    %v3775 = vunpack.c.l.b16 %v3259
    %v3776 = vunpack.c.l.b16 %v3260
    %v3777 = vunpack.c.l.b16 %v3261
    %v3778 = vunpack.c.l.b16 %v3262
    %v3779 = vunpack.c.l.b16 %v3263
    %v3780 = vunpack.c.l.b16 %v3264
    %v3781 = vunpack.c.l.b16 %v3265
    %v3782 = vunpack.c.l.b16 %v3266
    %v3783 = vunpack.c.l.b16 %v3267
    %v3784 = vunpack.c.l.b16 %v3268
    %v3785 = vunpack.c.l.b16 %v3269
    %v3786 = vunpack.c.l.b16 %v3270
    %v3787 = vunpack.c.l.b16 %v3271
    %v3788 = vunpack.c.l.b16 %v3272
    %v3789 = vunpack.c.l.b16 %v3273
    %v3790 = vunpack.c.l.b16 %v3274
    %v3791 = vunpack.c.l.b16 %v3275
    %v3792 = vunpack.c.l.b16 %v3276
    %v3793 = vunpack.c.l.b16 %v3277
    %v3794 = vunpack.c.l.b16 %v3278
    %v3795 = vunpack.c.l.b16 %v3279
    %v3796 = vunpack.c.l.b16 %v3280
    %v3797 = vunpack.c.l.b16 %v3281
    %v3798 = vunpack.c.l.b16 %v3282
    %v3799 = vunpack.c.l.b16 %v3283
    %v3800 = vunpack.c.l.b16 %v3284
    %v3801 = vunpack.c.l.b16 %v3285
    %v3802 = vunpack.c.l.b16 %v3286
    %v3803 = vunpack.c.l.b16 %v3287
    %v3804 = vunpack.c.l.b16 %v3288
    %v3805 = vunpack.c.l.b16 %v3289
    %v3806 = vunpack.c.l.b16 %v3290
    %v3807 = vunpack.c.l.b16 %v3291
    %v3808 = vunpack.c.l.b16 %v3292
    %v3809 = vunpack.c.l.b16 %v3293
    %v3810 = vunpack.c.l.b16 %v3294
    %v3811 = vunpack.c.l.b16 %v3295
    %v3812 = vunpack.c.l.b16 %v3296
    %v3813 = vunpack.c.l.b16 %v3297
    %v3814 = vunpack.c.l.b16 %v3298
    %v3815 = vunpack.c.l.b16 %v3299
    %v3816 = vunpack.c.l.b16 %v3300
    %v3817 = vunpack.c.l.b16 %v3301
    %v3818 = vunpack.c.l.b16 %v3302
    %v3819 = vunpack.c.l.b16 %v3303
    %v3820 = vunpack.c.l.b16 %v3304
    %v3821 = vunpack.c.l.b16 %v3305
    %v3822 = vunpack.c.l.b16 %v3306
    %v3823 = vunpack.c.l.b16 %v3307
    %v3824 = vunpack.c.l.b16 %v3308
    %v3825 = vunpack.c.l.b16 %v3309
    %v3826 = vunpack.c.l.b16 %v3310
    %v3827 = vunpack.c.l.b16 %v3311
    %v3828 = vunpack.c.l.b16 %v3312
    %v3829 = vunpack.c.l.b16 %v3313
    %v3830 = vunpack.c.l.b16 %v3314
    %v3831 = vunpack.c.l.b16 %v3315
    %v3832 = vunpack.c.l.b16 %v3316
    %v3833 = vunpack.c.l.b16 %v3317
    %v3834 = vunpack.c.l.b16 %v3318
    %v3835 = vunpack.c.l.b16 %v3319
    %v3836 = vunpack.c.l.b16 %v3320
    %v3837 = vunpack.c.l.b16 %v3321
    %v3838 = vunpack.c.l.b16 %v3322
    %v3839 = vunpack.c.l.b16 %v3323
    %v3840 = vunpack.c.l.b16 %v3324
    %v3841 = vunpack.c.l.b16 %v3325
    %v3842 = vunpack.c.l.b16 %v3326
    %v3843 = vunpack.c.l.b16 %v3327
    %v3844 = vunpack.c.l.b16 %v3328
    %v3845 = vunpack.c.l.b16 %v3329
    %v3846 = vunpack.c.l.b16 %v3330
    %v3847 = vunpack.c.l.b16 %v3331
    %v3848 = vunpack.c.l.b16 %v3332
    %v3849 = vunpack.c.l.b16 %v3333
    %v3850 = vunpack.c.l.b16 %v3334
    %v3851 = vunpack.c.l.b16 %v3335
    %v3852 = vunpack.c.l.b16 %v3336
    %v3853 = vunpack.c.l.b16 %v3337
    %v3854 = vunpack.c.l.b16 %v3338
    %v3855 = vunpack.c.l.b16 %v3339
    %v3856 = vunpack.c.l.b16 %v3340
    %v3857 = vunpack.c.l.b16 %v3341
    %v3858 = vunpack.c.l.b16 %v3342
    %v3859 = vunpack.c.l.b16 %v3343
    %v3860 = vunpack.c.l.b16 %v3344
    %v3861 = vunpack.c.l.b16 %v3345
    %v3862 = vunpack.c.l.b16 %v3346
    %v3863 = vunpack.c.l.b16 %v3347
    %v3864 = vunpack.c.l.b16 %v3348
    %v3865 = vunpack.c.l.b16 %v3349
    %v3866 = vunpack.c.l.b16 %v3350
    %v3867 = vunpack.c.l.b16 %v3351
    %v3868 = vunpack.c.l.b16 %v3352
    %v3869 = vunpack.c.l.b16 %v3353
    %v3870 = vunpack.c.l.b16 %v3354
    %v3871 = vunpack.c.l.b16 %v3355
    %v3872 = vunpack.c.l.b16 %v3356
    %v3873 = vunpack.c.l.b16 %v3357
    %v3874 = vunpack.c.l.b16 %v3358
    %v3875 = vunpack.c.l.b16 %v3359
    %v3876 = vunpack.c.l.b16 %v3360
    %v3877 = vunpack.c.l.b16 %v3361
    %v3878 = vunpack.c.l.b16 %v3362
    %v3879 = vunpack.c.l.b16 %v3363
    %v3880 = vunpack.c.l.b16 %v3364
    %v3881 = vunpack.c.l.b16 %v3365
    %v3882 = vunpack.c.l.b16 %v3366
    %v3883 = vunpack.c.l.b16 %v3367
    %v3884 = vunpack.c.l.b16 %v3368
    %v3885 = vunpack.c.l.b16 %v3369
    %v3886 = vunpack.c.l.b16 %v3370
    %v3887 = vunpack.c.l.b16 %v3371
    %v3888 = vunpack.c.l.b16 %v3372
    %v3889 = vunpack.c.l.b16 %v3373
    %v3890 = vunpack.c.l.b16 %v3374
    %v3891 = vunpack.c.l.b16 %v3375
    %v3892 = vunpack.c.l.b16 %v3376
    %v3893 = vunpack.c.l.b16 %v3377
    %v3894 = vunpack.c.l.b16 %v3378
    %v3895 = vunpack.c.l.b16 %v3379
    %v3896 = vunpack.c.l.b16 %v3380
    %v3897 = vunpack.c.l.b16 %v3381
    %v3898 = vunpack.c.l.b16 %v3382
    %v3899 = vunpack.c.l.b16 %v3383
    %v3900 = vunpack.c.l.b16 %v3384
    %v3901 = vunpack.c.l.b16 %v3385
    %v3902 = vunpack.c.l.b16 %v3386
    %v3903 = vunpack.c.l.b16 %v3387
    %v3904 = vunpack.c.l.b16 %v3388
    %v3905 = vunpack.c.l.b16 %v3389
    %v3906 = vunpack.c.l.b16 %v3390
    %v3907 = vunpack.c.l.b16 %v3391
    %v3908 = vunpack.c.l.b16 %v3392
    %v3909 = vunpack.c.l.b16 %v3393
    %v3910 = vunpack.c.l.b16 %v3394
    %v3911 = vunpack.c.l.b16 %v3395
    %v3912 = vunpack.c.l.b16 %v3396
    %v3913 = vunpack.c.l.b16 %v3397
    %v3914 = vunpack.c.l.b16 %v3398
    %v3915 = vunpack.c.l.b16 %v3399
    %v3916 = vunpack.c.l.b16 %v3400
    %v3917 = vunpack.c.l.b16 %v3401
    %v3918 = vunpack.c.l.b16 %v3402
    %v3919 = vunpack.c.l.b16 %v3403
    %v3920 = vunpack.c.l.b16 %v3404
    %v3921 = vunpack.c.l.b16 %v3405
    %v3922 = vunpack.c.l.b16 %v3406
    %v3923 = vunpack.c.l.b16 %v3407
    %v3924 = vunpack.c.l.b16 %v3408
    %v3925 = vunpack.c.l.b16 %v3409
    %v3926 = vunpack.c.l.b16 %v3410
    %v3927 = vunpack.c.l.b16 %v3411
    %v3928 = vunpack.c.l.b16 %v3412
    %v3929 = vunpack.c.l.b16 %v3413
    %v3930 = vunpack.c.l.b16 %v3414
    %v3931 = vunpack.c.l.b16 %v3415
    %v3932 = vunpack.c.l.b16 %v3416
    %v3933 = vunpack.c.l.b16 %v3417
    %v3934 = vunpack.c.l.b16 %v3418
    %v3935 = vunpack.c.l.b16 %v3419
    %v3936 = vunpack.c.l.b16 %v3420
    %v3937 = vunpack.c.l.b16 %v3421
    %v3938 = vunpack.c.l.b16 %v3422
    %v3939 = vunpack.c.l.b16 %v3423
    %v3940 = vunpack.c.l.b16 %v3424
    %v3941 = vunpack.c.l.b16 %v3425
    %v3942 = vunpack.c.l.b16 %v3426
    %v3943 = vunpack.c.l.b16 %v3427
    %v3944 = vunpack.c.l.b16 %v3428
    %v3945 = vunpack.c.l.b16 %v3429
    %v3946 = vunpack.c.l.b16 %v3430
    %v3947 = vunpack.c.l.b16 %v3431
    %v3948 = vunpack.c.l.b16 %v3432
    %v3949 = vunpack.c.l.b16 %v3433
    %v3950 = vunpack.c.l.b16 %v3434
    %v3951 = vunpack.c.l.b16 %v3435
    %v3952 = vunpack.c.l.b16 %v3436
    %v3953 = vunpack.c.l.b16 %v3437
    %v3954 = vunpack.c.l.b16 %v3438
    %v3955 = vunpack.c.l.b16 %v3439
    %v3956 = vunpack.c.l.b16 %v3440
    %v3957 = vunpack.c.l.b16 %v3441
    %v3958 = vunpack.c.l.b16 %v3442
    %v3959 = vunpack.c.l.b16 %v3443
    %v3960 = vunpack.c.l.b16 %v3444
    %v3961 = vunpack.c.l.b16 %v3445
    %v3962 = vunpack.c.l.b16 %v3446
    %v3963 = vunpack.c.l.b16 %v3447
    %v3964 = vunpack.c.l.b16 %v3448
    %v3965 = vunpack.c.l.b16 %v3449
    %v3966 = vpack.c.b16 %v3711, %v3710
    %v3967 = vpack.c.b16 %v3713, %v3712
    %v3968 = vpack.c.b16 %v3715, %v3714
    %v3969 = vpack.c.b16 %v3717, %v3716
    %v3970 = vpack.c.b16 %v3719, %v3718
    %v3971 = vpack.c.b16 %v3721, %v3720
    %v3972 = vpack.c.b16 %v3723, %v3722
    %v3973 = vpack.c.b16 %v3725, %v3724
    %v3974 = vpack.c.b16 %v3727, %v3726
    %v3975 = vpack.c.b16 %v3729, %v3728
    %v3976 = vpack.c.b16 %v3731, %v3730
    %v3977 = vpack.c.b16 %v3733, %v3732
    %v3978 = vpack.c.b16 %v3735, %v3734
    %v3979 = vpack.c.b16 %v3737, %v3736
    %v3980 = vpack.c.b16 %v3739, %v3738
    %v3981 = vpack.c.b16 %v3741, %v3740
    %v3982 = vpack.c.b16 %v3743, %v3742
    %v3983 = vpack.c.b16 %v3745, %v3744
    %v3984 = vpack.c.b16 %v3747, %v3746
    %v3985 = vpack.c.b16 %v3749, %v3748
    %v3986 = vpack.c.b16 %v3751, %v3750
    %v3987 = vpack.c.b16 %v3753, %v3752
    %v3988 = vpack.c.b16 %v3755, %v3754
    %v3989 = vpack.c.b16 %v3757, %v3756
    %v3990 = vpack.c.b16 %v3759, %v3758
    %v3991 = vpack.c.b16 %v3761, %v3760
    %v3992 = vpack.c.b16 %v3763, %v3762
    %v3993 = vpack.c.b16 %v3765, %v3764
    %v3994 = vpack.c.b16 %v3767, %v3766
    %v3995 = vpack.c.b16 %v3769, %v3768
    %v3996 = vpack.c.b16 %v3771, %v3770
    %v3997 = vpack.c.b16 %v3773, %v3772
    %v3998 = vpack.c.b16 %v3775, %v3774
    %v3999 = vpack.c.b16 %v3777, %v3776
    %v4000 = vpack.c.b16 %v3779, %v3778
    %v4001 = vpack.c.b16 %v3781, %v3780
    %v4002 = vpack.c.b16 %v3783, %v3782
    %v4003 = vpack.c.b16 %v3785, %v3784
    %v4004 = vpack.c.b16 %v3787, %v3786
    %v4005 = vpack.c.b16 %v3789, %v3788
    %v4006 = vpack.c.b16 %v3791, %v3790
    %v4007 = vpack.c.b16 %v3793, %v3792
    %v4008 = vpack.c.b16 %v3795, %v3794
    %v4009 = vpack.c.b16 %v3797, %v3796
    %v4010 = vpack.c.b16 %v3799, %v3798
    %v4011 = vpack.c.b16 %v3801, %v3800
    %v4012 = vpack.c.b16 %v3803, %v3802
    %v4013 = vpack.c.b16 %v3805, %v3804
    %v4014 = vpack.c.b16 %v3807, %v3806
    %v4015 = vpack.c.b16 %v3809, %v3808
    %v4016 = vpack.c.b16 %v3811, %v3810
    %v4017 = vpack.c.b16 %v3813, %v3812
    %v4018 = vpack.c.b16 %v3815, %v3814
    %v4019 = vpack.c.b16 %v3817, %v3816
    %v4020 = vpack.c.b16 %v3819, %v3818
    %v4021 = vpack.c.b16 %v3821, %v3820
    %v4022 = vpack.c.b16 %v3823, %v3822
    %v4023 = vpack.c.b16 %v3825, %v3824
    %v4024 = vpack.c.b16 %v3827, %v3826
    %v4025 = vpack.c.b16 %v3829, %v3828
    %v4026 = vpack.c.b16 %v3831, %v3830
    %v4027 = vpack.c.b16 %v3833, %v3832
    %v4028 = vpack.c.b16 %v3835, %v3834
    %v4029 = vpack.c.b16 %v3837, %v3836
    %v4030 = vpack.c.b16 %v3839, %v3838
    %v4031 = vpack.c.b16 %v3841, %v3840
    %v4032 = vpack.c.b16 %v3843, %v3842
    %v4033 = vpack.c.b16 %v3845, %v3844
    %v4034 = vpack.c.b16 %v3847, %v3846
    %v4035 = vpack.c.b16 %v3849, %v3848
    %v4036 = vpack.c.b16 %v3851, %v3850
    %v4037 = vpack.c.b16 %v3853, %v3852
    %v4038 = vpack.c.b16 %v3855, %v3854
    %v4039 = vpack.c.b16 %v3857, %v3856
    %v4040 = vpack.c.b16 %v3859, %v3858
    %v4041 = vpack.c.b16 %v3861, %v3860
    %v4042 = vpack.c.b16 %v3863, %v3862
    %v4043 = vpack.c.b16 %v3865, %v3864
    %v4044 = vpack.c.b16 %v3867, %v3866
    %v4045 = vpack.c.b16 %v3869, %v3868
    %v4046 = vpack.c.b16 %v3871, %v3870
    %v4047 = vpack.c.b16 %v3873, %v3872
    %v4048 = vpack.c.b16 %v3875, %v3874
    %v4049 = vpack.c.b16 %v3877, %v3876
    %v4050 = vpack.c.b16 %v3879, %v3878
    %v4051 = vpack.c.b16 %v3881, %v3880
    %v4052 = vpack.c.b16 %v3883, %v3882
    %v4053 = vpack.c.b16 %v3885, %v3884
    %v4054 = vpack.c.b16 %v3887, %v3886
    %v4055 = vpack.c.b16 %v3889, %v3888
    %v4056 = vpack.c.b16 %v3891, %v3890
    %v4057 = vpack.c.b16 %v3893, %v3892
    %v4058 = vpack.c.b16 %v3895, %v3894
    %v4059 = vpack.c.b16 %v3897, %v3896
    %v4060 = vpack.c.b16 %v3899, %v3898
    %v4061 = vpack.c.b16 %v3901, %v3900
    %v4062 = vpack.c.b16 %v3903, %v3902
    %v4063 = vpack.c.b16 %v3905, %v3904
    %v4064 = vpack.c.b16 %v3907, %v3906
    %v4065 = vpack.c.b16 %v3909, %v3908
    %v4066 = vpack.c.b16 %v3911, %v3910
    %v4067 = vpack.c.b16 %v3913, %v3912
    %v4068 = vpack.c.b16 %v3915, %v3914
    %v4069 = vpack.c.b16 %v3917, %v3916
    %v4070 = vpack.c.b16 %v3919, %v3918
    %v4071 = vpack.c.b16 %v3921, %v3920
    %v4072 = vpack.c.b16 %v3923, %v3922
    %v4073 = vpack.c.b16 %v3925, %v3924
    %v4074 = vpack.c.b16 %v3927, %v3926
    %v4075 = vpack.c.b16 %v3929, %v3928
    %v4076 = vpack.c.b16 %v3931, %v3930
    %v4077 = vpack.c.b16 %v3933, %v3932
    %v4078 = vpack.c.b16 %v3935, %v3934
    %v4079 = vpack.c.b16 %v3937, %v3936
    %v4080 = vpack.c.b16 %v3939, %v3938
    %v4081 = vpack.c.b16 %v3941, %v3940
    %v4082 = vpack.c.b16 %v3943, %v3942
    %v4083 = vpack.c.b16 %v3945, %v3944
    %v4084 = vpack.c.b16 %v3947, %v3946
    %v4085 = vpack.c.b16 %v3949, %v3948
    %v4086 = vpack.c.b16 %v3951, %v3950
    %v4087 = vpack.c.b16 %v3953, %v3952
    %v4088 = vpack.c.b16 %v3955, %v3954
    %v4089 = vpack.c.b16 %v3957, %v3956
    %v4090 = vpack.c.b16 %v3959, %v3958
    %v4091 = vpack.c.b16 %v3961, %v3960
    %v4092 = vpack.c.b16 %v3963, %v3962
    %v4093 = vpack.c.b16 %v3965, %v3964
    %4222 = vmatprep.subr.bf16.mxu0 0
    %4223 = vmatpush1.bf16.msra.mxu0 %v3966
    %4224 = vmatprep.subr.bf16.mxu0 0
    %4225 = vmatpush1.bf16.msra.mxu0 %v3967
    %4226 = vmatprep.subr.bf16.mxu0 0
    %4227 = vmatpush1.bf16.msra.mxu0 %v3968
    %4228 = vmatprep.subr.bf16.mxu0 0
    %4229 = vmatpush1.bf16.msra.mxu0 %v3969
    %4230 = vmatprep.subr.bf16.mxu0 0
    %4231 = vmatpush1.bf16.msra.mxu0 %v3970
    %4232 = vmatprep.subr.bf16.mxu0 0
    %4233 = vmatpush1.bf16.msra.mxu0 %v3971
    %4234 = vmatprep.subr.bf16.mxu0 0
    %4235 = vmatpush1.bf16.msra.mxu0 %v3972
    %4236 = vmatprep.subr.bf16.mxu0 0
    %4237 = vmatpush1.bf16.msra.mxu0 %v3973
    %4238 = vmatprep.subr.bf16.mxu0 0
    %4239 = vmatpush1.bf16.msra.mxu0 %v3974
    %4240 = vmatprep.subr.bf16.mxu0 0
    %4241 = vmatpush1.bf16.msra.mxu0 %v3975
    %4242 = vmatprep.subr.bf16.mxu0 0
    %4243 = vmatpush1.bf16.msra.mxu0 %v3976
    %4244 = vmatprep.subr.bf16.mxu0 0
    %4245 = vmatpush1.bf16.msra.mxu0 %v3977
    %4246 = vmatprep.subr.bf16.mxu0 0
    %4247 = vmatpush1.bf16.msra.mxu0 %v3978
    %4248 = vmatprep.subr.bf16.mxu0 0
    %4249 = vmatpush1.bf16.msra.mxu0 %v3979
    %4250 = vmatprep.subr.bf16.mxu0 0
    %4251 = vmatpush1.bf16.msra.mxu0 %v3980
    %4252 = vmatprep.subr.bf16.mxu0 0
    %4253 = vmatpush1.bf16.msra.mxu0 %v3981
    %4254 = vmatprep.mubr.bf16.mxu0 %v3163
    %4255 = vmatmul.mubr.bf16.gmra.mrb[0].mxu0 %v3162
    %v4256 = vpop.f32.mrb[0].mxu0
    %v4257 = vadd.f32 %v3453, %v4256
    %v4258 = vpop.f32.mrb[0].mxu0
    %v4259 = vpop.f32.mrb[0].mxu0
    %v4260 = vadd.f32 %v3453, %v4259
    %v4261 = vpop.f32.mrb[0].mxu0
    %4262 = vmatprep.mubr.bf16.mxu0 %v3179
    %4263 = vmatmul.mubr.bf16.gmra.mrb[0].mxu0 %v3178
    %v4264 = vpop.f32.mrb[0].mxu0
    %v4265 = vadd.f32 %v3453, %v4264
    %v4266 = vpop.f32.mrb[0].mxu0
    %v4267 = vpop.f32.mrb[0].mxu0
    %v4268 = vadd.f32 %v3453, %v4267
    %v4269 = vpop.f32.mrb[0].mxu0
    %4270 = vdwg.mxu0
    %4271 = vmatprep.subr.bf16.mxu0 0
    %4272 = vmatpush1.bf16.msra.mxu0 %v3982
    %4273 = vmatprep.subr.bf16.mxu0 0
    %4274 = vmatpush1.bf16.msra.mxu0 %v3983
    %4275 = vmatprep.subr.bf16.mxu0 0
    %4276 = vmatpush1.bf16.msra.mxu0 %v3984
    %4277 = vmatprep.subr.bf16.mxu0 0
    %4278 = vmatpush1.bf16.msra.mxu0 %v3985
    %4279 = vmatprep.subr.bf16.mxu0 0
    %4280 = vmatpush1.bf16.msra.mxu0 %v3986
    %4281 = vmatprep.subr.bf16.mxu0 0
    %4282 = vmatpush1.bf16.msra.mxu0 %v3987
    %4283 = vmatprep.subr.bf16.mxu0 0
    %4284 = vmatpush1.bf16.msra.mxu0 %v3988
    %4285 = vmatprep.subr.bf16.mxu0 0
    %4286 = vmatpush1.bf16.msra.mxu0 %v3989
    %4287 = vmatprep.subr.bf16.mxu0 0
    %4288 = vmatpush1.bf16.msra.mxu0 %v3990
    %4289 = vmatprep.subr.bf16.mxu0 0
    %4290 = vmatpush1.bf16.msra.mxu0 %v3991
    %4291 = vmatprep.subr.bf16.mxu0 0
    %4292 = vmatpush1.bf16.msra.mxu0 %v3992
    %4293 = vmatprep.subr.bf16.mxu0 0
    %4294 = vmatpush1.bf16.msra.mxu0 %v3993
    %4295 = vmatprep.subr.bf16.mxu0 0
    %4296 = vmatpush1.bf16.msra.mxu0 %v3994
    %4297 = vmatprep.subr.bf16.mxu0 0
    %4298 = vmatpush1.bf16.msra.mxu0 %v3995
    %4299 = vmatprep.subr.bf16.mxu0 0
    %4300 = vmatpush1.bf16.msra.mxu0 %v3996
    %4301 = vmatprep.subr.bf16.mxu0 0
    %4302 = vmatpush1.bf16.msra.mxu0 %v3997
    %4303 = vmatprep.mubr.bf16.mxu0 %v3165
    %4304 = vmatmul.mubr.bf16.gmra.mrb[0].mxu0 %v3164
    %v4305 = vpop.f32.mrb[0].mxu0
    %v4306 = vadd.f32 %v4257, %v4305
    %v4307 = vpop.f32.mrb[0].mxu0
    %v4308 = vpop.f32.mrb[0].mxu0
    %v4309 = vadd.f32 %v4260, %v4308
    %v4310 = vpop.f32.mrb[0].mxu0
    %4311 = vmatprep.mubr.bf16.mxu0 %v3181
    %4312 = vmatmul.mubr.bf16.gmra.mrb[0].mxu0 %v3180
    %v4313 = vpop.f32.mrb[0].mxu0
    %v4314 = vadd.f32 %v4265, %v4313
    %v4315 = vpop.f32.mrb[0].mxu0
    %v4316 = vpop.f32.mrb[0].mxu0
    %v4317 = vadd.f32 %v4268, %v4316
    %v4318 = vpop.f32.mrb[0].mxu0
    %4319 = vdwg.mxu0
    %4320 = vmatprep.subr.bf16.mxu0 0
    %4321 = vmatpush1.bf16.msra.mxu0 %v3998
    %4322 = vmatprep.subr.bf16.mxu0 0
    %4323 = vmatpush1.bf16.msra.mxu0 %v3999
    %4324 = vmatprep.subr.bf16.mxu0 0
    %4325 = vmatpush1.bf16.msra.mxu0 %v4000
    %4326 = vmatprep.subr.bf16.mxu0 0
    %4327 = vmatpush1.bf16.msra.mxu0 %v4001
    %4328 = vmatprep.subr.bf16.mxu0 0
    %4329 = vmatpush1.bf16.msra.mxu0 %v4002
    %4330 = vmatprep.subr.bf16.mxu0 0
    %4331 = vmatpush1.bf16.msra.mxu0 %v4003
    %4332 = vmatprep.subr.bf16.mxu0 0
    %4333 = vmatpush1.bf16.msra.mxu0 %v4004
    %4334 = vmatprep.subr.bf16.mxu0 0
    %4335 = vmatpush1.bf16.msra.mxu0 %v4005
    %4336 = vmatprep.subr.bf16.mxu0 0
    %4337 = vmatpush1.bf16.msra.mxu0 %v4006
    %4338 = vmatprep.subr.bf16.mxu0 0
    %4339 = vmatpush1.bf16.msra.mxu0 %v4007
    %4340 = vmatprep.subr.bf16.mxu0 0
    %4341 = vmatpush1.bf16.msra.mxu0 %v4008
    %4342 = vmatprep.subr.bf16.mxu0 0
    %4343 = vmatpush1.bf16.msra.mxu0 %v4009
    %4344 = vmatprep.subr.bf16.mxu0 0
    %4345 = vmatpush1.bf16.msra.mxu0 %v4010
    %4346 = vmatprep.subr.bf16.mxu0 0
    %4347 = vmatpush1.bf16.msra.mxu0 %v4011
    %4348 = vmatprep.subr.bf16.mxu0 0
    %4349 = vmatpush1.bf16.msra.mxu0 %v4012
    %4350 = vmatprep.subr.bf16.mxu0 0
    %4351 = vmatpush1.bf16.msra.mxu0 %v4013
    %4352 = vmatprep.mubr.bf16.mxu0 %v3167
    %4353 = vmatmul.mubr.bf16.gmra.mrb[0].mxu0 %v3166
    %v4354 = vpop.f32.mrb[0].mxu0
    %v4355 = vadd.f32 %v4306, %v4354
    %v4356 = vpop.f32.mrb[0].mxu0
    %v4357 = vpop.f32.mrb[0].mxu0
    %v4358 = vadd.f32 %v4309, %v4357
    %v4359 = vpop.f32.mrb[0].mxu0
    %4360 = vmatprep.mubr.bf16.mxu0 %v3183
    %4361 = vmatmul.mubr.bf16.gmra.mrb[0].mxu0 %v3182
    %v4362 = vpop.f32.mrb[0].mxu0
    %v4363 = vadd.f32 %v4314, %v4362
    %v4364 = vpop.f32.mrb[0].mxu0
    %v4365 = vpop.f32.mrb[0].mxu0
    %v4366 = vadd.f32 %v4317, %v4365
    %v4367 = vpop.f32.mrb[0].mxu0
    %4368 = vdwg.mxu0
    %4369 = vmatprep.subr.bf16.mxu0 0
    %4370 = vmatpush1.bf16.msra.mxu0 %v4014
    %4371 = vmatprep.subr.bf16.mxu0 0
    %4372 = vmatpush1.bf16.msra.mxu0 %v4015
    %4373 = vmatprep.subr.bf16.mxu0 0
    %4374 = vmatpush1.bf16.msra.mxu0 %v4016
    %4375 = vmatprep.subr.bf16.mxu0 0
    %4376 = vmatpush1.bf16.msra.mxu0 %v4017
    %4377 = vmatprep.subr.bf16.mxu0 0
    %4378 = vmatpush1.bf16.msra.mxu0 %v4018
    %4379 = vmatprep.subr.bf16.mxu0 0
    %4380 = vmatpush1.bf16.msra.mxu0 %v4019
    %4381 = vmatprep.subr.bf16.mxu0 0
    %4382 = vmatpush1.bf16.msra.mxu0 %v4020
    %4383 = vmatprep.subr.bf16.mxu0 0
    %4384 = vmatpush1.bf16.msra.mxu0 %v4021
    %4385 = vmatprep.subr.bf16.mxu0 0
    %4386 = vmatpush1.bf16.msra.mxu0 %v4022
    %4387 = vmatprep.subr.bf16.mxu0 0
    %4388 = vmatpush1.bf16.msra.mxu0 %v4023
    %4389 = vmatprep.subr.bf16.mxu0 0
    %4390 = vmatpush1.bf16.msra.mxu0 %v4024
    %4391 = vmatprep.subr.bf16.mxu0 0
    %4392 = vmatpush1.bf16.msra.mxu0 %v4025
    %4393 = vmatprep.subr.bf16.mxu0 0
    %4394 = vmatpush1.bf16.msra.mxu0 %v4026
    %4395 = vmatprep.subr.bf16.mxu0 0
    %4396 = vmatpush1.bf16.msra.mxu0 %v4027
    %4397 = vmatprep.subr.bf16.mxu0 0
    %4398 = vmatpush1.bf16.msra.mxu0 %v4028
    %4399 = vmatprep.subr.bf16.mxu0 0
    %4400 = vmatpush1.bf16.msra.mxu0 %v4029
    %4401 = vmatprep.mubr.bf16.mxu0 %v3169
    %4402 = vmatmul.mubr.bf16.gmra.mrb[0].mxu0 %v3168
    %v4403 = vpop.f32.mrb[0].mxu0
    %v4404 = vadd.f32 %v4355, %v4403
    %v4405 = vpop.f32.mrb[0].mxu0
    %v4406 = vpop.f32.mrb[0].mxu0
    %v4407 = vadd.f32 %v4358, %v4406
    %v4408 = vpop.f32.mrb[0].mxu0
    %4409 = vmatprep.mubr.bf16.mxu0 %v3185
    %4410 = vmatmul.mubr.bf16.gmra.mrb[0].mxu0 %v3184
    %v4411 = vpop.f32.mrb[0].mxu0
    %v4412 = vadd.f32 %v4363, %v4411
    %v4413 = vpop.f32.mrb[0].mxu0
    %v4414 = vpop.f32.mrb[0].mxu0
    %v4415 = vadd.f32 %v4366, %v4414
    %v4416 = vpop.f32.mrb[0].mxu0
    %4417 = vdwg.mxu0
    %4418 = vmatprep.subr.bf16.mxu0 0
    %4419 = vmatpush1.bf16.msra.mxu0 %v4030
    %4420 = vmatprep.subr.bf16.mxu0 0
    %4421 = vmatpush1.bf16.msra.mxu0 %v4031
    %4422 = vmatprep.subr.bf16.mxu0 0
    %4423 = vmatpush1.bf16.msra.mxu0 %v4032
    %4424 = vmatprep.subr.bf16.mxu0 0
    %4425 = vmatpush1.bf16.msra.mxu0 %v4033
    %4426 = vmatprep.subr.bf16.mxu0 0
    %4427 = vmatpush1.bf16.msra.mxu0 %v4034
    %4428 = vmatprep.subr.bf16.mxu0 0
    %4429 = vmatpush1.bf16.msra.mxu0 %v4035
    %4430 = vmatprep.subr.bf16.mxu0 0
    %4431 = vmatpush1.bf16.msra.mxu0 %v4036
    %4432 = vmatprep.subr.bf16.mxu0 0
    %4433 = vmatpush1.bf16.msra.mxu0 %v4037
    %4434 = vmatprep.subr.bf16.mxu0 0
    %4435 = vmatpush1.bf16.msra.mxu0 %v4038
    %4436 = vmatprep.subr.bf16.mxu0 0
    %4437 = vmatpush1.bf16.msra.mxu0 %v4039
    %4438 = vmatprep.subr.bf16.mxu0 0
    %4439 = vmatpush1.bf16.msra.mxu0 %v4040
    %4440 = vmatprep.subr.bf16.mxu0 0
    %4441 = vmatpush1.bf16.msra.mxu0 %v4041
    %4442 = vmatprep.subr.bf16.mxu0 0
    %4443 = vmatpush1.bf16.msra.mxu0 %v4042
    %4444 = vmatprep.subr.bf16.mxu0 0
    %4445 = vmatpush1.bf16.msra.mxu0 %v4043
    %4446 = vmatprep.subr.bf16.mxu0 0
    %4447 = vmatpush1.bf16.msra.mxu0 %v4044
    %4448 = vmatprep.subr.bf16.mxu0 0
    %4449 = vmatpush1.bf16.msra.mxu0 %v4045
    %4450 = vmatprep.mubr.bf16.mxu0 %v3171
    %4451 = vmatmul.mubr.bf16.gmra.mrb[0].mxu0 %v3170
    %v4452 = vpop.f32.mrb[0].mxu0
    %v4453 = vadd.f32 %v4404, %v4452
    %v4454 = vpop.f32.mrb[0].mxu0
    %v4455 = vpop.f32.mrb[0].mxu0
    %v4456 = vadd.f32 %v4407, %v4455
    %v4457 = vpop.f32.mrb[0].mxu0
    %4458 = vmatprep.mubr.bf16.mxu0 %v3187
    %4459 = vmatmul.mubr.bf16.gmra.mrb[0].mxu0 %v3186
    %v4460 = vpop.f32.mrb[0].mxu0
    %v4461 = vadd.f32 %v4412, %v4460
    %v4462 = vpop.f32.mrb[0].mxu0
    %v4463 = vpop.f32.mrb[0].mxu0
    %v4464 = vadd.f32 %v4415, %v4463
    %v4465 = vpop.f32.mrb[0].mxu0
    %4466 = vdwg.mxu0
    %4467 = vmatprep.subr.bf16.mxu0 0
    %4468 = vmatpush1.bf16.msra.mxu0 %v4046
    %4469 = vmatprep.subr.bf16.mxu0 0
    %4470 = vmatpush1.bf16.msra.mxu0 %v4047
    %4471 = vmatprep.subr.bf16.mxu0 0
    %4472 = vmatpush1.bf16.msra.mxu0 %v4048
    %4473 = vmatprep.subr.bf16.mxu0 0
    %4474 = vmatpush1.bf16.msra.mxu0 %v4049
    %4475 = vmatprep.subr.bf16.mxu0 0
    %4476 = vmatpush1.bf16.msra.mxu0 %v4050
    %4477 = vmatprep.subr.bf16.mxu0 0
    %4478 = vmatpush1.bf16.msra.mxu0 %v4051
    %4479 = vmatprep.subr.bf16.mxu0 0
    %4480 = vmatpush1.bf16.msra.mxu0 %v4052
    %4481 = vmatprep.subr.bf16.mxu0 0
    %4482 = vmatpush1.bf16.msra.mxu0 %v4053
    %4483 = vmatprep.subr.bf16.mxu0 0
    %4484 = vmatpush1.bf16.msra.mxu0 %v4054
    %4485 = vmatprep.subr.bf16.mxu0 0
    %4486 = vmatpush1.bf16.msra.mxu0 %v4055
    %4487 = vmatprep.subr.bf16.mxu0 0
    %4488 = vmatpush1.bf16.msra.mxu0 %v4056
    %4489 = vmatprep.subr.bf16.mxu0 0
    %4490 = vmatpush1.bf16.msra.mxu0 %v4057
    %4491 = vmatprep.subr.bf16.mxu0 0
    %4492 = vmatpush1.bf16.msra.mxu0 %v4058
    %4493 = vmatprep.subr.bf16.mxu0 0
    %4494 = vmatpush1.bf16.msra.mxu0 %v4059
    %4495 = vmatprep.subr.bf16.mxu0 0
    %4496 = vmatpush1.bf16.msra.mxu0 %v4060
    %4497 = vmatprep.subr.bf16.mxu0 0
    %4498 = vmatpush1.bf16.msra.mxu0 %v4061
    %4499 = vmatprep.mubr.bf16.mxu0 %v3173
    %4500 = vmatmul.mubr.bf16.gmra.mrb[0].mxu0 %v3172
    %v4501 = vpop.f32.mrb[0].mxu0
    %v4502 = vadd.f32 %v4453, %v4501
    %v4503 = vpop.f32.mrb[0].mxu0
    %v4504 = vpop.f32.mrb[0].mxu0
    %v4505 = vadd.f32 %v4456, %v4504
    %v4506 = vpop.f32.mrb[0].mxu0
    %4507 = vmatprep.mubr.bf16.mxu0 %v3189
    %4508 = vmatmul.mubr.bf16.gmra.mrb[0].mxu0 %v3188
    %v4509 = vpop.f32.mrb[0].mxu0
    %v4510 = vadd.f32 %v4461, %v4509
    %v4511 = vpop.f32.mrb[0].mxu0
    %v4512 = vpop.f32.mrb[0].mxu0
    %v4513 = vadd.f32 %v4464, %v4512
    %v4514 = vpop.f32.mrb[0].mxu0
    %4515 = vdwg.mxu0
    %4516 = vmatprep.subr.bf16.mxu0 0
    %4517 = vmatpush1.bf16.msra.mxu0 %v4062
    %4518 = vmatprep.subr.bf16.mxu0 0
    %4519 = vmatpush1.bf16.msra.mxu0 %v4063
    %4520 = vmatprep.subr.bf16.mxu0 0
    %4521 = vmatpush1.bf16.msra.mxu0 %v4064
    %4522 = vmatprep.subr.bf16.mxu0 0
    %4523 = vmatpush1.bf16.msra.mxu0 %v4065
    %4524 = vmatprep.subr.bf16.mxu0 0
    %4525 = vmatpush1.bf16.msra.mxu0 %v4066
    %4526 = vmatprep.subr.bf16.mxu0 0
    %4527 = vmatpush1.bf16.msra.mxu0 %v4067
    %4528 = vmatprep.subr.bf16.mxu0 0
    %4529 = vmatpush1.bf16.msra.mxu0 %v4068
    %4530 = vmatprep.subr.bf16.mxu0 0
    %4531 = vmatpush1.bf16.msra.mxu0 %v4069
    %4532 = vmatprep.subr.bf16.mxu0 0
    %4533 = vmatpush1.bf16.msra.mxu0 %v4070
    %4534 = vmatprep.subr.bf16.mxu0 0
    %4535 = vmatpush1.bf16.msra.mxu0 %v4071
    %4536 = vmatprep.subr.bf16.mxu0 0
    %4537 = vmatpush1.bf16.msra.mxu0 %v4072
    %4538 = vmatprep.subr.bf16.mxu0 0
    %4539 = vmatpush1.bf16.msra.mxu0 %v4073
    %4540 = vmatprep.subr.bf16.mxu0 0
    %4541 = vmatpush1.bf16.msra.mxu0 %v4074
    %4542 = vmatprep.subr.bf16.mxu0 0
    %4543 = vmatpush1.bf16.msra.mxu0 %v4075
    %4544 = vmatprep.subr.bf16.mxu0 0
    %4545 = vmatpush1.bf16.msra.mxu0 %v4076
    %4546 = vmatprep.subr.bf16.mxu0 0
    %4547 = vmatpush1.bf16.msra.mxu0 %v4077
    %4548 = vmatprep.mubr.bf16.mxu0 %v3175
    %4549 = vmatmul.mubr.bf16.gmra.mrb[0].mxu0 %v3174
    %v4550 = vpop.f32.mrb[0].mxu0
    %v4551 = vadd.f32 %v4502, %v4550
    %v4552 = vpop.f32.mrb[0].mxu0
    %v4553 = vpop.f32.mrb[0].mxu0
    %v4554 = vadd.f32 %v4505, %v4553
    %v4555 = vpop.f32.mrb[0].mxu0
    %4556 = vmatprep.mubr.bf16.mxu0 %v3191
    %4557 = vmatmul.mubr.bf16.gmra.mrb[0].mxu0 %v3190
    %v4558 = vpop.f32.mrb[0].mxu0
    %v4559 = vadd.f32 %v4510, %v4558
    %v4560 = vpop.f32.mrb[0].mxu0
    %v4561 = vpop.f32.mrb[0].mxu0
    %v4562 = vadd.f32 %v4513, %v4561
    %v4563 = vpop.f32.mrb[0].mxu0
    %4564 = vdwg.mxu0
    %4565 = vmatprep.subr.bf16.mxu0 0
    %4566 = vmatpush1.bf16.msra.mxu0 %v4078
    %4567 = vmatprep.subr.bf16.mxu0 0
    %4568 = vmatpush1.bf16.msra.mxu0 %v4079
    %4569 = vmatprep.subr.bf16.mxu0 0
    %4570 = vmatpush1.bf16.msra.mxu0 %v4080
    %4571 = vmatprep.subr.bf16.mxu0 0
    %4572 = vmatpush1.bf16.msra.mxu0 %v4081
    %4573 = vmatprep.subr.bf16.mxu0 0
    %4574 = vmatpush1.bf16.msra.mxu0 %v4082
    %4575 = vmatprep.subr.bf16.mxu0 0
    %4576 = vmatpush1.bf16.msra.mxu0 %v4083
    %4577 = vmatprep.subr.bf16.mxu0 0
    %4578 = vmatpush1.bf16.msra.mxu0 %v4084
    %4579 = vmatprep.subr.bf16.mxu0 0
    %4580 = vmatpush1.bf16.msra.mxu0 %v4085
    %4581 = vmatprep.subr.bf16.mxu0 0
    %4582 = vmatpush1.bf16.msra.mxu0 %v4086
    %4583 = vmatprep.subr.bf16.mxu0 0
    %4584 = vmatpush1.bf16.msra.mxu0 %v4087
    %4585 = vmatprep.subr.bf16.mxu0 0
    %4586 = vmatpush1.bf16.msra.mxu0 %v4088
    %4587 = vmatprep.subr.bf16.mxu0 0
    %4588 = vmatpush1.bf16.msra.mxu0 %v4089
    %4589 = vmatprep.subr.bf16.mxu0 0
    %4590 = vmatpush1.bf16.msra.mxu0 %v4090
    %4591 = vmatprep.subr.bf16.mxu0 0
    %4592 = vmatpush1.bf16.msra.mxu0 %v4091
    %4593 = vmatprep.subr.bf16.mxu0 0
    %4594 = vmatpush1.bf16.msra.mxu0 %v4092
    %4595 = vmatprep.subr.bf16.mxu0 0
    %4596 = vmatpush1.bf16.msra.mxu0 %v4093
    %4597 = vmatprep.mubr.bf16.mxu0 %v3177
    %4598 = vmatmul.mubr.bf16.gmra.mrb[0].mxu0 %v3176
    %v4599 = vpop.f32.mrb[0].mxu0
    %v4600 = vadd.f32 %v4551, %v4599
    %v4601 = vpop.f32.mrb[0].mxu0
    %v4602 = vpop.f32.mrb[0].mxu0
    %v4603 = vadd.f32 %v4554, %v4602
    %v4604 = vpop.f32.mrb[0].mxu0
    %4605 = vmatprep.mubr.bf16.mxu0 %v3193
    %4606 = vmatmul.mubr.bf16.gmra.mrb[0].mxu0 %v3192
    %v4607 = vpop.f32.mrb[0].mxu0
    %v4608 = vadd.f32 %v4559, %v4607
    %v4609 = vpop.f32.mrb[0].mxu0
    %v4610 = vpop.f32.mrb[0].mxu0
    %v4611 = vadd.f32 %v4562, %v4610
    %v4612 = vpop.f32.mrb[0].mxu0
    %4613 = vdwg.mxu0
    %v4614 = vadd.f32 %v4600, %v2260
    %v4615 = vadd.f32 %v4603, %v2261
    %v4616 = vadd.f32 %v4608, %v2262
    %v4617 = vadd.f32 %v4611, %v2263
    %v4618 = vsel %vm69, %v4614, 0.0
    %v4619 = vsel %vm69, %v4615, 0.0
    %v4620 = vadd.f32 %v4618, %v4619
    %v4621 = vrot.slane %v4620, 4
    %v4622 = vadd.f32 %v4620, %v4621
    %v4623 = vrot.slane %v4622, 2
    %v4624 = vadd.f32 %v4622, %v4623
    %v4625 = vrot.slane %v4624, 1
    %v4626 = vadd.f32 %v4624, %v4625
    %v4627 = vsel %vm69, %v4616, 0.0
    %v4628 = vsel %vm69, %v4617, 0.0
    %v4629 = vadd.f32 %v4627, %v4628
    %v4630 = vrot.slane %v4629, 4
    %v4631 = vadd.f32 %v4629, %v4630
    %v4632 = vrot.slane %v4631, 2
    %v4633 = vadd.f32 %v4631, %v4632
    %v4634 = vrot.slane %v4633, 1
    %v4635 = vadd.f32 %v4633, %v4634
    %v4636 = vmul.f32 %v4626, %v2209
    %v4637 = vmul.f32 %v4635, %v2209
    %v4638 = vsub.f32 %v4614, %v4636
    %v4639 = vsub.f32 %v4615, %v4636
    %v4640 = vsub.f32 %v4616, %v4637
    %v4641 = vsub.f32 %v4617, %v4637
    %v4642 = vmul.f32 %v4638, %v4638
    %v4643 = vmul.f32 %v4639, %v4639
    %v4644 = vmul.f32 %v4640, %v4640
    %v4645 = vmul.f32 %v4641, %v4641
    %v4646 = vsel %vm69, %v4642, 0.0
    %v4647 = vsel %vm69, %v4643, 0.0
    %v4648 = vadd.f32 %v4646, %v4647
    %v4649 = vrot.slane %v4648, 4
    %v4650 = vadd.f32 %v4648, %v4649
    %v4651 = vrot.slane %v4650, 2
    %v4652 = vadd.f32 %v4650, %v4651
    %v4653 = vrot.slane %v4652, 1
    %v4654 = vadd.f32 %v4652, %v4653
    %v4655 = vsel %vm69, %v4644, 0.0
    %v4656 = vsel %vm69, %v4645, 0.0
    %v4657 = vadd.f32 %v4655, %v4656
    %v4658 = vrot.slane %v4657, 4
    %v4659 = vadd.f32 %v4657, %v4658
    %v4660 = vrot.slane %v4659, 2
    %v4661 = vadd.f32 %v4659, %v4660
    %v4662 = vrot.slane %v4661, 1
    %v4663 = vadd.f32 %v4661, %v4662
    %v4664 = vmul.f32 %v4654, %v2209
    %v4665 = vmul.f32 %v4663, %v2209
    %v4666 = vadd.f32 %v4664, 1e-05
    %v4667 = vadd.f32 %v4665, 1e-05
    %v4668 = vrsqrt.pop %v4666
    %v4669 = vrsqrt.pop %v4667
    %v4670 = vmul.f32 %v4638, %v4668
    %v4671 = vmul.f32 %v4639, %v4668
    %v4672 = vmul.f32 %v4640, %v4669
    %v4673 = vmul.f32 %v4641, %v4669
    %v4674 = vlaneseq
    %v4675 = vshrl.u32 %v4674, 7
    %v4676 = vsub.s32 6, %v4675
    %v4677 = vrot.slane %v37, %v4676
    %v4678 = vmul.f32 %v4670, %v4677
    %v4679 = vmul.f32 %v4671, %v4677
    %v4680 = vmul.f32 %v4672, %v4677
    %v4681 = vmul.f32 %v4673, %v4677
    %v4682 = vlaneseq
    %v4683 = vshrl.u32 %v4682, 7
    %v4684 = vsub.s32 7, %v4683
    %v4685 = vrot.slane %v37, %v4684
    %v4686 = vadd.f32 %v4678, %v4685
    %v4687 = vadd.f32 %v4679, %v4685
    %v4688 = vadd.f32 %v4680, %v4685
    %v4689 = vadd.f32 %v4681, %v4685
    %4690 = vst.msk [vmem:[#allocation2] sm:$0xff] %vm69, %v4686
    %4691 = vst.msk [vmem:[#allocation2 + $0x8] sm:$0xff] %vm69, %v4687
    %4692 = vst.msk [vmem:[#allocation2 + $0x10] sm:$0xff] %vm69, %v4688
    %4693 = vst.msk [vmem:[#allocation2 + $0x18] sm:$0xff] %vm69, %v4689
    // Predicated region
    $region42: #{tpu_custom_call.1} parent=1 // pred_check
      _
    $region43: #{tpu_custom_call.1} parent=1 // pred_check_branch
      %4695 = sbr.rel (0) target = $region45
    $region44: #{tpu_custom_call.1} parent=1 // pred_region
      %s4697 = ssub.s32 512, 512
      %4698 = vsyncadd [#allocation3], %s4697
      %s4699 = sshll.u32 [#allocation2], 4
      %s4700 = int_to_ptr.vmem [resolvable:$true] %s4699
      %4705 = dma.vmem_to_hbm [thread:$0]  %s4700, 512, %s10, [#allocation3], 128, 128, 8
    $region45: #{tpu_custom_call.1} parent=1 // pred_fallthru
      _
    // Predicated region
    $region46: #{tpu_custom_call.1} parent=1 // pred_check
      _
    $region47: #{tpu_custom_call.1} parent=1 // pred_check_branch
      %4707 = sbr.rel (0) target = $region49
    $region48: #{tpu_custom_call.1} parent=1 // pred_region
      %4708 = dma.done [#allocation3], 512
    $region49: #{tpu_custom_call.1} parent=1 // pred_fallthru
      _
    %4709 = vsyncpa [#allocation3], 1

</llo_original>
